<compile_context>
chip_gen: v6e
topology: v6e:2x2x1
jax: 0.10.0
libtpu: 0.0.40
codegen_flags: <defaults>
</compile_context>

<pallas_src>
import math
import functools

import jax
import jax.numpy as jnp
from jax.experimental import pallas as pl
from jax.experimental.pallas import tpu as pltpu

# ----- model dimensions (fixed by the torchvision constructor args) ----------
IMG, PATCH, C_IN = 32, 4, 3
HID, HEADS, LAYERS, MLP, NCLS = 16, 2, 2, 64, 10
GRID_HW = IMG // PATCH              # 8 patches per side
NPATCH = GRID_HW * GRID_HW          # 64
SEQ = NPATCH + 1                    # 65 (class token + patches)
SEQ_P = 72                          # sequence padded to a multiple of 8 sublanes
PDIM = C_IN * PATCH * PATCH         # 48
HD = HID // HEADS                   # 8 (head dim)
FUSED = 2 * HID + HEADS * HID       # 64 packed columns: q(16) | k(16) | v'(32)
NG = 2 * LAYERS + 1                 # number of layernorms (2 per block + final)
EPS = 1e-6                          # torchvision ViT uses LayerNorm(eps=1e-6)
NEG = -1e30                         # additive mask for padded key columns


# ----- math shared by the kernel body and the pure-JAX reference -------------
def _erf(x):
    # TODO(synk): lax.erf lowering availability in Mosaic is version-dependent;
    # use Abramowitz&Stegun 7.1.26 (|err| <= 1.5e-7, float32-exact for GELU).
    a1, a2, a3, a4, a5 = 0.254829592, -0.284496736, 1.421413741, -1.453152027, 1.061405429
    p = 0.3275911
    s = jnp.where(x >= 0.0, 1.0, -1.0)
    ax = jnp.abs(x)
    t = 1.0 / (1.0 + p * ax)
    poly = t * (a1 + t * (a2 + t * (a3 + t * (a4 + t * a5))))
    return s * (1.0 - poly * jnp.exp(-ax * ax))


def _gelu_exact(x):
    # torch nn.GELU(approximate='none'): 0.5 * x * (1 + erf(x / sqrt(2)))
    return 0.5 * x * (1.0 + _erf(x * (1.0 / math.sqrt(2.0))))


def _extract_patches(x_nchw):
    """(N, 3, 32, 32) NCHW -> (N, SEQ, PDIM) with a zero row 0 for the cls token."""
    n = x_nchw.shape[0]
    p = x_nchw.reshape(n, C_IN, GRID_HW, PATCH, GRID_HW, PATCH)
    p = p.transpose(0, 2, 4, 1, 3, 5).reshape(n, NPATCH, PDIM)  # (c,kh,kw) flat
    return jnp.pad(p, ((0, 0), (1, 0), (0, 0)))                 # (N, SEQ, PDIM)


# ----- Pallas kernel ----------------------------------------------------------
def vit_kernel(tok_ref, add_ref, kmask_ref, pw_ref, ln_ref, wqkv_ref, bqkv_ref,
               bo_ref, w1_ref, b1_ref, w2_ref, b2_ref, hw_ref, hb_ref, out_ref):
    bt = tok_ref.shape[0]
    m = bt * SEQ_P
    bf16 = jnp.bfloat16
    f32 = jnp.float32

    def layernorm(z, i):
        mu = jnp.mean(z, axis=-1, keepdims=True)
        var = jnp.mean((z - mu) ** 2, axis=-1, keepdims=True)
        return (z - mu) * jax.lax.rsqrt(var + EPS) * ln_ref[i] + ln_ref[NG + i]

    # patch embedding for all bt*SEQ_P token rows at once (one big-M matmul);
    # tokens are already bf16; add_ref holds cls token + conv bias + pos emb.
    tok = tok_ref[...].reshape(m, PDIM)
    x = jnp.dot(tok, pw_ref[...], preferred_element_type=f32)          # (m, HID)
    x = (x.reshape(bt, SEQ_P, HID) + add_ref[...]).reshape(m, HID)

    kmask = kmask_ref[...]               # (SEQ_P, SEQ_P): 0 real / -1e30 padded key

    for l in range(LAYERS):
        # ------------- multi-head self-attention -------------
        # One fused (m,16)@(16,64) projection producing q|k|v' for both heads;
        # the out-projection is already folded into v' and 1/sqrt(HD) into q.
        y = layernorm(x, 2 * l).astype(bf16)
        qkv = jnp.dot(y, wqkv_ref[l], preferred_element_type=f32) + bqkv_ref[l]
        qkv3 = qkv.reshape(bt, SEQ_P, FUSED)

        attn = None
        for h in range(HEADS):
            q3 = qkv3[:, :, h * HD:(h + 1) * HD].astype(bf16)                    # (bt,72,8)
            k3 = qkv3[:, :, HID + h * HD:HID + (h + 1) * HD].astype(bf16)        # (bt,72,8)
            v3 = qkv3[:, :, 2 * HID + h * HID:2 * HID + (h + 1) * HID].astype(bf16)  # (bt,72,16)
            s = jnp.einsum('bqd,bkd->bqk', q3, k3, preferred_element_type=f32)
            s = s + kmask                          # mask padded key columns
            s = s - jnp.max(s, axis=-1, keepdims=True)
            p = jnp.exp(s)
            p = p * pl.reciprocal(jnp.sum(p, axis=-1, keepdims=True), approx=True)
            o = jnp.einsum('bqk,bkf->bqf', p.astype(bf16), v3,
                           preferred_element_type=f32)                # (bt,72,HID)
            attn = o if attn is None else attn + o
        x = x + attn.reshape(m, HID) + bo_ref[l]   # residual 1 (+ out-proj bias)

        # ------------- MLP -------------
        y2 = layernorm(x, 2 * l + 1)
        h1 = _gelu_exact(jnp.dot(y2.astype(bf16), w1_ref[l],
                                 preferred_element_type=f32) + b1_ref[l])
        x = x + jnp.dot(h1.astype(bf16), w2_ref[l],
                        preferred_element_type=f32) + b2_ref[l]        # residual 2

    # final encoder LayerNorm applied to the class-token rows only
    # (LayerNorm is per-token, so this is equivalent to LN-then-select).
    cls = layernorm(x.reshape(bt, SEQ_P, HID)[:, 0, :], 2 * LAYERS)    # (bt, HID)
    logits = jnp.dot(cls, hw_ref[...], preferred_element_type=f32) + hb_ref[...]
    out_ref[0] = logits.astype(out_ref.dtype)


# ----- wrapper ----------------------------------------------------------------
def _tpu_defaults():
    """Generation-specific (batch_tile, vmem_limit_bytes)."""
    vmem = 64 * 1024 * 1024                     # conservative fallback (v7x per-TC)
    try:
        info = pltpu.get_tpu_info()
        vmem = int(getattr(info, 'vmem_capacity_bytes', vmem))
    except Exception:
        pass
    if vmem >= 100 * 1024 * 1024:               # v5e / v6e: 128 MiB VMEM
        return 256, 96 * 1024 * 1024
    return 128, 48 * 1024 * 1024                # v7x: 64 MiB VMEM per TensorCore


@functools.partial(jax.jit, static_argnums=(2, 3))
def _vit_forward(x_nchw, params, b_tile, vmem_limit_bytes):
    n = x_nchw.shape[0]
    patches = _extract_patches(x_nchw).astype(jnp.bfloat16)   # (n, SEQ, PDIM) bf16

    # keep the parallel grid >= 2 blocks when possible (megacore / v7x 2 TCs)
    bt = max(1, min(b_tile, (n + 1) // 2))
    nblk = (n + bt - 1) // bt
    n_pad = nblk * bt
    patches = jnp.pad(patches, ((0, n_pad - n), (0, SEQ_P - SEQ), (0, 0)))

    # constant slabs: additive term (SEQ_P, HID) and pre-broadcast key mask.
    add_pad = jnp.pad(params['add'], ((0, SEQ_P - SEQ), (0, 0)))          # (72, 16)
    kmask = jnp.where(jnp.arange(SEQ_P) < SEQ, 0.0, NEG).astype(jnp.float32)
    kmask = jnp.broadcast_to(kmask.reshape(1, SEQ_P), (SEQ_P, SEQ_P))     # (72, 72)

    others = [params['pw'], params['ln'], params['wqkv'], params['bqkv'],
              params['bo'], params['w1'], params['b1'],
              params['w2'], params['b2'], params['hw'], params['hb']]

    in_specs = [pl.BlockSpec((bt, SEQ_P, PDIM), lambda b: (b, 0, 0)),
                pl.BlockSpec(add_pad.shape, lambda b: (0, 0)),
                pl.BlockSpec(kmask.shape, lambda b: (0, 0))]
    for p in others:
        in_specs.append(pl.BlockSpec(p.shape, lambda b, nd=p.ndim: (0,) * nd))

    out = pl.pallas_call(
        vit_kernel,
        out_shape=jax.ShapeDtypeStruct((nblk, bt, NCLS), jnp.float32),
        grid=(nblk,),
        in_specs=in_specs,
        out_specs=pl.BlockSpec((1, bt, NCLS), lambda b: (b, 0, 0)),
        compiler_params=pltpu.CompilerParams(
            dimension_semantics=("parallel",),
            vmem_limit_bytes=int(vmem_limit_bytes)),
    )(patches, add_pad, kmask, *others)
    return out.reshape(n_pad, NCLS)[:n]           # (N, NCLS)


def vit_forward(x_nchw, params, b_tile=None, vmem_limit_bytes=None):
    d_bt, d_vm = _tpu_defaults()
    return _vit_forward(x_nchw, params,
                        int(b_tile or d_bt), int(vmem_limit_bytes or d_vm))


# ----- pure-JAX reference (f32, unpadded SEQ=65, unfolded per-head weights) ---
def vit_reference(x_nchw, params):
    f32 = lambda a: a.astype(jnp.float32)
    tok = _extract_patches(x_nchw)                # (n, SEQ, PDIM)
    ln = params['ln']

    def layernorm(z, i):
        mu = jnp.mean(z, axis=-1, keepdims=True)
        var = jnp.mean((z - mu) ** 2, axis=-1, keepdims=True)
        return (z - mu) * jax.lax.rsqrt(var + EPS) * ln[i] + ln[NG + i]

    x = jnp.einsum('nsp,pf->nsf', tok, f32(params['pw'])) + params['add'][None]
    for l in range(LAYERS):
        y = layernorm(x, 2 * l)
        attn = params['bo'][l]
        for h in range(HEADS):
            i = l * HEADS + h
            q = jnp.einsum('nsf,fd->nsd', y, f32(params['r_wq'][i])) + params['r_bq'][i]
            k = jnp.einsum('nsf,fd->nsd', y, f32(params['r_wk'][i])) + params['r_bk'][i]
            v = jnp.einsum('nsf,fd->nsd', y, f32(params['r_wv'][i])) + params['r_bv'][i]
            a = jax.nn.softmax(jnp.einsum('nqd,nkd->nqk', q, k), axis=-1)
            o = jnp.einsum('nqk,nkd->nqd', a, v)
            attn = attn + jnp.einsum('nsd,df->nsf', o, f32(params['r_wo'][i]))
        x = x + attn
        y2 = layernorm(x, 2 * l + 1)
        h1 = _gelu_exact(jnp.einsum('nsf,fm->nsm', y2, f32(params['w1'][l]))
                         + params['b1'][l])
        x = x + jnp.einsum('nsm,mf->nsf', h1, f32(params['w2'][l])) + params['b2'][l]
    cls = layernorm(x[:, 0, :], 2 * LAYERS)
    return jnp.dot(cls, params['hw']) + params['hb']


# ----- deterministic packed parameter init (shapes mirror the torch module) ---
def init_params(key):
    keys = iter(jax.random.split(key, 40))
    bf16 = jnp.bfloat16
    f32 = lambda a: a.astype(jnp.float32)

    def nrm(shape, std=0.02):
        return jax.random.normal(next(keys), shape, jnp.float32) * std

    pw = nrm((PDIM, HID)).astype(bf16)            # conv_proj weight, flattened
    pb = nrm((1, HID))                            # conv_proj bias
    cls_tok = nrm((1, HID))                       # class_token
    pos = nrm((SEQ, HID))                         # pos_embedding
    add = jnp.concatenate([pos[0:1] + cls_tok, pos[1:] + pb], axis=0)  # (SEQ, HID)

    scale = 1.0 / math.sqrt(HD)
    ln_g, ln_b = [], []
    wqkv_l, bqkv_l, bo_l = [], [], []
    w1_l, b1_l, w2_l, b2_l = [], [], [], []
    # reference-only unfolded per-head copies (same bf16-rounded values)
    r_wq, r_wk, r_wv, r_bq, r_bk, r_bv, r_wo = [], [], [], [], [], [], []

    for _ in range(LAYERS):
        ln_g.append(1.0 + nrm((1, HID))); ln_b.append(nrm((1, HID)))      # ln_1
        in_w = nrm((HID, 3 * HID))                # in_proj_weight^T
        in_b = nrm((1, 3 * HID))                  # in_proj_bias
        qw = (in_w[:, 0:HID] * scale).astype(bf16)   # fold 1/sqrt(HD) into q
        kw = in_w[:, HID:2 * HID].astype(bf16)
        vw = in_w[:, 2 * HID:3 * HID].astype(bf16)
        qb = in_b[:, 0:HID] * scale
        kb = in_b[:, HID:2 * HID]
        vb = in_b[:, 2 * HID:3 * HID]
        ow = nrm((HID, HID)).astype(bf16)         # out_proj.weight^T
        ob = nrm((1, HID))                        # out_proj.bias

        qs, ks, vps, qbs, kbs, vpbs = [], [], [], [], [], []
        for h in range(HEADS):
            sl = slice(h * HD, (h + 1) * HD)
            wo_h = f32(ow[sl, :])                                    # (HD, HID)
            qs.append(f32(qw[:, sl])); ks.append(f32(kw[:, sl]))
            vps.append(f32(vw[:, sl]) @ wo_h)                        # fold wo into v
            qbs.append(qb[:, sl]); kbs.append(kb[:, sl])
            vpbs.append(vb[:, sl] @ wo_h)
            r_wq.append(qw[:, sl]); r_wk.append(kw[:, sl]); r_wv.append(vw[:, sl])
            r_bq.append(qb[:, sl]); r_bk.append(kb[:, sl]); r_bv.append(vb[:, sl])
            r_wo.append(ow[sl, :])
        # packed columns: [q_h0 | q_h1 | k_h0 | k_h1 | v'_h0 | v'_h1]  (16, 64)
        wqkv_l.append(jnp.concatenate(qs + ks + vps, axis=1).astype(bf16))
        bqkv_l.append(jnp.concatenate(qbs + kbs + vpbs, axis=1))     # (1, 64) f32
        bo_l.append(ob)

        ln_g.append(1.0 + nrm((1, HID))); ln_b.append(nrm((1, HID)))      # ln_2
        w1_l.append(nrm((HID, MLP)).astype(bf16)); b1_l.append(nrm((1, MLP)))
        w2_l.append(nrm((MLP, HID)).astype(bf16)); b2_l.append(nrm((1, HID)))
    ln_g.append(1.0 + nrm((1, HID))); ln_b.append(nrm((1, HID)))          # final ln

    return dict(
        add=add,                                                          # (SEQ, HID) f32
        pw=pw,                                                            # (PDIM, HID) bf16
        ln=jnp.concatenate([jnp.stack(ln_g), jnp.stack(ln_b)], axis=0),   # (2*NG, 1, HID)
        wqkv=jnp.stack(wqkv_l),                                           # (L, HID, 64) bf16
        bqkv=jnp.stack(bqkv_l),                                           # (L, 1, 64) f32
        bo=jnp.stack(bo_l),                                               # (L, 1, HID) f32
        w1=jnp.stack(w1_l), b1=jnp.stack(b1_l),                           # (L, HID, MLP)/(L,1,MLP)
        w2=jnp.stack(w2_l), b2=jnp.stack(b2_l),                           # (L, MLP, HID)/(L,1,HID)
        hw=nrm((HID, NCLS)),                                              # heads.head W^T
        hb=jnp.zeros((1, NCLS), jnp.float32),                             # heads.head b
        # reference-only unfolded per-head weights (not passed to the kernel)
        r_wq=jnp.stack(r_wq), r_wk=jnp.stack(r_wk), r_wv=jnp.stack(r_wv),
        r_bq=jnp.stack(r_bq), r_bk=jnp.stack(r_bk), r_bv=jnp.stack(r_bv),
        r_wo=jnp.stack(r_wo),
    )


if __name__ == "__main__":
    key = jax.random.PRNGKey(0)
    kx, kp = jax.random.split(key)
    x = jax.random.normal(kx, (2, C_IN, IMG, IMG), jnp.float32)   # NCHW, like torch
    params = init_params(kp)

    out = jax.block_until_ready(vit_forward(x, params))
    ref = vit_reference(x, params)

    assert out.shape == (2, NCLS), out.shape
    max_err = float(jnp.max(jnp.abs(out - ref)))
    assert jnp.allclose(out, ref, atol=1e-3, rtol=1e-3), (max_err, out, ref)
    print("KERNEL_OK")
</pallas_src>

<mosaic_0001>
module attributes {stable_mosaic.version = 11 : i64} {
  func.func @vit_kernel(%arg0: i32, %arg1: memref<1x72x48xbf16, #tpu.memory_space<vmem>>, %arg2: memref<72x16xf32, #tpu.memory_space<vmem>>, %arg3: memref<72x72xf32, #tpu.memory_space<vmem>>, %arg4: memref<48x16xbf16, #tpu.memory_space<vmem>>, %arg5: memref<10x1x16xf32, #tpu.memory_space<vmem>>, %arg6: memref<2x16x64xbf16, #tpu.memory_space<vmem>>, %arg7: memref<2x1x64xf32, #tpu.memory_space<vmem>>, %arg8: memref<2x1x16xf32, #tpu.memory_space<vmem>>, %arg9: memref<2x16x64xbf16, #tpu.memory_space<vmem>>, %arg10: memref<2x1x64xf32, #tpu.memory_space<vmem>>, %arg11: memref<2x64x16xbf16, #tpu.memory_space<vmem>>, %arg12: memref<2x1x16xf32, #tpu.memory_space<vmem>>, %arg13: memref<16x10xf32, #tpu.memory_space<vmem>>, %arg14: memref<1x10xf32, #tpu.memory_space<vmem>>, %arg15: memref<1x1x10xf32, #tpu.memory_space<vmem>>) attributes {dimension_semantics = [#tpu.dimension_semantics<parallel>], iteration_bounds = array<i64: 2>, scalar_prefetch = 0 : i64, scratch_operands = 0 : i64, tpu.core_type = #tpu.core_type<tc>, window_params = [{transform_indices = @transform_0, window_bounds = array<i64: 1, 72, 48>}, {pipeline_mode = #tpu.pipeline_mode<synchronous>, transform_indices = @transform_1, window_bounds = array<i64: 72, 16>}, {pipeline_mode = #tpu.pipeline_mode<synchronous>, transform_indices = @transform_2, window_bounds = array<i64: 72, 72>}, {pipeline_mode = #tpu.pipeline_mode<synchronous>, transform_indices = @transform_3, window_bounds = array<i64: 48, 16>}, {pipeline_mode = #tpu.pipeline_mode<synchronous>, transform_indices = @transform_4, window_bounds = array<i64: 10, 1, 16>}, {pipeline_mode = #tpu.pipeline_mode<synchronous>, transform_indices = @transform_5, window_bounds = array<i64: 2, 16, 64>}, {pipeline_mode = #tpu.pipeline_mode<synchronous>, transform_indices = @transform_6, window_bounds = array<i64: 2, 1, 64>}, {pipeline_mode = #tpu.pipeline_mode<synchronous>, transform_indices = @transform_7, window_bounds = array<i64: 2, 1, 16>}, {pipeline_mode = #tpu.pipeline_mode<synchronous>, transform_indices = @transform_8, window_bounds = array<i64: 2, 16, 64>}, {pipeline_mode = #tpu.pipeline_mode<synchronous>, transform_indices = @transform_9, window_bounds = array<i64: 2, 1, 64>}, {pipeline_mode = #tpu.pipeline_mode<synchronous>, transform_indices = @transform_10, window_bounds = array<i64: 2, 64, 16>}, {pipeline_mode = #tpu.pipeline_mode<synchronous>, transform_indices = @transform_11, window_bounds = array<i64: 2, 1, 16>}, {pipeline_mode = #tpu.pipeline_mode<synchronous>, transform_indices = @transform_12, window_bounds = array<i64: 16, 10>}, {pipeline_mode = #tpu.pipeline_mode<synchronous>, transform_indices = @transform_13, window_bounds = array<i64: 1, 10>}, {transform_indices = @transform_14, window_bounds = array<i64: 1, 1, 10>}]} {
    %c0 = arith.constant 0 : index
    %c0_0 = arith.constant 0 : index
    %c0_1 = arith.constant 0 : index
    %0 = vector.load %arg1[%c0, %c0_0, %c0_1] : memref<1x72x48xbf16, #tpu.memory_space<vmem>>, vector<1x72x48xbf16>
    %1 = vector.shape_cast %0 : vector<1x72x48xbf16> to vector<72x48xbf16>
    %c0_2 = arith.constant 0 : index
    %c0_3 = arith.constant 0 : index
    %2 = vector.load %arg4[%c0_2, %c0_3] : memref<48x16xbf16, #tpu.memory_space<vmem>>, vector<48x16xbf16>
    %cst = arith.constant dense<0.000000e+00> : vector<72x16xf32>
    %3 = tpu.matmul %1, %2, %cst {dimension_numbers = #tpu.dot_dimension_numbers<[1], [0], [0], [1], [0, 0, 1, 1], [], []>} : vector<72x48xbf16>, vector<48x16xbf16>, vector<72x16xf32> -> vector<72x16xf32>
    %4 = vector.shape_cast %3 : vector<72x16xf32> to vector<1x72x16xf32>
    %c0_4 = arith.constant 0 : index
    %c0_5 = arith.constant 0 : index
    %5 = vector.load %arg2[%c0_4, %c0_5] : memref<72x16xf32, #tpu.memory_space<vmem>>, vector<72x16xf32>
    %6 = vector.shape_cast %5 : vector<72x16xf32> to vector<1x72x16xf32>
    %7 = arith.addf %4, %6 : vector<1x72x16xf32>
    %8 = vector.shape_cast %7 : vector<1x72x16xf32> to vector<72x16xf32>
    %c0_6 = arith.constant 0 : index
    %c0_7 = arith.constant 0 : index
    %9 = vector.load %arg3[%c0_6, %c0_7] : memref<72x72xf32, #tpu.memory_space<vmem>>, vector<72x72xf32>
    %cst_8 = arith.constant dense<0.000000e+00> : vector<72xf32>
    %10 = vector.multi_reduction <add>, %8, %cst_8 [1] : vector<72x16xf32> to vector<72xf32>
    %11 = vector.shape_cast %10 : vector<72xf32> to vector<72x1xf32>
    %cst_9 = arith.constant 1.600000e+01 : f32
    %12 = vector.broadcast %cst_9 : f32 to vector<72x1xf32>
    %13 = arith.divf %11, %12 : vector<72x1xf32>
    %14 = vector.broadcast %13 : vector<72x1xf32> to vector<72x16xf32>
    %15 = arith.subf %8, %14 : vector<72x16xf32>
    %16 = arith.mulf %15, %15 : vector<72x16xf32>
    %cst_10 = arith.constant dense<0.000000e+00> : vector<72xf32>
    %17 = vector.multi_reduction <add>, %16, %cst_10 [1] : vector<72x16xf32> to vector<72xf32>
    %18 = vector.shape_cast %17 : vector<72xf32> to vector<72x1xf32>
    %cst_11 = arith.constant 1.600000e+01 : f32
    %19 = vector.broadcast %cst_11 : f32 to vector<72x1xf32>
    %20 = arith.divf %18, %19 : vector<72x1xf32>
    %21 = vector.broadcast %13 : vector<72x1xf32> to vector<72x16xf32>
    %22 = arith.subf %8, %21 : vector<72x16xf32>
    %cst_12 = arith.constant 9.99999997E-7 : f32
    %23 = vector.broadcast %cst_12 : f32 to vector<72x1xf32>
    %24 = arith.addf %20, %23 : vector<72x1xf32>
    %25 = math.rsqrt %24 : vector<72x1xf32>
    %26 = vector.broadcast %25 : vector<72x1xf32> to vector<72x16xf32>
    %27 = arith.mulf %22, %26 : vector<72x16xf32>
    %c0_13 = arith.constant 0 : index
    %c0_14 = arith.constant 0 : index
    %c0_15 = arith.constant 0 : index
    %28 = vector.load %arg5[%c0_13, %c0_14, %c0_15] : memref<10x1x16xf32, #tpu.memory_space<vmem>>, vector<1x1x16xf32>
    %29 = vector.shape_cast %28 : vector<1x1x16xf32> to vector<1x16xf32>
    %30 = vector.broadcast %29 : vector<1x16xf32> to vector<72x16xf32>
    %31 = arith.mulf %27, %30 : vector<72x16xf32>
    %c5 = arith.constant 5 : index
    %c0_16 = arith.constant 0 : index
    %c0_17 = arith.constant 0 : index
    %32 = vector.load %arg5[%c5, %c0_16, %c0_17] : memref<10x1x16xf32, #tpu.memory_space<vmem>>, vector<1x1x16xf32>
    %33 = vector.shape_cast %32 : vector<1x1x16xf32> to vector<1x16xf32>
    %34 = vector.broadcast %33 : vector<1x16xf32> to vector<72x16xf32>
    %35 = arith.addf %31, %34 : vector<72x16xf32>
    %36 = arith.truncf %35 : vector<72x16xf32> to vector<72x16xbf16>
    %c0_18 = arith.constant 0 : index
    %c0_19 = arith.constant 0 : index
    %c0_20 = arith.constant 0 : index
    %37 = vector.load %arg6[%c0_18, %c0_19, %c0_20] : memref<2x16x64xbf16, #tpu.memory_space<vmem>>, vector<1x16x64xbf16>
    %38 = vector.shape_cast %37 : vector<1x16x64xbf16> to vector<16x64xbf16>
    %cst_21 = arith.constant dense<0.000000e+00> : vector<72x64xf32>
    %39 = tpu.matmul %36, %38, %cst_21 {dimension_numbers = #tpu.dot_dimension_numbers<[1], [0], [0], [1], [0, 0, 1, 1], [], []>} : vector<72x16xbf16>, vector<16x64xbf16>, vector<72x64xf32> -> vector<72x64xf32>
    %c0_22 = arith.constant 0 : index
    %c0_23 = arith.constant 0 : index
    %c0_24 = arith.constant 0 : index
    %40 = vector.load %arg7[%c0_22, %c0_23, %c0_24] : memref<2x1x64xf32, #tpu.memory_space<vmem>>, vector<1x1x64xf32>
    %41 = vector.shape_cast %40 : vector<1x1x64xf32> to vector<1x64xf32>
    %42 = vector.broadcast %41 : vector<1x64xf32> to vector<72x64xf32>
    %43 = arith.addf %39, %42 : vector<72x64xf32>
    %44 = vector.shape_cast %43 : vector<72x64xf32> to vector<1x72x64xf32>
    %45 = vector.extract_strided_slice %44 {offsets = [0, 0, 0], sizes = [1, 72, 8], strides = [1, 1, 1]} : vector<1x72x64xf32> to vector<1x72x8xf32>
    %46 = arith.truncf %45 : vector<1x72x8xf32> to vector<1x72x8xbf16>
    %47 = vector.extract_strided_slice %44 {offsets = [0, 0, 16], sizes = [1, 72, 8], strides = [1, 1, 1]} : vector<1x72x64xf32> to vector<1x72x8xf32>
    %48 = arith.truncf %47 : vector<1x72x8xf32> to vector<1x72x8xbf16>
    %49 = vector.extract_strided_slice %44 {offsets = [0, 0, 32], sizes = [1, 72, 16], strides = [1, 1, 1]} : vector<1x72x64xf32> to vector<1x72x16xf32>
    %50 = arith.truncf %49 : vector<1x72x16xf32> to vector<1x72x16xbf16>
    "tpu.trace_start"() <{level = 10 : i32, message = "bqd,bkd->bqk"}> : () -> ()
    %cst_25 = arith.constant dense<0.000000e+00> : vector<1x72x72xf32>
    %51 = tpu.matmul %46, %48, %cst_25 {dimension_numbers = #tpu.dot_dimension_numbers<[2], [2], [1], [1], [0, 0, 0, 1, 1, 1], [0], [0]>} : vector<1x72x8xbf16>, vector<1x72x8xbf16>, vector<1x72x72xf32> -> vector<1x72x72xf32>
    "tpu.trace_stop"() : () -> ()
    %52 = vector.shape_cast %9 : vector<72x72xf32> to vector<1x72x72xf32>
    %53 = arith.addf %51, %52 : vector<1x72x72xf32>
    %cst_26 = arith.constant dense<0xFF800000> : vector<1x72xf32>
    %54 = vector.multi_reduction <maximumf>, %53, %cst_26 [2] : vector<1x72x72xf32> to vector<1x72xf32>
    %55 = vector.shape_cast %54 : vector<1x72xf32> to vector<1x72x1xf32>
    %56 = vector.broadcast %55 : vector<1x72x1xf32> to vector<1x72x72xf32>
    %57 = arith.subf %53, %56 : vector<1x72x72xf32>
    %58 = math.exp %57 : vector<1x72x72xf32>
    %cst_27 = arith.constant dense<0.000000e+00> : vector<1x72xf32>
    %59 = vector.multi_reduction <add>, %58, %cst_27 [2] : vector<1x72x72xf32> to vector<1x72xf32>
    %60 = vector.shape_cast %59 : vector<1x72xf32> to vector<1x72x1xf32>
    %61 = tpu.reciprocal %60 {approx = true} : vector<1x72x1xf32> -> vector<1x72x1xf32>
    %62 = vector.broadcast %61 : vector<1x72x1xf32> to vector<1x72x72xf32>
    %63 = arith.mulf %58, %62 : vector<1x72x72xf32>
    %64 = arith.truncf %63 : vector<1x72x72xf32> to vector<1x72x72xbf16>
    "tpu.trace_start"() <{level = 10 : i32, message = "bqk,bkf->bqf"}> : () -> ()
    %cst_28 = arith.constant dense<0.000000e+00> : vector<1x72x16xf32>
    %65 = tpu.matmul %64, %50, %cst_28 {dimension_numbers = #tpu.dot_dimension_numbers<[2], [1], [1], [2], [0, 0, 0, 1, 1, 2], [0], [0]>} : vector<1x72x72xbf16>, vector<1x72x16xbf16>, vector<1x72x16xf32> -> vector<1x72x16xf32>
    "tpu.trace_stop"() : () -> ()
    %66 = vector.extract_strided_slice %44 {offsets = [0, 0, 8], sizes = [1, 72, 8], strides = [1, 1, 1]} : vector<1x72x64xf32> to vector<1x72x8xf32>
    %67 = arith.truncf %66 : vector<1x72x8xf32> to vector<1x72x8xbf16>
    %68 = vector.extract_strided_slice %44 {offsets = [0, 0, 24], sizes = [1, 72, 8], strides = [1, 1, 1]} : vector<1x72x64xf32> to vector<1x72x8xf32>
    %69 = arith.truncf %68 : vector<1x72x8xf32> to vector<1x72x8xbf16>
    %70 = vector.extract_strided_slice %44 {offsets = [0, 0, 48], sizes = [1, 72, 16], strides = [1, 1, 1]} : vector<1x72x64xf32> to vector<1x72x16xf32>
    %71 = arith.truncf %70 : vector<1x72x16xf32> to vector<1x72x16xbf16>
    "tpu.trace_start"() <{level = 10 : i32, message = "bqd,bkd->bqk"}> : () -> ()
    %cst_29 = arith.constant dense<0.000000e+00> : vector<1x72x72xf32>
    %72 = tpu.matmul %67, %69, %cst_29 {dimension_numbers = #tpu.dot_dimension_numbers<[2], [2], [1], [1], [0, 0, 0, 1, 1, 1], [0], [0]>} : vector<1x72x8xbf16>, vector<1x72x8xbf16>, vector<1x72x72xf32> -> vector<1x72x72xf32>
    "tpu.trace_stop"() : () -> ()
    %73 = vector.shape_cast %9 : vector<72x72xf32> to vector<1x72x72xf32>
    %74 = arith.addf %72, %73 : vector<1x72x72xf32>
    %cst_30 = arith.constant dense<0xFF800000> : vector<1x72xf32>
    %75 = vector.multi_reduction <maximumf>, %74, %cst_30 [2] : vector<1x72x72xf32> to vector<1x72xf32>
    %76 = vector.shape_cast %75 : vector<1x72xf32> to vector<1x72x1xf32>
    %77 = vector.broadcast %76 : vector<1x72x1xf32> to vector<1x72x72xf32>
    %78 = arith.subf %74, %77 : vector<1x72x72xf32>
    %79 = math.exp %78 : vector<1x72x72xf32>
    %cst_31 = arith.constant dense<0.000000e+00> : vector<1x72xf32>
    %80 = vector.multi_reduction <add>, %79, %cst_31 [2] : vector<1x72x72xf32> to vector<1x72xf32>
    %81 = vector.shape_cast %80 : vector<1x72xf32> to vector<1x72x1xf32>
    %82 = tpu.reciprocal %81 {approx = true} : vector<1x72x1xf32> -> vector<1x72x1xf32>
    %83 = vector.broadcast %82 : vector<1x72x1xf32> to vector<1x72x72xf32>
    %84 = arith.mulf %79, %83 : vector<1x72x72xf32>
    %85 = arith.truncf %84 : vector<1x72x72xf32> to vector<1x72x72xbf16>
    "tpu.trace_start"() <{level = 10 : i32, message = "bqk,bkf->bqf"}> : () -> ()
    %cst_32 = arith.constant dense<0.000000e+00> : vector<1x72x16xf32>
    %86 = tpu.matmul %85, %71, %cst_32 {dimension_numbers = #tpu.dot_dimension_numbers<[2], [1], [1], [2], [0, 0, 0, 1, 1, 2], [0], [0]>} : vector<1x72x72xbf16>, vector<1x72x16xbf16>, vector<1x72x16xf32> -> vector<1x72x16xf32>
    "tpu.trace_stop"() : () -> ()
    %87 = arith.addf %65, %86 : vector<1x72x16xf32>
    %88 = vector.shape_cast %87 : vector<1x72x16xf32> to vector<72x16xf32>
    %89 = arith.addf %8, %88 : vector<72x16xf32>
    %c0_33 = arith.constant 0 : index
    %c0_34 = arith.constant 0 : index
    %c0_35 = arith.constant 0 : index
    %90 = vector.load %arg8[%c0_33, %c0_34, %c0_35] : memref<2x1x16xf32, #tpu.memory_space<vmem>>, vector<1x1x16xf32>
    %91 = vector.shape_cast %90 : vector<1x1x16xf32> to vector<1x16xf32>
    %92 = vector.broadcast %91 : vector<1x16xf32> to vector<72x16xf32>
    %93 = arith.addf %89, %92 : vector<72x16xf32>
    %cst_36 = arith.constant dense<0.000000e+00> : vector<72xf32>
    %94 = vector.multi_reduction <add>, %93, %cst_36 [1] : vector<72x16xf32> to vector<72xf32>
    %95 = vector.shape_cast %94 : vector<72xf32> to vector<72x1xf32>
    %cst_37 = arith.constant 1.600000e+01 : f32
    %96 = vector.broadcast %cst_37 : f32 to vector<72x1xf32>
    %97 = arith.divf %95, %96 : vector<72x1xf32>
    %98 = vector.broadcast %97 : vector<72x1xf32> to vector<72x16xf32>
    %99 = arith.subf %93, %98 : vector<72x16xf32>
    %100 = arith.mulf %99, %99 : vector<72x16xf32>
    %cst_38 = arith.constant dense<0.000000e+00> : vector<72xf32>
    %101 = vector.multi_reduction <add>, %100, %cst_38 [1] : vector<72x16xf32> to vector<72xf32>
    %102 = vector.shape_cast %101 : vector<72xf32> to vector<72x1xf32>
    %cst_39 = arith.constant 1.600000e+01 : f32
    %103 = vector.broadcast %cst_39 : f32 to vector<72x1xf32>
    %104 = arith.divf %102, %103 : vector<72x1xf32>
    %105 = vector.broadcast %97 : vector<72x1xf32> to vector<72x16xf32>
    %106 = arith.subf %93, %105 : vector<72x16xf32>
    %cst_40 = arith.constant 9.99999997E-7 : f32
    %107 = vector.broadcast %cst_40 : f32 to vector<72x1xf32>
    %108 = arith.addf %104, %107 : vector<72x1xf32>
    %109 = math.rsqrt %108 : vector<72x1xf32>
    %110 = vector.broadcast %109 : vector<72x1xf32> to vector<72x16xf32>
    %111 = arith.mulf %106, %110 : vector<72x16xf32>
    %c1 = arith.constant 1 : index
    %c0_41 = arith.constant 0 : index
    %c0_42 = arith.constant 0 : index
    %112 = vector.load %arg5[%c1, %c0_41, %c0_42] : memref<10x1x16xf32, #tpu.memory_space<vmem>>, vector<1x1x16xf32>
    %113 = vector.shape_cast %112 : vector<1x1x16xf32> to vector<1x16xf32>
    %114 = vector.broadcast %113 : vector<1x16xf32> to vector<72x16xf32>
    %115 = arith.mulf %111, %114 : vector<72x16xf32>
    %c6 = arith.constant 6 : index
    %c0_43 = arith.constant 0 : index
    %c0_44 = arith.constant 0 : index
    %116 = vector.load %arg5[%c6, %c0_43, %c0_44] : memref<10x1x16xf32, #tpu.memory_space<vmem>>, vector<1x1x16xf32>
    %117 = vector.shape_cast %116 : vector<1x1x16xf32> to vector<1x16xf32>
    %118 = vector.broadcast %117 : vector<1x16xf32> to vector<72x16xf32>
    %119 = arith.addf %115, %118 : vector<72x16xf32>
    %120 = arith.truncf %119 : vector<72x16xf32> to vector<72x16xbf16>
    %c0_45 = arith.constant 0 : index
    %c0_46 = arith.constant 0 : index
    %c0_47 = arith.constant 0 : index
    %121 = vector.load %arg9[%c0_45, %c0_46, %c0_47] : memref<2x16x64xbf16, #tpu.memory_space<vmem>>, vector<1x16x64xbf16>
    %122 = vector.shape_cast %121 : vector<1x16x64xbf16> to vector<16x64xbf16>
    %cst_48 = arith.constant dense<0.000000e+00> : vector<72x64xf32>
    %123 = tpu.matmul %120, %122, %cst_48 {dimension_numbers = #tpu.dot_dimension_numbers<[1], [0], [0], [1], [0, 0, 1, 1], [], []>} : vector<72x16xbf16>, vector<16x64xbf16>, vector<72x64xf32> -> vector<72x64xf32>
    %c0_49 = arith.constant 0 : index
    %c0_50 = arith.constant 0 : index
    %c0_51 = arith.constant 0 : index
    %124 = vector.load %arg10[%c0_49, %c0_50, %c0_51] : memref<2x1x64xf32, #tpu.memory_space<vmem>>, vector<1x1x64xf32>
    %125 = vector.shape_cast %124 : vector<1x1x64xf32> to vector<1x64xf32>
    %126 = vector.broadcast %125 : vector<1x64xf32> to vector<72x64xf32>
    %127 = arith.addf %123, %126 : vector<72x64xf32>
    %cst_52 = arith.constant 5.000000e-01 : f32
    %128 = vector.broadcast %cst_52 : f32 to vector<72x64xf32>
    %129 = arith.mulf %128, %127 : vector<72x64xf32>
    %cst_53 = arith.constant 0.707106769 : f32
    %130 = vector.broadcast %cst_53 : f32 to vector<72x64xf32>
    %131 = arith.mulf %127, %130 : vector<72x64xf32>
    %cst_54 = arith.constant 0.000000e+00 : f32
    %132 = vector.broadcast %cst_54 : f32 to vector<72x64xf32>
    %133 = arith.cmpf oge, %131, %132 : vector<72x64xf32>
    %cst_55 = arith.constant 1.000000e+00 : f32
    %cst_56 = arith.constant -1.000000e+00 : f32
    %134 = vector.broadcast %cst_55 : f32 to vector<72x64xf32>
    %135 = vector.broadcast %cst_56 : f32 to vector<72x64xf32>
    %136 = arith.select %133, %134, %135 : vector<72x64xi1>, vector<72x64xf32>
    %137 = math.absf %131 : vector<72x64xf32>
    %cst_57 = arith.constant 0.327591091 : f32
    %138 = vector.broadcast %cst_57 : f32 to vector<72x64xf32>
    %139 = arith.mulf %138, %137 : vector<72x64xf32>
    %cst_58 = arith.constant 1.000000e+00 : f32
    %140 = vector.broadcast %cst_58 : f32 to vector<72x64xf32>
    %141 = arith.addf %140, %139 : vector<72x64xf32>
    %cst_59 = arith.constant 1.000000e+00 : f32
    %142 = vector.broadcast %cst_59 : f32 to vector<72x64xf32>
    %143 = arith.divf %142, %141 : vector<72x64xf32>
    %cst_60 = arith.constant 1.06140542 : f32
    %144 = vector.broadcast %cst_60 : f32 to vector<72x64xf32>
    %145 = arith.mulf %143, %144 : vector<72x64xf32>
    %cst_61 = arith.constant -1.45315206 : f32
    %146 = vector.broadcast %cst_61 : f32 to vector<72x64xf32>
    %147 = arith.addf %146, %145 : vector<72x64xf32>
    %148 = arith.mulf %143, %147 : vector<72x64xf32>
    %cst_62 = arith.constant 1.42141378 : f32
    %149 = vector.broadcast %cst_62 : f32 to vector<72x64xf32>
    %150 = arith.addf %149, %148 : vector<72x64xf32>
    %151 = arith.mulf %143, %150 : vector<72x64xf32>
    %cst_63 = arith.constant -0.284496725 : f32
    %152 = vector.broadcast %cst_63 : f32 to vector<72x64xf32>
    %153 = arith.addf %152, %151 : vector<72x64xf32>
    %154 = arith.mulf %143, %153 : vector<72x64xf32>
    %cst_64 = arith.constant 0.254829586 : f32
    %155 = vector.broadcast %cst_64 : f32 to vector<72x64xf32>
    %156 = arith.addf %155, %154 : vector<72x64xf32>
    %157 = arith.mulf %143, %156 : vector<72x64xf32>
    %cst_65 = arith.constant 0.000000e+00 : f32
    %158 = vector.broadcast %cst_65 : f32 to vector<72x64xf32>
    %159 = arith.subf %158, %137 : vector<72x64xf32>
    %160 = arith.mulf %159, %137 : vector<72x64xf32>
    %161 = math.exp %160 : vector<72x64xf32>
    %162 = arith.mulf %157, %161 : vector<72x64xf32>
    %cst_66 = arith.constant 1.000000e+00 : f32
    %163 = vector.broadcast %cst_66 : f32 to vector<72x64xf32>
    %164 = arith.subf %163, %162 : vector<72x64xf32>
    %165 = arith.mulf %136, %164 : vector<72x64xf32>
    %cst_67 = arith.constant 1.000000e+00 : f32
    %166 = vector.broadcast %cst_67 : f32 to vector<72x64xf32>
    %167 = arith.addf %166, %165 : vector<72x64xf32>
    %168 = arith.mulf %129, %167 : vector<72x64xf32>
    %169 = arith.truncf %168 : vector<72x64xf32> to vector<72x64xbf16>
    %c0_68 = arith.constant 0 : index
    %c0_69 = arith.constant 0 : index
    %c0_70 = arith.constant 0 : index
    %170 = vector.load %arg11[%c0_68, %c0_69, %c0_70] : memref<2x64x16xbf16, #tpu.memory_space<vmem>>, vector<1x64x16xbf16>
    %171 = vector.shape_cast %170 : vector<1x64x16xbf16> to vector<64x16xbf16>
    %cst_71 = arith.constant dense<0.000000e+00> : vector<72x16xf32>
    %172 = tpu.matmul %169, %171, %cst_71 {dimension_numbers = #tpu.dot_dimension_numbers<[1], [0], [0], [1], [0, 0, 1, 1], [], []>} : vector<72x64xbf16>, vector<64x16xbf16>, vector<72x16xf32> -> vector<72x16xf32>
    %173 = arith.addf %93, %172 : vector<72x16xf32>
    %c0_72 = arith.constant 0 : index
    %c0_73 = arith.constant 0 : index
    %c0_74 = arith.constant 0 : index
    %174 = vector.load %arg12[%c0_72, %c0_73, %c0_74] : memref<2x1x16xf32, #tpu.memory_space<vmem>>, vector<1x1x16xf32>
    %175 = vector.shape_cast %174 : vector<1x1x16xf32> to vector<1x16xf32>
    %176 = vector.broadcast %175 : vector<1x16xf32> to vector<72x16xf32>
    %177 = arith.addf %173, %176 : vector<72x16xf32>
    %cst_75 = arith.constant dense<0.000000e+00> : vector<72xf32>
    %178 = vector.multi_reduction <add>, %177, %cst_75 [1] : vector<72x16xf32> to vector<72xf32>
    %179 = vector.shape_cast %178 : vector<72xf32> to vector<72x1xf32>
    %cst_76 = arith.constant 1.600000e+01 : f32
    %180 = vector.broadcast %cst_76 : f32 to vector<72x1xf32>
    %181 = arith.divf %179, %180 : vector<72x1xf32>
    %182 = vector.broadcast %181 : vector<72x1xf32> to vector<72x16xf32>
    %183 = arith.subf %177, %182 : vector<72x16xf32>
    %184 = arith.mulf %183, %183 : vector<72x16xf32>
    %cst_77 = arith.constant dense<0.000000e+00> : vector<72xf32>
    %185 = vector.multi_reduction <add>, %184, %cst_77 [1] : vector<72x16xf32> to vector<72xf32>
    %186 = vector.shape_cast %185 : vector<72xf32> to vector<72x1xf32>
    %cst_78 = arith.constant 1.600000e+01 : f32
    %187 = vector.broadcast %cst_78 : f32 to vector<72x1xf32>
    %188 = arith.divf %186, %187 : vector<72x1xf32>
    %189 = vector.broadcast %181 : vector<72x1xf32> to vector<72x16xf32>
    %190 = arith.subf %177, %189 : vector<72x16xf32>
    %cst_79 = arith.constant 9.99999997E-7 : f32
    %191 = vector.broadcast %cst_79 : f32 to vector<72x1xf32>
    %192 = arith.addf %188, %191 : vector<72x1xf32>
    %193 = math.rsqrt %192 : vector<72x1xf32>
    %194 = vector.broadcast %193 : vector<72x1xf32> to vector<72x16xf32>
    %195 = arith.mulf %190, %194 : vector<72x16xf32>
    %c2 = arith.constant 2 : index
    %c0_80 = arith.constant 0 : index
    %c0_81 = arith.constant 0 : index
    %196 = vector.load %arg5[%c2, %c0_80, %c0_81] : memref<10x1x16xf32, #tpu.memory_space<vmem>>, vector<1x1x16xf32>
    %197 = vector.shape_cast %196 : vector<1x1x16xf32> to vector<1x16xf32>
    %198 = vector.broadcast %197 : vector<1x16xf32> to vector<72x16xf32>
    %199 = arith.mulf %195, %198 : vector<72x16xf32>
    %c7 = arith.constant 7 : index
    %c0_82 = arith.constant 0 : index
    %c0_83 = arith.constant 0 : index
    %200 = vector.load %arg5[%c7, %c0_82, %c0_83] : memref<10x1x16xf32, #tpu.memory_space<vmem>>, vector<1x1x16xf32>
    %201 = vector.shape_cast %200 : vector<1x1x16xf32> to vector<1x16xf32>
    %202 = vector.broadcast %201 : vector<1x16xf32> to vector<72x16xf32>
    %203 = arith.addf %199, %202 : vector<72x16xf32>
    %204 = arith.truncf %203 : vector<72x16xf32> to vector<72x16xbf16>
    %c1_84 = arith.constant 1 : index
    %c0_85 = arith.constant 0 : index
    %c0_86 = arith.constant 0 : index
    %205 = vector.load %arg6[%c1_84, %c0_85, %c0_86] : memref<2x16x64xbf16, #tpu.memory_space<vmem>>, vector<1x16x64xbf16>
    %206 = vector.shape_cast %205 : vector<1x16x64xbf16> to vector<16x64xbf16>
    %cst_87 = arith.constant dense<0.000000e+00> : vector<72x64xf32>
    %207 = tpu.matmul %204, %206, %cst_87 {dimension_numbers = #tpu.dot_dimension_numbers<[1], [0], [0], [1], [0, 0, 1, 1], [], []>} : vector<72x16xbf16>, vector<16x64xbf16>, vector<72x64xf32> -> vector<72x64xf32>
    %c1_88 = arith.constant 1 : index
    %c0_89 = arith.constant 0 : index
    %c0_90 = arith.constant 0 : index
    %208 = vector.load %arg7[%c1_88, %c0_89, %c0_90] : memref<2x1x64xf32, #tpu.memory_space<vmem>>, vector<1x1x64xf32>
    %209 = vector.shape_cast %208 : vector<1x1x64xf32> to vector<1x64xf32>
    %210 = vector.broadcast %209 : vector<1x64xf32> to vector<72x64xf32>
    %211 = arith.addf %207, %210 : vector<72x64xf32>
    %212 = vector.shape_cast %211 : vector<72x64xf32> to vector<1x72x64xf32>
    %213 = vector.extract_strided_slice %212 {offsets = [0, 0, 0], sizes = [1, 72, 8], strides = [1, 1, 1]} : vector<1x72x64xf32> to vector<1x72x8xf32>
    %214 = arith.truncf %213 : vector<1x72x8xf32> to vector<1x72x8xbf16>
    %215 = vector.extract_strided_slice %212 {offsets = [0, 0, 16], sizes = [1, 72, 8], strides = [1, 1, 1]} : vector<1x72x64xf32> to vector<1x72x8xf32>
    %216 = arith.truncf %215 : vector<1x72x8xf32> to vector<1x72x8xbf16>
    %217 = vector.extract_strided_slice %212 {offsets = [0, 0, 32], sizes = [1, 72, 16], strides = [1, 1, 1]} : vector<1x72x64xf32> to vector<1x72x16xf32>
    %218 = arith.truncf %217 : vector<1x72x16xf32> to vector<1x72x16xbf16>
    "tpu.trace_start"() <{level = 10 : i32, message = "bqd,bkd->bqk"}> : () -> ()
    %cst_91 = arith.constant dense<0.000000e+00> : vector<1x72x72xf32>
    %219 = tpu.matmul %214, %216, %cst_91 {dimension_numbers = #tpu.dot_dimension_numbers<[2], [2], [1], [1], [0, 0, 0, 1, 1, 1], [0], [0]>} : vector<1x72x8xbf16>, vector<1x72x8xbf16>, vector<1x72x72xf32> -> vector<1x72x72xf32>
    "tpu.trace_stop"() : () -> ()
    %220 = vector.shape_cast %9 : vector<72x72xf32> to vector<1x72x72xf32>
    %221 = arith.addf %219, %220 : vector<1x72x72xf32>
    %cst_92 = arith.constant dense<0xFF800000> : vector<1x72xf32>
    %222 = vector.multi_reduction <maximumf>, %221, %cst_92 [2] : vector<1x72x72xf32> to vector<1x72xf32>
    %223 = vector.shape_cast %222 : vector<1x72xf32> to vector<1x72x1xf32>
    %224 = vector.broadcast %223 : vector<1x72x1xf32> to vector<1x72x72xf32>
    %225 = arith.subf %221, %224 : vector<1x72x72xf32>
    %226 = math.exp %225 : vector<1x72x72xf32>
    %cst_93 = arith.constant dense<0.000000e+00> : vector<1x72xf32>
    %227 = vector.multi_reduction <add>, %226, %cst_93 [2] : vector<1x72x72xf32> to vector<1x72xf32>
    %228 = vector.shape_cast %227 : vector<1x72xf32> to vector<1x72x1xf32>
    %229 = tpu.reciprocal %228 {approx = true} : vector<1x72x1xf32> -> vector<1x72x1xf32>
    %230 = vector.broadcast %229 : vector<1x72x1xf32> to vector<1x72x72xf32>
    %231 = arith.mulf %226, %230 : vector<1x72x72xf32>
    %232 = arith.truncf %231 : vector<1x72x72xf32> to vector<1x72x72xbf16>
    "tpu.trace_start"() <{level = 10 : i32, message = "bqk,bkf->bqf"}> : () -> ()
    %cst_94 = arith.constant dense<0.000000e+00> : vector<1x72x16xf32>
    %233 = tpu.matmul %232, %218, %cst_94 {dimension_numbers = #tpu.dot_dimension_numbers<[2], [1], [1], [2], [0, 0, 0, 1, 1, 2], [0], [0]>} : vector<1x72x72xbf16>, vector<1x72x16xbf16>, vector<1x72x16xf32> -> vector<1x72x16xf32>
    "tpu.trace_stop"() : () -> ()
    %234 = vector.extract_strided_slice %212 {offsets = [0, 0, 8], sizes = [1, 72, 8], strides = [1, 1, 1]} : vector<1x72x64xf32> to vector<1x72x8xf32>
    %235 = arith.truncf %234 : vector<1x72x8xf32> to vector<1x72x8xbf16>
    %236 = vector.extract_strided_slice %212 {offsets = [0, 0, 24], sizes = [1, 72, 8], strides = [1, 1, 1]} : vector<1x72x64xf32> to vector<1x72x8xf32>
    %237 = arith.truncf %236 : vector<1x72x8xf32> to vector<1x72x8xbf16>
    %238 = vector.extract_strided_slice %212 {offsets = [0, 0, 48], sizes = [1, 72, 16], strides = [1, 1, 1]} : vector<1x72x64xf32> to vector<1x72x16xf32>
    %239 = arith.truncf %238 : vector<1x72x16xf32> to vector<1x72x16xbf16>
    "tpu.trace_start"() <{level = 10 : i32, message = "bqd,bkd->bqk"}> : () -> ()
    %cst_95 = arith.constant dense<0.000000e+00> : vector<1x72x72xf32>
    %240 = tpu.matmul %235, %237, %cst_95 {dimension_numbers = #tpu.dot_dimension_numbers<[2], [2], [1], [1], [0, 0, 0, 1, 1, 1], [0], [0]>} : vector<1x72x8xbf16>, vector<1x72x8xbf16>, vector<1x72x72xf32> -> vector<1x72x72xf32>
    "tpu.trace_stop"() : () -> ()
    %241 = vector.shape_cast %9 : vector<72x72xf32> to vector<1x72x72xf32>
    %242 = arith.addf %240, %241 : vector<1x72x72xf32>
    %cst_96 = arith.constant dense<0xFF800000> : vector<1x72xf32>
    %243 = vector.multi_reduction <maximumf>, %242, %cst_96 [2] : vector<1x72x72xf32> to vector<1x72xf32>
    %244 = vector.shape_cast %243 : vector<1x72xf32> to vector<1x72x1xf32>
    %245 = vector.broadcast %244 : vector<1x72x1xf32> to vector<1x72x72xf32>
    %246 = arith.subf %242, %245 : vector<1x72x72xf32>
    %247 = math.exp %246 : vector<1x72x72xf32>
    %cst_97 = arith.constant dense<0.000000e+00> : vector<1x72xf32>
    %248 = vector.multi_reduction <add>, %247, %cst_97 [2] : vector<1x72x72xf32> to vector<1x72xf32>
    %249 = vector.shape_cast %248 : vector<1x72xf32> to vector<1x72x1xf32>
    %250 = tpu.reciprocal %249 {approx = true} : vector<1x72x1xf32> -> vector<1x72x1xf32>
    %251 = vector.broadcast %250 : vector<1x72x1xf32> to vector<1x72x72xf32>
    %252 = arith.mulf %247, %251 : vector<1x72x72xf32>
    %253 = arith.truncf %252 : vector<1x72x72xf32> to vector<1x72x72xbf16>
    "tpu.trace_start"() <{level = 10 : i32, message = "bqk,bkf->bqf"}> : () -> ()
    %cst_98 = arith.constant dense<0.000000e+00> : vector<1x72x16xf32>
    %254 = tpu.matmul %253, %239, %cst_98 {dimension_numbers = #tpu.dot_dimension_numbers<[2], [1], [1], [2], [0, 0, 0, 1, 1, 2], [0], [0]>} : vector<1x72x72xbf16>, vector<1x72x16xbf16>, vector<1x72x16xf32> -> vector<1x72x16xf32>
    "tpu.trace_stop"() : () -> ()
    %255 = arith.addf %233, %254 : vector<1x72x16xf32>
    %256 = vector.shape_cast %255 : vector<1x72x16xf32> to vector<72x16xf32>
    %257 = arith.addf %177, %256 : vector<72x16xf32>
    %c1_99 = arith.constant 1 : index
    %c0_100 = arith.constant 0 : index
    %c0_101 = arith.constant 0 : index
    %258 = vector.load %arg8[%c1_99, %c0_100, %c0_101] : memref<2x1x16xf32, #tpu.memory_space<vmem>>, vector<1x1x16xf32>
    %259 = vector.shape_cast %258 : vector<1x1x16xf32> to vector<1x16xf32>
    %260 = vector.broadcast %259 : vector<1x16xf32> to vector<72x16xf32>
    %261 = arith.addf %257, %260 : vector<72x16xf32>
    %cst_102 = arith.constant dense<0.000000e+00> : vector<72xf32>
    %262 = vector.multi_reduction <add>, %261, %cst_102 [1] : vector<72x16xf32> to vector<72xf32>
    %263 = vector.shape_cast %262 : vector<72xf32> to vector<72x1xf32>
    %cst_103 = arith.constant 1.600000e+01 : f32
    %264 = vector.broadcast %cst_103 : f32 to vector<72x1xf32>
    %265 = arith.divf %263, %264 : vector<72x1xf32>
    %266 = vector.broadcast %265 : vector<72x1xf32> to vector<72x16xf32>
    %267 = arith.subf %261, %266 : vector<72x16xf32>
    %268 = arith.mulf %267, %267 : vector<72x16xf32>
    %cst_104 = arith.constant dense<0.000000e+00> : vector<72xf32>
    %269 = vector.multi_reduction <add>, %268, %cst_104 [1] : vector<72x16xf32> to vector<72xf32>
    %270 = vector.shape_cast %269 : vector<72xf32> to vector<72x1xf32>
    %cst_105 = arith.constant 1.600000e+01 : f32
    %271 = vector.broadcast %cst_105 : f32 to vector<72x1xf32>
    %272 = arith.divf %270, %271 : vector<72x1xf32>
    %273 = vector.broadcast %265 : vector<72x1xf32> to vector<72x16xf32>
    %274 = arith.subf %261, %273 : vector<72x16xf32>
    %cst_106 = arith.constant 9.99999997E-7 : f32
    %275 = vector.broadcast %cst_106 : f32 to vector<72x1xf32>
    %276 = arith.addf %272, %275 : vector<72x1xf32>
    %277 = math.rsqrt %276 : vector<72x1xf32>
    %278 = vector.broadcast %277 : vector<72x1xf32> to vector<72x16xf32>
    %279 = arith.mulf %274, %278 : vector<72x16xf32>
    %c3 = arith.constant 3 : index
    %c0_107 = arith.constant 0 : index
    %c0_108 = arith.constant 0 : index
    %280 = vector.load %arg5[%c3, %c0_107, %c0_108] : memref<10x1x16xf32, #tpu.memory_space<vmem>>, vector<1x1x16xf32>
    %281 = vector.shape_cast %280 : vector<1x1x16xf32> to vector<1x16xf32>
    %282 = vector.broadcast %281 : vector<1x16xf32> to vector<72x16xf32>
    %283 = arith.mulf %279, %282 : vector<72x16xf32>
    %c8 = arith.constant 8 : index
    %c0_109 = arith.constant 0 : index
    %c0_110 = arith.constant 0 : index
    %284 = vector.load %arg5[%c8, %c0_109, %c0_110] : memref<10x1x16xf32, #tpu.memory_space<vmem>>, vector<1x1x16xf32>
    %285 = vector.shape_cast %284 : vector<1x1x16xf32> to vector<1x16xf32>
    %286 = vector.broadcast %285 : vector<1x16xf32> to vector<72x16xf32>
    %287 = arith.addf %283, %286 : vector<72x16xf32>
    %288 = arith.truncf %287 : vector<72x16xf32> to vector<72x16xbf16>
    %c1_111 = arith.constant 1 : index
    %c0_112 = arith.constant 0 : index
    %c0_113 = arith.constant 0 : index
    %289 = vector.load %arg9[%c1_111, %c0_112, %c0_113] : memref<2x16x64xbf16, #tpu.memory_space<vmem>>, vector<1x16x64xbf16>
    %290 = vector.shape_cast %289 : vector<1x16x64xbf16> to vector<16x64xbf16>
    %cst_114 = arith.constant dense<0.000000e+00> : vector<72x64xf32>
    %291 = tpu.matmul %288, %290, %cst_114 {dimension_numbers = #tpu.dot_dimension_numbers<[1], [0], [0], [1], [0, 0, 1, 1], [], []>} : vector<72x16xbf16>, vector<16x64xbf16>, vector<72x64xf32> -> vector<72x64xf32>
    %c1_115 = arith.constant 1 : index
    %c0_116 = arith.constant 0 : index
    %c0_117 = arith.constant 0 : index
    %292 = vector.load %arg10[%c1_115, %c0_116, %c0_117] : memref<2x1x64xf32, #tpu.memory_space<vmem>>, vector<1x1x64xf32>
    %293 = vector.shape_cast %292 : vector<1x1x64xf32> to vector<1x64xf32>
    %294 = vector.broadcast %293 : vector<1x64xf32> to vector<72x64xf32>
    %295 = arith.addf %291, %294 : vector<72x64xf32>
    %cst_118 = arith.constant 5.000000e-01 : f32
    %296 = vector.broadcast %cst_118 : f32 to vector<72x64xf32>
    %297 = arith.mulf %296, %295 : vector<72x64xf32>
    %cst_119 = arith.constant 0.707106769 : f32
    %298 = vector.broadcast %cst_119 : f32 to vector<72x64xf32>
    %299 = arith.mulf %295, %298 : vector<72x64xf32>
    %cst_120 = arith.constant 0.000000e+00 : f32
    %300 = vector.broadcast %cst_120 : f32 to vector<72x64xf32>
    %301 = arith.cmpf oge, %299, %300 : vector<72x64xf32>
    %cst_121 = arith.constant 1.000000e+00 : f32
    %cst_122 = arith.constant -1.000000e+00 : f32
    %302 = vector.broadcast %cst_121 : f32 to vector<72x64xf32>
    %303 = vector.broadcast %cst_122 : f32 to vector<72x64xf32>
    %304 = arith.select %301, %302, %303 : vector<72x64xi1>, vector<72x64xf32>
    %305 = math.absf %299 : vector<72x64xf32>
    %cst_123 = arith.constant 0.327591091 : f32
    %306 = vector.broadcast %cst_123 : f32 to vector<72x64xf32>
    %307 = arith.mulf %306, %305 : vector<72x64xf32>
    %cst_124 = arith.constant 1.000000e+00 : f32
    %308 = vector.broadcast %cst_124 : f32 to vector<72x64xf32>
    %309 = arith.addf %308, %307 : vector<72x64xf32>
    %cst_125 = arith.constant 1.000000e+00 : f32
    %310 = vector.broadcast %cst_125 : f32 to vector<72x64xf32>
    %311 = arith.divf %310, %309 : vector<72x64xf32>
    %cst_126 = arith.constant 1.06140542 : f32
    %312 = vector.broadcast %cst_126 : f32 to vector<72x64xf32>
    %313 = arith.mulf %311, %312 : vector<72x64xf32>
    %cst_127 = arith.constant -1.45315206 : f32
    %314 = vector.broadcast %cst_127 : f32 to vector<72x64xf32>
    %315 = arith.addf %314, %313 : vector<72x64xf32>
    %316 = arith.mulf %311, %315 : vector<72x64xf32>
    %cst_128 = arith.constant 1.42141378 : f32
    %317 = vector.broadcast %cst_128 : f32 to vector<72x64xf32>
    %318 = arith.addf %317, %316 : vector<72x64xf32>
    %319 = arith.mulf %311, %318 : vector<72x64xf32>
    %cst_129 = arith.constant -0.284496725 : f32
    %320 = vector.broadcast %cst_129 : f32 to vector<72x64xf32>
    %321 = arith.addf %320, %319 : vector<72x64xf32>
    %322 = arith.mulf %311, %321 : vector<72x64xf32>
    %cst_130 = arith.constant 0.254829586 : f32
    %323 = vector.broadcast %cst_130 : f32 to vector<72x64xf32>
    %324 = arith.addf %323, %322 : vector<72x64xf32>
    %325 = arith.mulf %311, %324 : vector<72x64xf32>
    %cst_131 = arith.constant 0.000000e+00 : f32
    %326 = vector.broadcast %cst_131 : f32 to vector<72x64xf32>
    %327 = arith.subf %326, %305 : vector<72x64xf32>
    %328 = arith.mulf %327, %305 : vector<72x64xf32>
    %329 = math.exp %328 : vector<72x64xf32>
    %330 = arith.mulf %325, %329 : vector<72x64xf32>
    %cst_132 = arith.constant 1.000000e+00 : f32
    %331 = vector.broadcast %cst_132 : f32 to vector<72x64xf32>
    %332 = arith.subf %331, %330 : vector<72x64xf32>
    %333 = arith.mulf %304, %332 : vector<72x64xf32>
    %cst_133 = arith.constant 1.000000e+00 : f32
    %334 = vector.broadcast %cst_133 : f32 to vector<72x64xf32>
    %335 = arith.addf %334, %333 : vector<72x64xf32>
    %336 = arith.mulf %297, %335 : vector<72x64xf32>
    %337 = arith.truncf %336 : vector<72x64xf32> to vector<72x64xbf16>
    %c1_134 = arith.constant 1 : index
    %c0_135 = arith.constant 0 : index
    %c0_136 = arith.constant 0 : index
    %338 = vector.load %arg11[%c1_134, %c0_135, %c0_136] : memref<2x64x16xbf16, #tpu.memory_space<vmem>>, vector<1x64x16xbf16>
    %339 = vector.shape_cast %338 : vector<1x64x16xbf16> to vector<64x16xbf16>
    %cst_137 = arith.constant dense<0.000000e+00> : vector<72x16xf32>
    %340 = tpu.matmul %337, %339, %cst_137 {dimension_numbers = #tpu.dot_dimension_numbers<[1], [0], [0], [1], [0, 0, 1, 1], [], []>} : vector<72x64xbf16>, vector<64x16xbf16>, vector<72x16xf32> -> vector<72x16xf32>
    %341 = arith.addf %261, %340 : vector<72x16xf32>
    %c1_138 = arith.constant 1 : index
    %c0_139 = arith.constant 0 : index
    %c0_140 = arith.constant 0 : index
    %342 = vector.load %arg12[%c1_138, %c0_139, %c0_140] : memref<2x1x16xf32, #tpu.memory_space<vmem>>, vector<1x1x16xf32>
    %343 = vector.shape_cast %342 : vector<1x1x16xf32> to vector<1x16xf32>
    %344 = vector.broadcast %343 : vector<1x16xf32> to vector<72x16xf32>
    %345 = arith.addf %341, %344 : vector<72x16xf32>
    %346 = vector.shape_cast %345 : vector<72x16xf32> to vector<1x72x16xf32>
    %347 = vector.extract_strided_slice %346 {offsets = [0, 0, 0], sizes = [1, 1, 16], strides = [1, 1, 1]} : vector<1x72x16xf32> to vector<1x1x16xf32>
    %348 = vector.shape_cast %347 : vector<1x1x16xf32> to vector<1x16xf32>
    %cst_141 = arith.constant dense<0.000000e+00> : vector<1xf32>
    %349 = vector.multi_reduction <add>, %348, %cst_141 [1] : vector<1x16xf32> to vector<1xf32>
    %350 = vector.shape_cast %349 : vector<1xf32> to vector<1x1xf32>
    %cst_142 = arith.constant 1.600000e+01 : f32
    %351 = vector.broadcast %cst_142 : f32 to vector<1x1xf32>
    %352 = arith.divf %350, %351 : vector<1x1xf32>
    %353 = vector.broadcast %352 : vector<1x1xf32> to vector<1x16xf32>
    %354 = arith.subf %348, %353 : vector<1x16xf32>
    %355 = arith.mulf %354, %354 : vector<1x16xf32>
    %cst_143 = arith.constant dense<0.000000e+00> : vector<1xf32>
    %356 = vector.multi_reduction <add>, %355, %cst_143 [1] : vector<1x16xf32> to vector<1xf32>
    %357 = vector.shape_cast %356 : vector<1xf32> to vector<1x1xf32>
    %cst_144 = arith.constant 1.600000e+01 : f32
    %358 = vector.broadcast %cst_144 : f32 to vector<1x1xf32>
    %359 = arith.divf %357, %358 : vector<1x1xf32>
    %360 = vector.broadcast %352 : vector<1x1xf32> to vector<1x16xf32>
    %361 = arith.subf %348, %360 : vector<1x16xf32>
    %cst_145 = arith.constant 9.99999997E-7 : f32
    %362 = vector.broadcast %cst_145 : f32 to vector<1x1xf32>
    %363 = arith.addf %359, %362 : vector<1x1xf32>
    %364 = math.rsqrt %363 : vector<1x1xf32>
    %365 = vector.broadcast %364 : vector<1x1xf32> to vector<1x16xf32>
    %366 = arith.mulf %361, %365 : vector<1x16xf32>
    %c4 = arith.constant 4 : index
    %c0_146 = arith.constant 0 : index
    %c0_147 = arith.constant 0 : index
    %367 = vector.load %arg5[%c4, %c0_146, %c0_147] : memref<10x1x16xf32, #tpu.memory_space<vmem>>, vector<1x1x16xf32>
    %368 = vector.shape_cast %367 : vector<1x1x16xf32> to vector<1x16xf32>
    %369 = arith.mulf %366, %368 : vector<1x16xf32>
    %c9 = arith.constant 9 : index
    %c0_148 = arith.constant 0 : index
    %c0_149 = arith.constant 0 : index
    %370 = vector.load %arg5[%c9, %c0_148, %c0_149] : memref<10x1x16xf32, #tpu.memory_space<vmem>>, vector<1x1x16xf32>
    %371 = vector.shape_cast %370 : vector<1x1x16xf32> to vector<1x16xf32>
    %372 = arith.addf %369, %371 : vector<1x16xf32>
    %c0_150 = arith.constant 0 : index
    %c0_151 = arith.constant 0 : index
    %373 = vector.load %arg13[%c0_150, %c0_151] : memref<16x10xf32, #tpu.memory_space<vmem>>, vector<16x10xf32>
    %cst_152 = arith.constant dense<0.000000e+00> : vector<1x10xf32>
    %374 = tpu.matmul %372, %373, %cst_152 {dimension_numbers = #tpu.dot_dimension_numbers<[1], [0], [0], [1], [0, 0, 1, 1], [], []>} : vector<1x16xf32>, vector<16x10xf32>, vector<1x10xf32> -> vector<1x10xf32>
    %c0_153 = arith.constant 0 : index
    %c0_154 = arith.constant 0 : index
    %375 = vector.load %arg14[%c0_153, %c0_154] : memref<1x10xf32, #tpu.memory_space<vmem>>, vector<1x10xf32>
    %376 = arith.addf %374, %375 : vector<1x10xf32>
    %c0_155 = arith.constant 0 : index
    %c0_156 = arith.constant 0 : index
    %c0_157 = arith.constant 0 : index
    %377 = vector.load %arg15[%c0_155, %c0_156, %c0_157] : memref<1x1x10xf32, #tpu.memory_space<vmem>>, vector<1x1x10xf32>
    %378 = vector.shape_cast %377 : vector<1x1x10xf32> to vector<1x10xf32>
    %379 = vector.shape_cast %376 : vector<1x10xf32> to vector<1x1x10xf32>
    tpu.vector_store %arg15[%c0_155, %c0_156, %c0_157], %379 {strides = array<i32>} : memref<1x1x10xf32, #tpu.memory_space<vmem>>, vector<1x1x10xf32>,
    return
  }
  func.func @transform_0(%arg0: i32) -> (i32, i32, i32) {
    %c0_i32 = arith.constant 0 : i32
    %c0_i32_0 = arith.constant 0 : i32
    %c0_i32_1 = arith.constant 0 : i32
    return %arg0, %c0_i32, %c0_i32_0 : i32, i32, i32
  }
  func.func @transform_1(%arg0: i32) -> (i32, i32) {
    %c0_i32 = arith.constant 0 : i32
    %c0_i32_0 = arith.constant 0 : i32
    %c0_i32_1 = arith.constant 0 : i32
    return %c0_i32, %c0_i32_0 : i32, i32
  }
  func.func @transform_2(%arg0: i32) -> (i32, i32) {
    %c0_i32 = arith.constant 0 : i32
    %c0_i32_0 = arith.constant 0 : i32
    %c0_i32_1 = arith.constant 0 : i32
    return %c0_i32, %c0_i32_0 : i32, i32
  }
  func.func @transform_3(%arg0: i32) -> (i32, i32) {
    %c0_i32 = arith.constant 0 : i32
    %c0_i32_0 = arith.constant 0 : i32
    %c0_i32_1 = arith.constant 0 : i32
    return %c0_i32, %c0_i32_0 : i32, i32
  }
  func.func @transform_4(%arg0: i32) -> (i32, i32, i32) {
    %c0_i32 = arith.constant 0 : i32
    %c0_i32_0 = arith.constant 0 : i32
    %c0_i32_1 = arith.constant 0 : i32
    %c0_i32_2 = arith.constant 0 : i32
    return %c0_i32, %c0_i32_0, %c0_i32_1 : i32, i32, i32
  }
  func.func @transform_5(%arg0: i32) -> (i32, i32, i32) {
    %c0_i32 = arith.constant 0 : i32
    %c0_i32_0 = arith.constant 0 : i32
    %c0_i32_1 = arith.constant 0 : i32
    %c0_i32_2 = arith.constant 0 : i32
    return %c0_i32, %c0_i32_0, %c0_i32_1 : i32, i32, i32
  }
  func.func @transform_6(%arg0: i32) -> (i32, i32, i32) {
    %c0_i32 = arith.constant 0 : i32
    %c0_i32_0 = arith.constant 0 : i32
    %c0_i32_1 = arith.constant 0 : i32
    %c0_i32_2 = arith.constant 0 : i32
    return %c0_i32, %c0_i32_0, %c0_i32_1 : i32, i32, i32
  }
  func.func @transform_7(%arg0: i32) -> (i32, i32, i32) {
    %c0_i32 = arith.constant 0 : i32
    %c0_i32_0 = arith.constant 0 : i32
    %c0_i32_1 = arith.constant 0 : i32
    %c0_i32_2 = arith.constant 0 : i32
    return %c0_i32, %c0_i32_0, %c0_i32_1 : i32, i32, i32
  }
  func.func @transform_8(%arg0: i32) -> (i32, i32, i32) {
    %c0_i32 = arith.constant 0 : i32
    %c0_i32_0 = arith.constant 0 : i32
    %c0_i32_1 = arith.constant 0 : i32
    %c0_i32_2 = arith.constant 0 : i32
    return %c0_i32, %c0_i32_0, %c0_i32_1 : i32, i32, i32
  }
  func.func @transform_9(%arg0: i32) -> (i32, i32, i32) {
    %c0_i32 = arith.constant 0 : i32
    %c0_i32_0 = arith.constant 0 : i32
    %c0_i32_1 = arith.constant 0 : i32
    %c0_i32_2 = arith.constant 0 : i32
    return %c0_i32, %c0_i32_0, %c0_i32_1 : i32, i32, i32
  }
  func.func @transform_10(%arg0: i32) -> (i32, i32, i32) {
    %c0_i32 = arith.constant 0 : i32
    %c0_i32_0 = arith.constant 0 : i32
    %c0_i32_1 = arith.constant 0 : i32
    %c0_i32_2 = arith.constant 0 : i32
    return %c0_i32, %c0_i32_0, %c0_i32_1 : i32, i32, i32
  }
  func.func @transform_11(%arg0: i32) -> (i32, i32, i32) {
    %c0_i32 = arith.constant 0 : i32
    %c0_i32_0 = arith.constant 0 : i32
    %c0_i32_1 = arith.constant 0 : i32
    %c0_i32_2 = arith.constant 0 : i32
    return %c0_i32, %c0_i32_0, %c0_i32_1 : i32, i32, i32
  }
  func.func @transform_12(%arg0: i32) -> (i32, i32) {
    %c0_i32 = arith.constant 0 : i32
    %c0_i32_0 = arith.constant 0 : i32
    %c0_i32_1 = arith.constant 0 : i32
    return %c0_i32, %c0_i32_0 : i32, i32
  }
  func.func @transform_13(%arg0: i32) -> (i32, i32) {
    %c0_i32 = arith.constant 0 : i32
    %c0_i32_0 = arith.constant 0 : i32
    %c0_i32_1 = arith.constant 0 : i32
    return %c0_i32, %c0_i32_0 : i32, i32
  }
  func.func @transform_14(%arg0: i32) -> (i32, i32, i32) {
    %c0_i32 = arith.constant 0 : i32
    %c0_i32_0 = arith.constant 0 : i32
    %c0_i32_1 = arith.constant 0 : i32
    return %arg0, %c0_i32, %c0_i32_0 : i32, i32, i32
  }
}

</mosaic_0001>

<llo_original>
// kernel: _vit_forward.1
$region0: #{_vit_forward.1}
  #allocation0 [shape = 'u32[]', space=smem, size = 0x4, offset = 0x4, fixed_abs, tag = 'smem constant byte address 0x4 - core index']
  #allocation1 [shape = 'u32[144,128]{1,0:T(1,128)}', space=vmem, size = 0x12000, scoped, tag = 'internal scratch']
  %s0 = inlined_call_operand.vmem [shape: bf16[2,72,48], index: 0, kind: input, shape index: {}]
  %s1 = inlined_call_operand.vmem [shape: f32[72,16], index: 1, kind: input, shape index: {}]
  %s2 = inlined_call_operand.vmem [shape: f32[72,72], index: 2, kind: input, shape index: {}]
  %s3 = inlined_call_operand.vmem [shape: bf16[48,16], index: 3, kind: input, shape index: {}]
  %s4 = inlined_call_operand.vmem [shape: f32[10,1,16], index: 4, kind: input, shape index: {}]
  %s5 = inlined_call_operand.vmem [shape: bf16[2,16,64], index: 5, kind: input, shape index: {}]
  %s6 = inlined_call_operand.vmem [shape: f32[2,1,64], index: 6, kind: input, shape index: {}]
  %s7 = inlined_call_operand.vmem [shape: f32[2,1,16], index: 7, kind: input, shape index: {}]
  %s8 = inlined_call_operand.vmem [shape: bf16[2,16,64], index: 8, kind: input, shape index: {}]
  %s9 = inlined_call_operand.vmem [shape: f32[2,1,64], index: 9, kind: input, shape index: {}]
  %s10 = inlined_call_operand.vmem [shape: bf16[2,64,16], index: 10, kind: input, shape index: {}]
  %s11 = inlined_call_operand.vmem [shape: f32[2,1,16], index: 11, kind: input, shape index: {}]
  %s12 = inlined_call_operand.vmem [shape: f32[16,10], index: 12, kind: input, shape index: {}]
  %s13 = inlined_call_operand.vmem [shape: f32[1,10], index: 13, kind: input, shape index: {}]
  %s14 = inlined_call_operand.hbm [shape: f32[2,1,10], index: 14, kind: output, shape index: {}]
  %s15 = sld [smem:[#allocation0]]
  $region89: #{_vit_forward.1} parent=0
    _
  %s17 = ssub.s32 1, %s15
  %s18 = scalar_select 0, %s17, %s15
  $region1: #{_vit_forward.1} parent=0
    #allocation2 [shape = 'u8[1024]{0}', space=vmem, size = 0x400, scoped, tag = 'output window, operand 0']
    #allocation3 [shape = 's32[2]{0}', space=sflag, size = 0x8, scoped, tag = 'scoped memory for _vit_forward.1']
    %19 = vsyncpa [#allocation3], 0
    %s20 = scalar_lea.sflag [#allocation3], 1
    %21 = vsyncpa %s20, 0
    loop: start=0, step=1, limit=4
    $region2: #{_vit_forward.1} parent=1 // loop_pre_header
      _
    $region3: #{_vit_forward.1} parent=1 // loop_header
      %s23 = sphi 0, %s27
      %p24 = scmp.ge.s32.totalorder %s23, 4
      %s33 = sphi 0, %s35
      %s36 = sphi 0, %s33
      %s37 = sphi 0, %s36
      %s53 = sphi 0, %s37
      %s57 = sphi 0, %s57
      %s59 = sphi 0, %s57
      %s60 = sphi 0, %s59
      %s74 = sphi 0, %s60
      %s78 = sphi 0, %s78
      %s80 = sphi 0, %s78
      %s81 = sphi 0, %s80
      %s95 = sphi 0, %s81
      %s99 = sphi 0, %s99
      %s101 = sphi 0, %s99
      %s102 = sphi 0, %s101
      %s116 = sphi 0, %s102
      %s120 = sphi 0, %s120
      %s122 = sphi 0, %s120
      %s123 = sphi 0, %s122
      %s137 = sphi 0, %s123
      %s141 = sphi 0, %s141
      %s143 = sphi 0, %s141
      %s144 = sphi 0, %s143
      %s158 = sphi 0, %s144
      %s162 = sphi 0, %s162
      %s164 = sphi 0, %s162
      %s165 = sphi 0, %s164
      %s179 = sphi 0, %s165
      %s183 = sphi 0, %s183
      %s185 = sphi 0, %s183
      %s186 = sphi 0, %s185
      %s200 = sphi 0, %s186
      %s204 = sphi 0, %s204
      %s206 = sphi 0, %s204
      %s207 = sphi 0, %s206
      %s221 = sphi 0, %s207
      %s225 = sphi 0, %s225
      %s227 = sphi 0, %s225
      %s228 = sphi 0, %s227
      %s242 = sphi 0, %s228
      %s246 = sphi 0, %s246
      %s248 = sphi 0, %s246
      %s249 = sphi 0, %s248
      %s263 = sphi 0, %s249
      %s267 = sphi 0, %s267
      %s269 = sphi 0, %s267
      %s270 = sphi 0, %s269
      %s284 = sphi 0, %s270
      %s288 = sphi 0, %s288
      %s290 = sphi 0, %s288
      %s291 = sphi 0, %s290
      %s305 = sphi 0, %s291
      %s309 = sphi 0, %s309
      %s311 = sphi 0, %s309
      %s312 = sphi 0, %s311
      %s326 = sphi 0, %s312
      %s332 = sphi 0, %s334
      %s335 = sphi 0, %s332
      %s336 = sphi 0, %s335
      %s352 = sphi 0, %s336
    $region4: #{_vit_forward.1} parent=1 // loop_header_branch
      %26 = sbr.rel (%p24) target = $region8
    $region5: #{_vit_forward.1} parent=1 // loop_body
      %s28 = ssub.s32 %s23, 1
      %s29 = ssub.s32 %s23, 2
      %s30 = sadd.s32 %s23, 1
      %s31 = ssub.s32 %s23, %s30
      %p32 = scmp.eq.s32.totalorder %s31, 0
      %s34 = sadd.s32 %s33, 1
      %s35 = scalar_select %p32, %s33, %s34
      %p38 = pneg %p32
      %p39 = scmp.eq.s32.totalorder %s23, 1
      %p40 = por %p38, %p39
      %p41 = scmp.ne.s32.totalorder %s33, %s36
      %p42 = scmp.eq.s32.totalorder %s23, 0
      %p43 = por %p41, %p42
      %p44 = scmp.ne.s32.totalorder %s33, %s36
      %p45 = scmp.eq.s32.totalorder %s28, 1
      %p46 = por %p44, %p45
      %p47 = scmp.ne.s32.totalorder %s36, %s37
      %p48 = scmp.eq.s32.totalorder %s28, 0
      %p49 = por %p47, %p48
      %p50 = scmp.ne.s32.totalorder %s36, %s37
      %p51 = scmp.eq.s32.totalorder %s29, 1
      %p52 = por %p50, %p51
      %p54 = scmp.ne.s32.totalorder %s37, %s53
      %p55 = scmp.eq.s32.totalorder %s29, 0
      %p56 = por %p54, %p55
      %s58 = sadd.s32 %s57, 1
      %p61 = scmp.eq.s32.totalorder %s23, 1
      %p62 = scmp.ne.s32.totalorder %s57, %s59
      %p63 = scmp.eq.s32.totalorder %s23, 0
      %p64 = por %p62, %p63
      %p65 = scmp.ne.s32.totalorder %s57, %s59
      %p66 = scmp.eq.s32.totalorder %s28, 1
      %p67 = por %p65, %p66
      %p68 = scmp.ne.s32.totalorder %s59, %s60
      %p69 = scmp.eq.s32.totalorder %s28, 0
      %p70 = por %p68, %p69
      %p71 = scmp.ne.s32.totalorder %s59, %s60
      %p72 = scmp.eq.s32.totalorder %s29, 1
      %p73 = por %p71, %p72
      %p75 = scmp.ne.s32.totalorder %s60, %s74
      %p76 = scmp.eq.s32.totalorder %s29, 0
      %p77 = por %p75, %p76
      %s79 = sadd.s32 %s78, 1
      %p82 = scmp.eq.s32.totalorder %s23, 1
      %p83 = scmp.ne.s32.totalorder %s78, %s80
      %p84 = scmp.eq.s32.totalorder %s23, 0
      %p85 = por %p83, %p84
      %p86 = scmp.ne.s32.totalorder %s78, %s80
      %p87 = scmp.eq.s32.totalorder %s28, 1
      %p88 = por %p86, %p87
      %p89 = scmp.ne.s32.totalorder %s80, %s81
      %p90 = scmp.eq.s32.totalorder %s28, 0
      %p91 = por %p89, %p90
      %p92 = scmp.ne.s32.totalorder %s80, %s81
      %p93 = scmp.eq.s32.totalorder %s29, 1
      %p94 = por %p92, %p93
      %p96 = scmp.ne.s32.totalorder %s81, %s95
      %p97 = scmp.eq.s32.totalorder %s29, 0
      %p98 = por %p96, %p97
      %s100 = sadd.s32 %s99, 1
      %p103 = scmp.eq.s32.totalorder %s23, 1
      %p104 = scmp.ne.s32.totalorder %s99, %s101
      %p105 = scmp.eq.s32.totalorder %s23, 0
      %p106 = por %p104, %p105
      %p107 = scmp.ne.s32.totalorder %s99, %s101
      %p108 = scmp.eq.s32.totalorder %s28, 1
      %p109 = por %p107, %p108
      %p110 = scmp.ne.s32.totalorder %s101, %s102
      %p111 = scmp.eq.s32.totalorder %s28, 0
      %p112 = por %p110, %p111
      %p113 = scmp.ne.s32.totalorder %s101, %s102
      %p114 = scmp.eq.s32.totalorder %s29, 1
      %p115 = por %p113, %p114
      %p117 = scmp.ne.s32.totalorder %s102, %s116
      %p118 = scmp.eq.s32.totalorder %s29, 0
      %p119 = por %p117, %p118
      %s121 = sadd.s32 %s120, 1
      %p124 = scmp.eq.s32.totalorder %s23, 1
      %p125 = scmp.ne.s32.totalorder %s120, %s122
      %p126 = scmp.eq.s32.totalorder %s23, 0
      %p127 = por %p125, %p126
      %p128 = scmp.ne.s32.totalorder %s120, %s122
      %p129 = scmp.eq.s32.totalorder %s28, 1
      %p130 = por %p128, %p129
      %p131 = scmp.ne.s32.totalorder %s122, %s123
      %p132 = scmp.eq.s32.totalorder %s28, 0
      %p133 = por %p131, %p132
      %p134 = scmp.ne.s32.totalorder %s122, %s123
      %p135 = scmp.eq.s32.totalorder %s29, 1
      %p136 = por %p134, %p135
      %p138 = scmp.ne.s32.totalorder %s123, %s137
      %p139 = scmp.eq.s32.totalorder %s29, 0
      %p140 = por %p138, %p139
      %s142 = sadd.s32 %s141, 1
      %p145 = scmp.eq.s32.totalorder %s23, 1
      %p146 = scmp.ne.s32.totalorder %s141, %s143
      %p147 = scmp.eq.s32.totalorder %s23, 0
      %p148 = por %p146, %p147
      %p149 = scmp.ne.s32.totalorder %s141, %s143
      %p150 = scmp.eq.s32.totalorder %s28, 1
      %p151 = por %p149, %p150
      %p152 = scmp.ne.s32.totalorder %s143, %s144
      %p153 = scmp.eq.s32.totalorder %s28, 0
      %p154 = por %p152, %p153
      %p155 = scmp.ne.s32.totalorder %s143, %s144
      %p156 = scmp.eq.s32.totalorder %s29, 1
      %p157 = por %p155, %p156
      %p159 = scmp.ne.s32.totalorder %s144, %s158
      %p160 = scmp.eq.s32.totalorder %s29, 0
      %p161 = por %p159, %p160
      %s163 = sadd.s32 %s162, 1
      %p166 = scmp.eq.s32.totalorder %s23, 1
      %p167 = scmp.ne.s32.totalorder %s162, %s164
      %p168 = scmp.eq.s32.totalorder %s23, 0
      %p169 = por %p167, %p168
      %p170 = scmp.ne.s32.totalorder %s162, %s164
      %p171 = scmp.eq.s32.totalorder %s28, 1
      %p172 = por %p170, %p171
      %p173 = scmp.ne.s32.totalorder %s164, %s165
      %p174 = scmp.eq.s32.totalorder %s28, 0
      %p175 = por %p173, %p174
      %p176 = scmp.ne.s32.totalorder %s164, %s165
      %p177 = scmp.eq.s32.totalorder %s29, 1
      %p178 = por %p176, %p177
      %p180 = scmp.ne.s32.totalorder %s165, %s179
      %p181 = scmp.eq.s32.totalorder %s29, 0
      %p182 = por %p180, %p181
      %s184 = sadd.s32 %s183, 1
      %p187 = scmp.eq.s32.totalorder %s23, 1
      %p188 = scmp.ne.s32.totalorder %s183, %s185
      %p189 = scmp.eq.s32.totalorder %s23, 0
      %p190 = por %p188, %p189
      %p191 = scmp.ne.s32.totalorder %s183, %s185
      %p192 = scmp.eq.s32.totalorder %s28, 1
      %p193 = por %p191, %p192
      %p194 = scmp.ne.s32.totalorder %s185, %s186
      %p195 = scmp.eq.s32.totalorder %s28, 0
      %p196 = por %p194, %p195
      %p197 = scmp.ne.s32.totalorder %s185, %s186
      %p198 = scmp.eq.s32.totalorder %s29, 1
      %p199 = por %p197, %p198
      %p201 = scmp.ne.s32.totalorder %s186, %s200
      %p202 = scmp.eq.s32.totalorder %s29, 0
      %p203 = por %p201, %p202
      %s205 = sadd.s32 %s204, 1
      %p208 = scmp.eq.s32.totalorder %s23, 1
      %p209 = scmp.ne.s32.totalorder %s204, %s206
      %p210 = scmp.eq.s32.totalorder %s23, 0
      %p211 = por %p209, %p210
      %p212 = scmp.ne.s32.totalorder %s204, %s206
      %p213 = scmp.eq.s32.totalorder %s28, 1
      %p214 = por %p212, %p213
      %p215 = scmp.ne.s32.totalorder %s206, %s207
      %p216 = scmp.eq.s32.totalorder %s28, 0
      %p217 = por %p215, %p216
      %p218 = scmp.ne.s32.totalorder %s206, %s207
      %p219 = scmp.eq.s32.totalorder %s29, 1
      %p220 = por %p218, %p219
      %p222 = scmp.ne.s32.totalorder %s207, %s221
      %p223 = scmp.eq.s32.totalorder %s29, 0
      %p224 = por %p222, %p223
      %s226 = sadd.s32 %s225, 1
      %p229 = scmp.eq.s32.totalorder %s23, 1
      %p230 = scmp.ne.s32.totalorder %s225, %s227
      %p231 = scmp.eq.s32.totalorder %s23, 0
      %p232 = por %p230, %p231
      %p233 = scmp.ne.s32.totalorder %s225, %s227
      %p234 = scmp.eq.s32.totalorder %s28, 1
      %p235 = por %p233, %p234
      %p236 = scmp.ne.s32.totalorder %s227, %s228
      %p237 = scmp.eq.s32.totalorder %s28, 0
      %p238 = por %p236, %p237
      %p239 = scmp.ne.s32.totalorder %s227, %s228
      %p240 = scmp.eq.s32.totalorder %s29, 1
      %p241 = por %p239, %p240
      %p243 = scmp.ne.s32.totalorder %s228, %s242
      %p244 = scmp.eq.s32.totalorder %s29, 0
      %p245 = por %p243, %p244
      %s247 = sadd.s32 %s246, 1
      %p250 = scmp.eq.s32.totalorder %s23, 1
      %p251 = scmp.ne.s32.totalorder %s246, %s248
      %p252 = scmp.eq.s32.totalorder %s23, 0
      %p253 = por %p251, %p252
      %p254 = scmp.ne.s32.totalorder %s246, %s248
      %p255 = scmp.eq.s32.totalorder %s28, 1
      %p256 = por %p254, %p255
      %p257 = scmp.ne.s32.totalorder %s248, %s249
      %p258 = scmp.eq.s32.totalorder %s28, 0
      %p259 = por %p257, %p258
      %p260 = scmp.ne.s32.totalorder %s248, %s249
      %p261 = scmp.eq.s32.totalorder %s29, 1
      %p262 = por %p260, %p261
      %p264 = scmp.ne.s32.totalorder %s249, %s263
      %p265 = scmp.eq.s32.totalorder %s29, 0
      %p266 = por %p264, %p265
      %s268 = sadd.s32 %s267, 1
      %p271 = scmp.eq.s32.totalorder %s23, 1
      %p272 = scmp.ne.s32.totalorder %s267, %s269
      %p273 = scmp.eq.s32.totalorder %s23, 0
      %p274 = por %p272, %p273
      %p275 = scmp.ne.s32.totalorder %s267, %s269
      %p276 = scmp.eq.s32.totalorder %s28, 1
      %p277 = por %p275, %p276
      %p278 = scmp.ne.s32.totalorder %s269, %s270
      %p279 = scmp.eq.s32.totalorder %s28, 0
      %p280 = por %p278, %p279
      %p281 = scmp.ne.s32.totalorder %s269, %s270
      %p282 = scmp.eq.s32.totalorder %s29, 1
      %p283 = por %p281, %p282
      %p285 = scmp.ne.s32.totalorder %s270, %s284
      %p286 = scmp.eq.s32.totalorder %s29, 0
      %p287 = por %p285, %p286
      %s289 = sadd.s32 %s288, 1
      %p292 = scmp.eq.s32.totalorder %s23, 1
      %p293 = scmp.ne.s32.totalorder %s288, %s290
      %p294 = scmp.eq.s32.totalorder %s23, 0
      %p295 = por %p293, %p294
      %p296 = scmp.ne.s32.totalorder %s288, %s290
      %p297 = scmp.eq.s32.totalorder %s28, 1
      %p298 = por %p296, %p297
      %p299 = scmp.ne.s32.totalorder %s290, %s291
      %p300 = scmp.eq.s32.totalorder %s28, 0
      %p301 = por %p299, %p300
      %p302 = scmp.ne.s32.totalorder %s290, %s291
      %p303 = scmp.eq.s32.totalorder %s29, 1
      %p304 = por %p302, %p303
      %p306 = scmp.ne.s32.totalorder %s291, %s305
      %p307 = scmp.eq.s32.totalorder %s29, 0
      %p308 = por %p306, %p307
      %s310 = sadd.s32 %s309, 1
      %p313 = scmp.eq.s32.totalorder %s23, 1
      %p314 = scmp.ne.s32.totalorder %s309, %s311
      %p315 = scmp.eq.s32.totalorder %s23, 0
      %p316 = por %p314, %p315
      %p317 = scmp.ne.s32.totalorder %s309, %s311
      %p318 = scmp.eq.s32.totalorder %s28, 1
      %p319 = por %p317, %p318
      %p320 = scmp.ne.s32.totalorder %s311, %s312
      %p321 = scmp.eq.s32.totalorder %s28, 0
      %p322 = por %p320, %p321
      %p323 = scmp.ne.s32.totalorder %s311, %s312
      %p324 = scmp.eq.s32.totalorder %s29, 1
      %p325 = por %p323, %p324
      %p327 = scmp.ne.s32.totalorder %s312, %s326
      %p328 = scmp.eq.s32.totalorder %s29, 0
      %p329 = por %p327, %p328
      %s330 = ssub.s32 %s23, %s30
      %p331 = scmp.eq.s32.totalorder %s330, 0
      %s333 = sadd.s32 %s332, 1
      %s334 = scalar_select %p331, %s332, %s333
      %p337 = pneg %p331
      %p338 = scmp.eq.s32.totalorder %s23, 1
      %p339 = por %p337, %p338
      %p340 = scmp.ne.s32.totalorder %s332, %s335
      %p341 = scmp.eq.s32.totalorder %s23, 0
      %p342 = por %p340, %p341
      %p343 = scmp.ne.s32.totalorder %s332, %s335
      %p344 = scmp.eq.s32.totalorder %s28, 1
      %p345 = por %p343, %p344
      %p346 = scmp.ne.s32.totalorder %s335, %s336
      %p347 = scmp.eq.s32.totalorder %s28, 0
      %p348 = por %p346, %p347
      %p349 = scmp.ne.s32.totalorder %s335, %s336
      %p350 = scmp.eq.s32.totalorder %s29, 1
      %p351 = por %p349, %p350
      %p353 = scmp.ne.s32.totalorder %s336, %s352
      %p354 = scmp.eq.s32.totalorder %s29, 0
      %p355 = por %p353, %p354
      %p356 = scmp.le.s32.totalorder 1, %s23
      %p357 = scmp.lt.s32.totalorder %s23, 3
      %p358 = pnand %p356, %p357
      %p359 = pneg %p358
      // Predicated region
      $region9: #{_vit_forward.1} parent=5 // pred_check
        _
      $region10: #{_vit_forward.1} parent=5 // pred_check_branch
        %361 = sbr.rel (%p358) target = $region12
      $region11: #{_vit_forward.1} parent=5 // pred_region
        %s362 = ssub.s32 %s23, 1
        // Predicated region
        $region13: #{_vit_forward.1} parent=11 // pred_check
          %p363 = pneg %p70
        $region14: #{_vit_forward.1} parent=11 // pred_check_branch
          %365 = sbr.rel (%p363) target = $region16
        $region15: #{_vit_forward.1} parent=11 // pred_region
          _
        $region16: #{_vit_forward.1} parent=11 // pred_fallthru
          _
        // Predicated region
        $region17: #{_vit_forward.1} parent=11 // pred_check
          %p366 = pneg %p91
        $region18: #{_vit_forward.1} parent=11 // pred_check_branch
          %368 = sbr.rel (%p366) target = $region20
        $region19: #{_vit_forward.1} parent=11 // pred_region
          _
        $region20: #{_vit_forward.1} parent=11 // pred_fallthru
          _
        // Predicated region
        $region21: #{_vit_forward.1} parent=11 // pred_check
          %p369 = pneg %p112
        $region22: #{_vit_forward.1} parent=11 // pred_check_branch
          %371 = sbr.rel (%p369) target = $region24
        $region23: #{_vit_forward.1} parent=11 // pred_region
          _
        $region24: #{_vit_forward.1} parent=11 // pred_fallthru
          _
        // Predicated region
        $region25: #{_vit_forward.1} parent=11 // pred_check
          %p372 = pneg %p133
        $region26: #{_vit_forward.1} parent=11 // pred_check_branch
          %374 = sbr.rel (%p372) target = $region28
        $region27: #{_vit_forward.1} parent=11 // pred_region
          _
        $region28: #{_vit_forward.1} parent=11 // pred_fallthru
          _
        // Predicated region
        $region29: #{_vit_forward.1} parent=11 // pred_check
          %p375 = pneg %p154
        $region30: #{_vit_forward.1} parent=11 // pred_check_branch
          %377 = sbr.rel (%p375) target = $region32
        $region31: #{_vit_forward.1} parent=11 // pred_region
          _
        $region32: #{_vit_forward.1} parent=11 // pred_fallthru
          _
        // Predicated region
        $region33: #{_vit_forward.1} parent=11 // pred_check
          %p378 = pneg %p175
        $region34: #{_vit_forward.1} parent=11 // pred_check_branch
          %380 = sbr.rel (%p378) target = $region36
        $region35: #{_vit_forward.1} parent=11 // pred_region
          _
        $region36: #{_vit_forward.1} parent=11 // pred_fallthru
          _
        // Predicated region
        $region37: #{_vit_forward.1} parent=11 // pred_check
          %p381 = pneg %p196
        $region38: #{_vit_forward.1} parent=11 // pred_check_branch
          %383 = sbr.rel (%p381) target = $region40
        $region39: #{_vit_forward.1} parent=11 // pred_region
          _
        $region40: #{_vit_forward.1} parent=11 // pred_fallthru
          _
        // Predicated region
        $region41: #{_vit_forward.1} parent=11 // pred_check
          %p384 = pneg %p217
        $region42: #{_vit_forward.1} parent=11 // pred_check_branch
          %386 = sbr.rel (%p384) target = $region44
        $region43: #{_vit_forward.1} parent=11 // pred_region
          _
        $region44: #{_vit_forward.1} parent=11 // pred_fallthru
          _
        // Predicated region
        $region45: #{_vit_forward.1} parent=11 // pred_check
          %p387 = pneg %p238
        $region46: #{_vit_forward.1} parent=11 // pred_check_branch
          %389 = sbr.rel (%p387) target = $region48
        $region47: #{_vit_forward.1} parent=11 // pred_region
          _
        $region48: #{_vit_forward.1} parent=11 // pred_fallthru
          _
        // Predicated region
        $region49: #{_vit_forward.1} parent=11 // pred_check
          %p390 = pneg %p259
        $region50: #{_vit_forward.1} parent=11 // pred_check_branch
          %392 = sbr.rel (%p390) target = $region52
        $region51: #{_vit_forward.1} parent=11 // pred_region
          _
        $region52: #{_vit_forward.1} parent=11 // pred_fallthru
          _
        // Predicated region
        $region53: #{_vit_forward.1} parent=11 // pred_check
          %p393 = pneg %p280
        $region54: #{_vit_forward.1} parent=11 // pred_check_branch
          %395 = sbr.rel (%p393) target = $region56
        $region55: #{_vit_forward.1} parent=11 // pred_region
          _
        $region56: #{_vit_forward.1} parent=11 // pred_fallthru
          _
        // Predicated region
        $region57: #{_vit_forward.1} parent=11 // pred_check
          %p396 = pneg %p301
        $region58: #{_vit_forward.1} parent=11 // pred_check_branch
          %398 = sbr.rel (%p396) target = $region60
        $region59: #{_vit_forward.1} parent=11 // pred_region
          _
        $region60: #{_vit_forward.1} parent=11 // pred_fallthru
          _
        // Predicated region
        $region61: #{_vit_forward.1} parent=11 // pred_check
          %p399 = pneg %p322
        $region62: #{_vit_forward.1} parent=11 // pred_check_branch
          %401 = sbr.rel (%p399) target = $region64
        $region63: #{_vit_forward.1} parent=11 // pred_region
          _
        $region64: #{_vit_forward.1} parent=11 // pred_fallthru
          _
      $region12: #{_vit_forward.1} parent=5 // pred_fallthru
        _
      %p402 = scmp.lt.s32.totalorder %s23, 2
      // Predicated region
      $region65: #{_vit_forward.1} parent=5 // pred_check
        %p403 = pneg %p402
      $region66: #{_vit_forward.1} parent=5 // pred_check_branch
        %405 = sbr.rel (%p403) target = $region68
      $region67: #{_vit_forward.1} parent=5 // pred_region
        // Predicated region
        $region69: #{_vit_forward.1} parent=67 // pred_check
          %p406 = pneg %p43
        $region70: #{_vit_forward.1} parent=67 // pred_check_branch
          %408 = sbr.rel (%p406) target = $region72
        $region71: #{_vit_forward.1} parent=67 // pred_region
          %p409 = scmp.lt.s32.totalorder %s23, 1
          %s410 = scalar_select %p409, %s23, 1
          %s411 = smul.addr %s410, 9
          %s412 = smul.addr %s411, 4
          %s413 = scalar_lea.vmem %s0, %s412
        $region72: #{_vit_forward.1} parent=67 // pred_fallthru
          _
      $region68: #{_vit_forward.1} parent=5 // pred_fallthru
        _
      %p414 = scmp.le.s32.totalorder 1, %s23
      %p415 = scmp.lt.s32.totalorder %s23, 3
      %p416 = pnand %p414, %p415
      %p417 = pneg %p416
      // Predicated region
      $region73: #{_vit_forward.1} parent=5 // pred_check
        _
      $region74: #{_vit_forward.1} parent=5 // pred_check_branch
        %419 = sbr.rel (%p416) target = $region76
      $region75: #{_vit_forward.1} parent=5 // pred_region
        %s420 = ssub.s32 %s23, 1
        %p421 = scmp.lt.s32.totalorder %s28, 1
        %s422 = scalar_select %p421, %s28, 1
        %s423 = smul.addr %s422, 9
        %s424 = smul.addr %s423, 4
        %s425 = scalar_lea.vmem %s0, %s424
        %p426 = pneg %p49
        %p427 = pneg %p46
        %p428 = pneg %p70
        %p429 = pneg %p67
        %p430 = pneg %p91
        %p431 = pneg %p88
        %p432 = pneg %p112
        %p433 = pneg %p109
        %p434 = pneg %p133
        %p435 = pneg %p130
        %p436 = pneg %p154
        %p437 = pneg %p151
        %p438 = pneg %p175
        %p439 = pneg %p172
        %p440 = pneg %p196
        %p441 = pneg %p193
        %p442 = pneg %p217
        %p443 = pneg %p214
        %p444 = pneg %p238
        %p445 = pneg %p235
        %p446 = pneg %p259
        %p447 = pneg %p256
        %p448 = pneg %p280
        %p449 = pneg %p277
        %p450 = pneg %p301
        %p451 = pneg %p298
        %p452 = pneg %p322
        %p453 = pneg %p319
        %p454 = pneg %p348
        %p455 = pneg %p345
        %s456 = sand.u32 %s335, 1
        %s457 = scalar_lea.sflag [#allocation3], %s456
        %s458 = sand.u32 %s335, 1
        %s459 = scalar_lea.vmem [#allocation2], %s458
        %p460 = scmp.lt.s32.totalorder %s28, 1
        %s461 = scalar_select %p460, %s28, 1
        %s462 = smul.addr %s461, 9
        %s463 = smul.addr %s462, 4
        %s464 = scalar_lea.vmem %s0, %s463
        %v466 = vld [vmem:[%s464] sm:$0xf]
        %v467 = vld [vmem:[%s464 + $0x4] sm:$0xf]
        %v468 = vld [vmem:[%s464 + $0x8] sm:$0xf]
        %v469 = vld [vmem:[%s464 + $0xc] sm:$0xf]
        %v470 = vld [vmem:[%s464 + $0x10] sm:$0xf]
        %v471 = vld [vmem:[%s464 + $0x14] sm:$0xf]
        %v472 = vld [vmem:[%s464 + $0x18] sm:$0xf]
        %v473 = vld [vmem:[%s464 + $0x1c] sm:$0xf]
        %v474 = vld [vmem:[%s464 + $0x20] sm:$0xf]
        %v475 = vld [vmem:[%s3] sm:$0xf]
        %v476 = vld [vmem:[%s3 + $0x4] sm:$0xf]
        %v477 = vld [vmem:[%s3 + $0x8] sm:$0xf]
        %v478 = vld [vmem:[%s3 + $0xc] sm:$0xf]
        %v479 = vld [vmem:[%s3 + $0x10] sm:$0xf]
        %v480 = vld [vmem:[%s3 + $0x14] sm:$0xf]
        %v490 = vunpack.c.l.b16 %v466
        %v491 = vunpack.c.l.b16 %v467
        %v492 = vunpack.c.l.b16 %v468
        %v493 = vunpack.c.l.b16 %v469
        %v494 = vunpack.c.l.b16 %v470
        %v495 = vunpack.c.l.b16 %v471
        %v496 = vunpack.c.l.b16 %v472
        %v497 = vunpack.c.l.b16 %v473
        %v498 = vunpack.c.l.b16 %v474
        %v499 = vpack.c.b16 %v491, %v490
        %v500 = vpack.c.b16 %v493, %v492
        %v501 = vpack.c.b16 %v495, %v494
        %v502 = vpack.c.b16 %v497, %v496
        %v503 = vpack.c.b16 %v498, %v498
        %v510 = vunpack.c.l.b16 %v475
        %v511 = vunpack.c.l.b16 %v476
        %v512 = vunpack.c.l.b16 %v477
        %v513 = vunpack.c.l.b16 %v478
        %v514 = vunpack.c.l.b16 %v479
        %v515 = vunpack.c.l.b16 %v480
        %v516 = vpack.c.b16 %v511, %v510
        %v517 = vpack.c.b16 %v513, %v512
        %v518 = vpack.c.b16 %v515, %v514
        %vm522 = vcmask 392192
        %v524 = vsel %vm522, %v499, 0
        %v527 = vsel %vm522, %v500, 0
        %v530 = vsel %vm522, %v501, 0
        %v533 = vsel %vm522, %v502, 0
        %v536 = vsel %vm522, %v503, 0
        %538 = vmatprep.subr.bf16.mxu0 0
        %539 = vmatpush1.bf16.msra.mxu0 0
        %540 = vmatprep.subr.bf16.mxu0 0
        %541 = vmatpush1.bf16.msra.mxu0 0
        %542 = vmatprep.subr.bf16.mxu0 0
        %543 = vmatpush1.bf16.msra.mxu0 0
        %544 = vmatprep.subr.bf16.mxu0 0
        %545 = vmatpush1.bf16.msra.mxu0 0
        %546 = vmatprep.subr.bf16.mxu0 0
        %547 = vmatpush1.bf16.msra.mxu0 0
        %548 = vmatprep.subr.bf16.mxu0 0
        %549 = vmatpush1.bf16.msra.mxu0 %v518
        %550 = vmatprep.subr.bf16.mxu0 0
        %551 = vmatpush1.bf16.msra.mxu0 %v517
        %552 = vmatprep.subr.bf16.mxu0 0
        %553 = vmatpush1.bf16.msra.mxu0 %v516
        %554 = vmatprep.subr.bf16.mxu0 0
        %555 = vmatpush2.bf16.msra.mxu0 0
        %556 = vmatprep.subr.bf16.mxu0 0
        %557 = vmatpush2.bf16.msra.mxu0 0
        %558 = vmatprep.subr.bf16.mxu0 0
        %559 = vmatpush2.bf16.msra.mxu0 0
        %560 = vmatprep.subr.bf16.mxu0 0
        %561 = vmatpush2.bf16.msra.mxu0 0
        %562 = vmatprep.subr.bf16.mxu0 0
        %563 = vmatpush2.bf16.msra.mxu0 0
        %564 = vmatprep.subr.bf16.mxu0 0
        %565 = vmatpush2.bf16.msra.mxu0 0
        %566 = vmatprep.subr.bf16.mxu0 0
        %567 = vmatpush2.bf16.msra.mxu0 0
        %568 = vmatprep.subr.bf16.mxu0 0
        %569 = vmatpush2.bf16.msra.mxu0 0
        %570 = vmatprep.mubr.bf16.mxu0 0
        %571 = vmatmul.mubr.bf16.gmra.mxu0 %v524
        %v572 = vpop.f32.mrf.mxu0
        %v573 = vadd.f32 0.0, %v572
        %v574 = vpop.f32.mrf.mxu0
        %v575 = vpop.f32.mrf.mxu0
        %v576 = vadd.f32 0.0, %v575
        %v577 = vpop.f32.mrf.mxu0
        %578 = vmatprep.mubr.bf16.mxu0 0
        %579 = vmatmul.mubr.bf16.gmra.mxu0 %v527
        %v580 = vpop.f32.mrf.mxu0
        %v581 = vadd.f32 0.0, %v580
        %v582 = vpop.f32.mrf.mxu0
        %v583 = vpop.f32.mrf.mxu0
        %v584 = vadd.f32 0.0, %v583
        %v585 = vpop.f32.mrf.mxu0
        %586 = vmatprep.mubr.bf16.mxu0 0
        %587 = vmatmul.mubr.bf16.gmra.mxu0 %v530
        %v588 = vpop.f32.mrf.mxu0
        %v589 = vadd.f32 0.0, %v588
        %v590 = vpop.f32.mrf.mxu0
        %v591 = vpop.f32.mrf.mxu0
        %v592 = vadd.f32 0.0, %v591
        %v593 = vpop.f32.mrf.mxu0
        %594 = vmatprep.mubr.bf16.mxu0 0
        %595 = vmatmul.mubr.bf16.gmra.mxu0 %v533
        %v596 = vpop.f32.mrf.mxu0
        %v597 = vadd.f32 0.0, %v596
        %v598 = vpop.f32.mrf.mxu0
        %v599 = vpop.f32.mrf.mxu0
        %v600 = vadd.f32 0.0, %v599
        %v601 = vpop.f32.mrf.mxu0
        %602 = vmatprep.mubr.bf16.mxu0 0
        %603 = vmatmul.mubr.bf16.gmra.mxu0 %v536
        %v604 = vpop.f32.mrf.mxu0
        %v605 = vadd.f32 0.0, %v604
        %v606 = vpop.f32.mrf.mxu0
        %v607 = vpop.f32.mrf.mxu0
        %v608 = vpop.f32.mrf.mxu0
        %609 = vdwg.mxu0
        %v610 = vld [vmem:[%s1] sm:$0xff]
        %v611 = vld [vmem:[%s1 + $0x8] sm:$0xff]
        %v612 = vld [vmem:[%s1 + $0x10] sm:$0xff]
        %v613 = vld [vmem:[%s1 + $0x18] sm:$0xff]
        %v614 = vld [vmem:[%s1 + $0x20] sm:$0xff]
        %v615 = vld [vmem:[%s1 + $0x28] sm:$0xff]
        %v616 = vld [vmem:[%s1 + $0x30] sm:$0xff]
        %v617 = vld [vmem:[%s1 + $0x38] sm:$0xff]
        %v618 = vld [vmem:[%s1 + $0x40] sm:$0xff]
        %v619 = vadd.f32 %v573, %v610
        %v620 = vadd.f32 %v576, %v611
        %v621 = vadd.f32 %v581, %v612
        %v622 = vadd.f32 %v584, %v613
        %v623 = vadd.f32 %v589, %v614
        %v624 = vadd.f32 %v592, %v615
        %v625 = vadd.f32 %v597, %v616
        %v626 = vadd.f32 %v600, %v617
        %v627 = vadd.f32 %v605, %v618
        %v628 = vld [vmem:[%s2] sm:$0xff]
        %v629 = vld [vmem:[%s2 + $0x8] sm:$0xff]
        %v630 = vld [vmem:[%s2 + $0x10] sm:$0xff]
        %v631 = vld [vmem:[%s2 + $0x18] sm:$0xff]
        %v632 = vld [vmem:[%s2 + $0x20] sm:$0xff]
        %v633 = vld [vmem:[%s2 + $0x28] sm:$0xff]
        %v634 = vld [vmem:[%s2 + $0x30] sm:$0xff]
        %v635 = vld [vmem:[%s2 + $0x38] sm:$0xff]
        %v636 = vld [vmem:[%s2 + $0x40] sm:$0xff]
        %vm637 = vcmask 130048
        %v638 = vsel %vm637, %v619, 0.0
        %639 = vadd.xlane.f32.xlu0 %v638
        %v640 = vpop.xlane.xlu0 %639
        %v641 = vsel %vm637, %v620, 0.0
        %642 = vadd.xlane.f32.xlu0 %v641
        %v643 = vpop.xlane.xlu0 %642
        %v644 = vsel %vm637, %v621, 0.0
        %645 = vadd.xlane.f32.xlu0 %v644
        %v646 = vpop.xlane.xlu0 %645
        %v647 = vsel %vm637, %v622, 0.0
        %648 = vadd.xlane.f32.xlu0 %v647
        %v649 = vpop.xlane.xlu0 %648
        %v650 = vsel %vm637, %v623, 0.0
        %651 = vadd.xlane.f32.xlu0 %v650
        %v652 = vpop.xlane.xlu0 %651
        %v653 = vsel %vm637, %v624, 0.0
        %654 = vadd.xlane.f32.xlu0 %v653
        %v655 = vpop.xlane.xlu0 %654
        %v656 = vsel %vm637, %v625, 0.0
        %657 = vadd.xlane.f32.xlu0 %v656
        %v658 = vpop.xlane.xlu0 %657
        %v659 = vsel %vm637, %v626, 0.0
        %660 = vadd.xlane.f32.xlu0 %v659
        %v661 = vpop.xlane.xlu0 %660
        %v662 = vsel %vm637, %v627, 0.0
        %663 = vadd.xlane.f32.xlu0 %v662
        %v664 = vpop.xlane.xlu0 %663
        %v665 = vrcp.pop 16.0
        %v666 = vmul.f32 %v640, %v665
        %v667 = vmul.f32 %v643, %v665
        %v668 = vmul.f32 %v646, %v665
        %v669 = vmul.f32 %v649, %v665
        %v670 = vmul.f32 %v652, %v665
        %v671 = vmul.f32 %v655, %v665
        %v672 = vmul.f32 %v658, %v665
        %v673 = vmul.f32 %v661, %v665
        %v674 = vmul.f32 %v664, %v665
        %v675 = vsub.f32 %v619, %v666
        %v676 = vsub.f32 %v620, %v667
        %v677 = vsub.f32 %v621, %v668
        %v678 = vsub.f32 %v622, %v669
        %v679 = vsub.f32 %v623, %v670
        %v680 = vsub.f32 %v624, %v671
        %v681 = vsub.f32 %v625, %v672
        %v682 = vsub.f32 %v626, %v673
        %v683 = vsub.f32 %v627, %v674
        %v684 = vmul.f32 %v675, %v675
        %v685 = vmul.f32 %v676, %v676
        %v686 = vmul.f32 %v677, %v677
        %v687 = vmul.f32 %v678, %v678
        %v688 = vmul.f32 %v679, %v679
        %v689 = vmul.f32 %v680, %v680
        %v690 = vmul.f32 %v681, %v681
        %v691 = vmul.f32 %v682, %v682
        %v692 = vmul.f32 %v683, %v683
        %v693 = vsel %vm637, %v684, 0.0
        %694 = vadd.xlane.f32.xlu0 %v693
        %v695 = vpop.xlane.xlu0 %694
        %v696 = vsel %vm637, %v685, 0.0
        %697 = vadd.xlane.f32.xlu0 %v696
        %v698 = vpop.xlane.xlu0 %697
        %v699 = vsel %vm637, %v686, 0.0
        %700 = vadd.xlane.f32.xlu0 %v699
        %v701 = vpop.xlane.xlu0 %700
        %v702 = vsel %vm637, %v687, 0.0
        %703 = vadd.xlane.f32.xlu0 %v702
        %v704 = vpop.xlane.xlu0 %703
        %v705 = vsel %vm637, %v688, 0.0
        %706 = vadd.xlane.f32.xlu0 %v705
        %v707 = vpop.xlane.xlu0 %706
        %v708 = vsel %vm637, %v689, 0.0
        %709 = vadd.xlane.f32.xlu0 %v708
        %v710 = vpop.xlane.xlu0 %709
        %v711 = vsel %vm637, %v690, 0.0
        %712 = vadd.xlane.f32.xlu0 %v711
        %v713 = vpop.xlane.xlu0 %712
        %v714 = vsel %vm637, %v691, 0.0
        %715 = vadd.xlane.f32.xlu0 %v714
        %v716 = vpop.xlane.xlu0 %715
        %v717 = vsel %vm637, %v692, 0.0
        %718 = vadd.xlane.f32.xlu0 %v717
        %v719 = vpop.xlane.xlu0 %718
        %v720 = vmul.f32 %v695, %v665
        %v721 = vmul.f32 %v698, %v665
        %v722 = vmul.f32 %v701, %v665
        %v723 = vmul.f32 %v704, %v665
        %v724 = vmul.f32 %v707, %v665
        %v725 = vmul.f32 %v710, %v665
        %v726 = vmul.f32 %v713, %v665
        %v727 = vmul.f32 %v716, %v665
        %v728 = vmul.f32 %v719, %v665
        %v729 = vadd.f32 %v720, 1e-06
        %v730 = vadd.f32 %v721, 1e-06
        %v731 = vadd.f32 %v722, 1e-06
        %v732 = vadd.f32 %v723, 1e-06
        %v733 = vadd.f32 %v724, 1e-06
        %v734 = vadd.f32 %v725, 1e-06
        %v735 = vadd.f32 %v726, 1e-06
        %v736 = vadd.f32 %v727, 1e-06
        %v737 = vadd.f32 %v728, 1e-06
        %v738 = vrsqrt.pop %v729
        %v739 = vrsqrt.pop %v730
        %v740 = vrsqrt.pop %v731
        %v741 = vrsqrt.pop %v732
        %v742 = vrsqrt.pop %v733
        %v743 = vrsqrt.pop %v734
        %v744 = vrsqrt.pop %v735
        %v745 = vrsqrt.pop %v736
        %v746 = vrsqrt.pop %v737
        %v747 = vmul.f32 %v675, %v738
        %v748 = vmul.f32 %v676, %v739
        %v749 = vmul.f32 %v677, %v740
        %v750 = vmul.f32 %v678, %v741
        %v751 = vmul.f32 %v679, %v742
        %v752 = vmul.f32 %v680, %v743
        %v753 = vmul.f32 %v681, %v744
        %v754 = vmul.f32 %v682, %v745
        %v755 = vmul.f32 %v683, %v746
        %v756 = vld [vmem:[%s4] sm:$0x1]
        %v758 = vlaneseq
        %v759 = vshrl.u32 %v758, 7
        %v760 = vsub.s32 0, %v759
        %v761 = vrot.slane %v756, %v760
        %v763 = vmul.f32 %v747, %v761
        %v764 = vmul.f32 %v748, %v761
        %v765 = vmul.f32 %v749, %v761
        %v766 = vmul.f32 %v750, %v761
        %v767 = vmul.f32 %v751, %v761
        %v768 = vmul.f32 %v752, %v761
        %v769 = vmul.f32 %v753, %v761
        %v770 = vmul.f32 %v754, %v761
        %v771 = vmul.f32 %v755, %v761
        %s772 = scalar_lea.vmem %s4, 5
        %v773 = vld [vmem:[%s772] sm:$0x1]
        %v775 = vlaneseq
        %v776 = vshrl.u32 %v775, 7
        %v777 = vsub.s32 0, %v776
        %v778 = vrot.slane %v773, %v777
        %v780 = vadd.f32 %v763, %v778
        %v781 = vadd.f32 %v764, %v778
        %v782 = vadd.f32 %v765, %v778
        %v783 = vadd.f32 %v766, %v778
        %v784 = vadd.f32 %v767, %v778
        %v785 = vadd.f32 %v768, %v778
        %v786 = vadd.f32 %v769, %v778
        %v787 = vadd.f32 %v770, %v778
        %v788 = vadd.f32 %v771, %v778
        %v789 = vpack.c.bf16 %v781, %v780
        %v790 = vpack.c.bf16 %v783, %v782
        %v791 = vpack.c.bf16 %v785, %v784
        %v792 = vpack.c.bf16 %v787, %v786
        %v793 = vpack.c.bf16 %v788, %v788
        %v794 = vld [vmem:[%s5] sm:$0xf]
        %v795 = vld [vmem:[%s5 + $0x4] sm:$0xf]
        %v796 = vld [vmem:[%s6] sm:$0x1]
        %v798 = vlaneseq
        %v799 = vshrl.u32 %v798, 7
        %v800 = vsub.s32 0, %v799
        %v801 = vrot.slane %v796, %v800
        %v805 = vunpack.c.l.b16 %v794
        %v806 = vunpack.c.l.b16 %v795
        %v807 = vpack.c.b16 %v806, %v805
        %v810 = vsel %vm637, %v789, 0
        %v813 = vsel %vm637, %v790, 0
        %v816 = vsel %vm637, %v791, 0
        %v819 = vsel %vm637, %v792, 0
        %v822 = vsel %vm637, %v793, 0
        %824 = vmatprep.subr.bf16.mxu0 0
        %825 = vmatpush1.bf16.msra.mxu0 0
        %826 = vmatprep.subr.bf16.mxu0 0
        %827 = vmatpush1.bf16.msra.mxu0 0
        %828 = vmatprep.subr.bf16.mxu0 0
        %829 = vmatpush1.bf16.msra.mxu0 0
        %830 = vmatprep.subr.bf16.mxu0 0
        %831 = vmatpush1.bf16.msra.mxu0 0
        %832 = vmatprep.subr.bf16.mxu0 0
        %833 = vmatpush1.bf16.msra.mxu0 0
        %834 = vmatprep.subr.bf16.mxu0 0
        %835 = vmatpush1.bf16.msra.mxu0 0
        %836 = vmatprep.subr.bf16.mxu0 0
        %837 = vmatpush1.bf16.msra.mxu0 0
        %838 = vmatprep.subr.bf16.mxu0 0
        %839 = vmatpush1.bf16.msra.mxu0 %v807
        %840 = vmatprep.subr.bf16.mxu0 0
        %841 = vmatpush2.bf16.msra.mxu0 0
        %842 = vmatprep.subr.bf16.mxu0 0
        %843 = vmatpush2.bf16.msra.mxu0 0
        %844 = vmatprep.subr.bf16.mxu0 0
        %845 = vmatpush2.bf16.msra.mxu0 0
        %846 = vmatprep.subr.bf16.mxu0 0
        %847 = vmatpush2.bf16.msra.mxu0 0
        %848 = vmatprep.subr.bf16.mxu0 0
        %849 = vmatpush2.bf16.msra.mxu0 0
        %850 = vmatprep.subr.bf16.mxu0 0
        %851 = vmatpush2.bf16.msra.mxu0 0
        %852 = vmatprep.subr.bf16.mxu0 0
        %853 = vmatpush2.bf16.msra.mxu0 0
        %854 = vmatprep.subr.bf16.mxu0 0
        %855 = vmatpush2.bf16.msra.mxu0 0
        %856 = vmatprep.mubr.bf16.mxu0 0
        %857 = vmatmul.mubr.bf16.gmra.mxu0 %v810
        %v858 = vpop.f32.mrf.mxu0
        %v859 = vadd.f32 %v801, %v858
        %v860 = vpop.f32.mrf.mxu0
        %v861 = vpop.f32.mrf.mxu0
        %v862 = vadd.f32 %v801, %v861
        %v863 = vpop.f32.mrf.mxu0
        %864 = vmatprep.mubr.bf16.mxu0 0
        %865 = vmatmul.mubr.bf16.gmra.mxu0 %v813
        %v866 = vpop.f32.mrf.mxu0
        %v867 = vadd.f32 %v801, %v866
        %v868 = vpop.f32.mrf.mxu0
        %v869 = vpop.f32.mrf.mxu0
        %v870 = vadd.f32 %v801, %v869
        %v871 = vpop.f32.mrf.mxu0
        %872 = vmatprep.mubr.bf16.mxu0 0
        %873 = vmatmul.mubr.bf16.gmra.mxu0 %v816
        %v874 = vpop.f32.mrf.mxu0
        %v875 = vadd.f32 %v801, %v874
        %v876 = vpop.f32.mrf.mxu0
        %v877 = vpop.f32.mrf.mxu0
        %v878 = vadd.f32 %v801, %v877
        %v879 = vpop.f32.mrf.mxu0
        %880 = vmatprep.mubr.bf16.mxu0 0
        %881 = vmatmul.mubr.bf16.gmra.mxu0 %v819
        %v882 = vpop.f32.mrf.mxu0
        %v883 = vadd.f32 %v801, %v882
        %v884 = vpop.f32.mrf.mxu0
        %v885 = vpop.f32.mrf.mxu0
        %v886 = vadd.f32 %v801, %v885
        %v887 = vpop.f32.mrf.mxu0
        %888 = vmatprep.mubr.bf16.mxu0 0
        %889 = vmatmul.mubr.bf16.gmra.mxu0 %v822
        %v890 = vpop.f32.mrf.mxu0
        %v891 = vadd.f32 %v801, %v890
        %v892 = vpop.f32.mrf.mxu0
        %v893 = vpop.f32.mrf.mxu0
        %v894 = vpop.f32.mrf.mxu0
        %895 = vdwg.mxu0
        %v896 = vpack.c.bf16 %v862, %v859
        %v897 = vpack.c.bf16 %v870, %v867
        %v898 = vpack.c.bf16 %v878, %v875
        %v899 = vpack.c.bf16 %v886, %v883
        %v900 = vpack.c.bf16 %v891, %v891
        %906 = vrot.lane.b32.xlu0 %v896, 112
        %v907 = vpop.permute.xlu0 %906
        %908 = vrot.lane.b32.xlu0 %v897, 112
        %v909 = vpop.permute.xlu0 %908
        %910 = vrot.lane.b32.xlu0 %v898, 112
        %v911 = vpop.permute.xlu0 %910
        %912 = vrot.lane.b32.xlu0 %v899, 112
        %v913 = vpop.permute.xlu0 %912
        %914 = vrot.lane.b32.xlu0 %v900, 112
        %v915 = vpop.permute.xlu0 %914
        %vm916 = vcmask 64512
        %v918 = vsel %vm916, %v896, 0
        %v921 = vsel %vm916, %v897, 0
        %v924 = vsel %vm916, %v898, 0
        %v927 = vsel %vm916, %v899, 0
        %v930 = vsel %vm916, %v900, 0
        %v933 = vsel %vm916, %v907, 0
        %v936 = vsel %vm916, %v909, 0
        %v939 = vsel %vm916, %v911, 0
        %v942 = vsel %vm916, %v913, 0
        %v945 = vsel %vm916, %v915, 0
        %947 = vmatprep.subr.bf16.mxu0 0
        %948 = vmatpush1.bf16.xpose.msra.mxu0 0
        %949 = vmatprep.subr.bf16.mxu0 0
        %950 = vmatpush1.bf16.xpose.msra.mxu0 0
        %951 = vmatprep.subr.bf16.mxu0 0
        %952 = vmatpush1.bf16.xpose.msra.mxu0 0
        %953 = vmatprep.subr.bf16.mxu0 0
        %954 = vmatpush1.bf16.xpose.msra.mxu0 %v945
        %955 = vmatprep.subr.bf16.mxu0 0
        %956 = vmatpush1.bf16.xpose.msra.mxu0 %v942
        %957 = vmatprep.subr.bf16.mxu0 0
        %958 = vmatpush1.bf16.xpose.msra.mxu0 %v939
        %959 = vmatprep.subr.bf16.mxu0 0
        %960 = vmatpush1.bf16.xpose.msra.mxu0 %v936
        %961 = vmatprep.subr.bf16.mxu0 0
        %962 = vmatpush1.bf16.xpose.msra.mxu0 %v933
        %963 = vmatprep.subr.bf16.mxu0 0
        %964 = vmatpush2.bf16.xpose.msra.mxu0 0
        %965 = vmatprep.subr.bf16.mxu0 0
        %966 = vmatpush2.bf16.xpose.msra.mxu0 0
        %967 = vmatprep.subr.bf16.mxu0 0
        %968 = vmatpush2.bf16.xpose.msra.mxu0 0
        %969 = vmatprep.subr.bf16.mxu0 0
        %970 = vmatpush2.bf16.xpose.msra.mxu0 0
        %971 = vmatprep.subr.bf16.mxu0 0
        %972 = vmatpush2.bf16.xpose.msra.mxu0 0
        %973 = vmatprep.subr.bf16.mxu0 0
        %974 = vmatpush2.bf16.xpose.msra.mxu0 0
        %975 = vmatprep.subr.bf16.mxu0 0
        %976 = vmatpush2.bf16.xpose.msra.mxu0 0
        %977 = vmatprep.subr.bf16.mxu0 0
        %978 = vmatpush2.bf16.xpose.msra.mxu0 0
        %979 = vmatprep.mubr.bf16.mxu0 0
        %980 = vmatmul.mubr.bf16.gmra.mxu0 %v918
        %v981 = vpop.f32.mrf.mxu0
        %v982 = vadd.f32 %v628, %v981
        %v983 = vpop.f32.mrf.mxu0
        %v984 = vpop.f32.mrf.mxu0
        %v985 = vadd.f32 %v629, %v984
        %v986 = vpop.f32.mrf.mxu0
        %987 = vmatprep.mubr.bf16.mxu0 0
        %988 = vmatmul.mubr.bf16.gmra.mxu0 %v921
        %v989 = vpop.f32.mrf.mxu0
        %v990 = vadd.f32 %v630, %v989
        %v991 = vpop.f32.mrf.mxu0
        %v992 = vpop.f32.mrf.mxu0
        %v993 = vadd.f32 %v631, %v992
        %v994 = vpop.f32.mrf.mxu0
        %995 = vmatprep.mubr.bf16.mxu0 0
        %996 = vmatmul.mubr.bf16.gmra.mxu0 %v924
        %v997 = vpop.f32.mrf.mxu0
        %v998 = vadd.f32 %v632, %v997
        %v999 = vpop.f32.mrf.mxu0
        %v1000 = vpop.f32.mrf.mxu0
        %v1001 = vadd.f32 %v633, %v1000
        %v1002 = vpop.f32.mrf.mxu0
        %1003 = vmatprep.mubr.bf16.mxu0 0
        %1004 = vmatmul.mubr.bf16.gmra.mxu0 %v927
        %v1005 = vpop.f32.mrf.mxu0
        %v1006 = vadd.f32 %v634, %v1005
        %v1007 = vpop.f32.mrf.mxu0
        %v1008 = vpop.f32.mrf.mxu0
        %v1009 = vadd.f32 %v635, %v1008
        %v1010 = vpop.f32.mrf.mxu0
        %1011 = vmatprep.mubr.bf16.mxu0 0
        %1012 = vmatmul.mubr.bf16.gmra.mxu0 %v930
        %v1013 = vpop.f32.mrf.mxu0
        %v1014 = vadd.f32 %v636, %v1013
        %v1015 = vpop.f32.mrf.mxu0
        %v1016 = vpop.f32.mrf.mxu0
        %v1017 = vpop.f32.mrf.mxu0
        %1018 = vdwg.mxu0
        %vm1019 = vcmask 588800
        %v1020 = vsel %vm1019, %v982, -inf
        %1021 = vmax.xlane.f32.xlu0 %v1020
        %v1022 = vpop.xlane.xlu0 %1021
        %v1023 = vsel %vm1019, %v985, -inf
        %1024 = vmax.xlane.f32.xlu0 %v1023
        %v1025 = vpop.xlane.xlu0 %1024
        %v1026 = vsel %vm1019, %v990, -inf
        %1027 = vmax.xlane.f32.xlu0 %v1026
        %v1028 = vpop.xlane.xlu0 %1027
        %v1029 = vsel %vm1019, %v993, -inf
        %1030 = vmax.xlane.f32.xlu0 %v1029
        %v1031 = vpop.xlane.xlu0 %1030
        %v1032 = vsel %vm1019, %v998, -inf
        %1033 = vmax.xlane.f32.xlu0 %v1032
        %v1034 = vpop.xlane.xlu0 %1033
        %v1035 = vsel %vm1019, %v1001, -inf
        %1036 = vmax.xlane.f32.xlu0 %v1035
        %v1037 = vpop.xlane.xlu0 %1036
        %v1038 = vsel %vm1019, %v1006, -inf
        %1039 = vmax.xlane.f32.xlu0 %v1038
        %v1040 = vpop.xlane.xlu0 %1039
        %v1041 = vsel %vm1019, %v1009, -inf
        %1042 = vmax.xlane.f32.xlu0 %v1041
        %v1043 = vpop.xlane.xlu0 %1042
        %v1044 = vsel %vm1019, %v1014, -inf
        %1045 = vmax.xlane.f32.xlu0 %v1044
        %v1046 = vpop.xlane.xlu0 %1045
        %v1047 = vsub.f32 %v982, %v1022
        %v1048 = vsub.f32 %v985, %v1025
        %v1049 = vsub.f32 %v990, %v1028
        %v1050 = vsub.f32 %v993, %v1031
        %v1051 = vsub.f32 %v998, %v1034
        %v1052 = vsub.f32 %v1001, %v1037
        %v1053 = vsub.f32 %v1006, %v1040
        %v1054 = vsub.f32 %v1009, %v1043
        %v1055 = vsub.f32 %v1014, %v1046
        %v1056 = vmul.f32 %v1047, 1.442695
        %v1057 = vpow.pop %v1056
        %v1058 = vmul.f32 %v1048, 1.442695
        %v1059 = vpow.pop %v1058
        %v1060 = vmul.f32 %v1049, 1.442695
        %v1061 = vpow.pop %v1060
        %v1062 = vmul.f32 %v1050, 1.442695
        %v1063 = vpow.pop %v1062
        %v1064 = vmul.f32 %v1051, 1.442695
        %v1065 = vpow.pop %v1064
        %v1066 = vmul.f32 %v1052, 1.442695
        %v1067 = vpow.pop %v1066
        %v1068 = vmul.f32 %v1053, 1.442695
        %v1069 = vpow.pop %v1068
        %v1070 = vmul.f32 %v1054, 1.442695
        %v1071 = vpow.pop %v1070
        %v1072 = vmul.f32 %v1055, 1.442695
        %v1073 = vpow.pop %v1072
        %v1074 = vsel %vm1019, %v1057, 0.0
        %1075 = vadd.xlane.f32.xlu0 %v1074
        %v1076 = vpop.xlane.xlu0 %1075
        %v1077 = vsel %vm1019, %v1059, 0.0
        %1078 = vadd.xlane.f32.xlu0 %v1077
        %v1079 = vpop.xlane.xlu0 %1078
        %v1080 = vsel %vm1019, %v1061, 0.0
        %1081 = vadd.xlane.f32.xlu0 %v1080
        %v1082 = vpop.xlane.xlu0 %1081
        %v1083 = vsel %vm1019, %v1063, 0.0
        %1084 = vadd.xlane.f32.xlu0 %v1083
        %v1085 = vpop.xlane.xlu0 %1084
        %v1086 = vsel %vm1019, %v1065, 0.0
        %1087 = vadd.xlane.f32.xlu0 %v1086
        %v1088 = vpop.xlane.xlu0 %1087
        %v1089 = vsel %vm1019, %v1067, 0.0
        %1090 = vadd.xlane.f32.xlu0 %v1089
        %v1091 = vpop.xlane.xlu0 %1090
        %v1092 = vsel %vm1019, %v1069, 0.0
        %1093 = vadd.xlane.f32.xlu0 %v1092
        %v1094 = vpop.xlane.xlu0 %1093
        %v1095 = vsel %vm1019, %v1071, 0.0
        %1096 = vadd.xlane.f32.xlu0 %v1095
        %v1097 = vpop.xlane.xlu0 %1096
        %v1098 = vsel %vm1019, %v1073, 0.0
        %1099 = vadd.xlane.f32.xlu0 %v1098
        %v1100 = vpop.xlane.xlu0 %1099
        %v1101 = vrcp.pop %v1076
        %v1102 = vrcp.pop %v1079
        %v1103 = vrcp.pop %v1082
        %v1104 = vrcp.pop %v1085
        %v1105 = vrcp.pop %v1088
        %v1106 = vrcp.pop %v1091
        %v1107 = vrcp.pop %v1094
        %v1108 = vrcp.pop %v1097
        %v1109 = vrcp.pop %v1100
        %v1110 = vmul.f32 %v1057, %v1101
        %v1111 = vmul.f32 %v1059, %v1102
        %v1112 = vmul.f32 %v1061, %v1103
        %v1113 = vmul.f32 %v1063, %v1104
        %v1114 = vmul.f32 %v1065, %v1105
        %v1115 = vmul.f32 %v1067, %v1106
        %v1116 = vmul.f32 %v1069, %v1107
        %v1117 = vmul.f32 %v1071, %v1108
        %v1118 = vmul.f32 %v1073, %v1109
        %v1119 = vpack.c.bf16 %v1111, %v1110
        %v1120 = vpack.c.bf16 %v1113, %v1112
        %v1121 = vpack.c.bf16 %v1115, %v1114
        %v1122 = vpack.c.bf16 %v1117, %v1116
        %v1123 = vpack.c.bf16 %v1118, %v1118
        %1124 = vrot.lane.b32.xlu0 %v896, 120
        %v1125 = vpop.permute.xlu0 %1124
        %1126 = vrot.lane.b32.xlu0 %v897, 120
        %v1127 = vpop.permute.xlu0 %1126
        %1128 = vrot.lane.b32.xlu0 %v898, 120
        %v1129 = vpop.permute.xlu0 %1128
        %1130 = vrot.lane.b32.xlu0 %v899, 120
        %v1131 = vpop.permute.xlu0 %1130
        %1132 = vrot.lane.b32.xlu0 %v900, 120
        %v1133 = vpop.permute.xlu0 %1132
        %1134 = vrot.lane.b32.xlu0 %v896, 104
        %v1135 = vpop.permute.xlu0 %1134
        %1136 = vrot.lane.b32.xlu0 %v897, 104
        %v1137 = vpop.permute.xlu0 %1136
        %1138 = vrot.lane.b32.xlu0 %v898, 104
        %v1139 = vpop.permute.xlu0 %1138
        %1140 = vrot.lane.b32.xlu0 %v899, 104
        %v1141 = vpop.permute.xlu0 %1140
        %1142 = vrot.lane.b32.xlu0 %v900, 104
        %v1143 = vpop.permute.xlu0 %1142
        %v1145 = vsel %vm916, %v1125, 0
        %v1148 = vsel %vm916, %v1127, 0
        %v1151 = vsel %vm916, %v1129, 0
        %v1154 = vsel %vm916, %v1131, 0
        %v1157 = vsel %vm916, %v1133, 0
        %v1160 = vsel %vm916, %v1135, 0
        %v1163 = vsel %vm916, %v1137, 0
        %v1166 = vsel %vm916, %v1139, 0
        %v1169 = vsel %vm916, %v1141, 0
        %v1172 = vsel %vm916, %v1143, 0
        %1174 = vmatprep.subr.bf16.mxu0 0
        %1175 = vmatpush1.bf16.xpose.msra.mxu0 0
        %1176 = vmatprep.subr.bf16.mxu0 0
        %1177 = vmatpush1.bf16.xpose.msra.mxu0 0
        %1178 = vmatprep.subr.bf16.mxu0 0
        %1179 = vmatpush1.bf16.xpose.msra.mxu0 0
        %1180 = vmatprep.subr.bf16.mxu0 0
        %1181 = vmatpush1.bf16.xpose.msra.mxu0 %v1172
        %1182 = vmatprep.subr.bf16.mxu0 0
        %1183 = vmatpush1.bf16.xpose.msra.mxu0 %v1169
        %1184 = vmatprep.subr.bf16.mxu0 0
        %1185 = vmatpush1.bf16.xpose.msra.mxu0 %v1166
        %1186 = vmatprep.subr.bf16.mxu0 0
        %1187 = vmatpush1.bf16.xpose.msra.mxu0 %v1163
        %1188 = vmatprep.subr.bf16.mxu0 0
        %1189 = vmatpush1.bf16.xpose.msra.mxu0 %v1160
        %1190 = vmatprep.subr.bf16.mxu0 0
        %1191 = vmatpush2.bf16.xpose.msra.mxu0 0
        %1192 = vmatprep.subr.bf16.mxu0 0
        %1193 = vmatpush2.bf16.xpose.msra.mxu0 0
        %1194 = vmatprep.subr.bf16.mxu0 0
        %1195 = vmatpush2.bf16.xpose.msra.mxu0 0
        %1196 = vmatprep.subr.bf16.mxu0 0
        %1197 = vmatpush2.bf16.xpose.msra.mxu0 0
        %1198 = vmatprep.subr.bf16.mxu0 0
        %1199 = vmatpush2.bf16.xpose.msra.mxu0 0
        %1200 = vmatprep.subr.bf16.mxu0 0
        %1201 = vmatpush2.bf16.xpose.msra.mxu0 0
        %1202 = vmatprep.subr.bf16.mxu0 0
        %1203 = vmatpush2.bf16.xpose.msra.mxu0 0
        %1204 = vmatprep.subr.bf16.mxu0 0
        %1205 = vmatpush2.bf16.xpose.msra.mxu0 0
        %1206 = vmatprep.mubr.bf16.mxu0 0
        %1207 = vmatmul.mubr.bf16.gmra.mxu0 %v1145
        %v1208 = vpop.f32.mrf.mxu0
        %v1209 = vadd.f32 %v628, %v1208
        %v1210 = vpop.f32.mrf.mxu0
        %v1211 = vpop.f32.mrf.mxu0
        %v1212 = vadd.f32 %v629, %v1211
        %v1213 = vpop.f32.mrf.mxu0
        %1214 = vmatprep.mubr.bf16.mxu0 0
        %1215 = vmatmul.mubr.bf16.gmra.mxu0 %v1148
        %v1216 = vpop.f32.mrf.mxu0
        %v1217 = vadd.f32 %v630, %v1216
        %v1218 = vpop.f32.mrf.mxu0
        %v1219 = vpop.f32.mrf.mxu0
        %v1220 = vadd.f32 %v631, %v1219
        %v1221 = vpop.f32.mrf.mxu0
        %1222 = vmatprep.mubr.bf16.mxu0 0
        %1223 = vmatmul.mubr.bf16.gmra.mxu0 %v1151
        %v1224 = vpop.f32.mrf.mxu0
        %v1225 = vadd.f32 %v632, %v1224
        %v1226 = vpop.f32.mrf.mxu0
        %v1227 = vpop.f32.mrf.mxu0
        %v1228 = vadd.f32 %v633, %v1227
        %v1229 = vpop.f32.mrf.mxu0
        %1230 = vmatprep.mubr.bf16.mxu0 0
        %1231 = vmatmul.mubr.bf16.gmra.mxu0 %v1154
        %v1232 = vpop.f32.mrf.mxu0
        %v1233 = vadd.f32 %v634, %v1232
        %v1234 = vpop.f32.mrf.mxu0
        %v1235 = vpop.f32.mrf.mxu0
        %v1236 = vadd.f32 %v635, %v1235
        %v1237 = vpop.f32.mrf.mxu0
        %1238 = vmatprep.mubr.bf16.mxu0 0
        %1239 = vmatmul.mubr.bf16.gmra.mxu0 %v1157
        %v1240 = vpop.f32.mrf.mxu0
        %v1241 = vadd.f32 %v636, %v1240
        %v1242 = vpop.f32.mrf.mxu0
        %v1243 = vpop.f32.mrf.mxu0
        %v1244 = vpop.f32.mrf.mxu0
        %1245 = vdwg.mxu0
        %v1246 = vsel %vm1019, %v1209, -inf
        %1247 = vmax.xlane.f32.xlu0 %v1246
        %v1248 = vpop.xlane.xlu0 %1247
        %v1249 = vsel %vm1019, %v1212, -inf
        %1250 = vmax.xlane.f32.xlu0 %v1249
        %v1251 = vpop.xlane.xlu0 %1250
        %v1252 = vsel %vm1019, %v1217, -inf
        %1253 = vmax.xlane.f32.xlu0 %v1252
        %v1254 = vpop.xlane.xlu0 %1253
        %v1255 = vsel %vm1019, %v1220, -inf
        %1256 = vmax.xlane.f32.xlu0 %v1255
        %v1257 = vpop.xlane.xlu0 %1256
        %v1258 = vsel %vm1019, %v1225, -inf
        %1259 = vmax.xlane.f32.xlu0 %v1258
        %v1260 = vpop.xlane.xlu0 %1259
        %v1261 = vsel %vm1019, %v1228, -inf
        %1262 = vmax.xlane.f32.xlu0 %v1261
        %v1263 = vpop.xlane.xlu0 %1262
        %v1264 = vsel %vm1019, %v1233, -inf
        %1265 = vmax.xlane.f32.xlu0 %v1264
        %v1266 = vpop.xlane.xlu0 %1265
        %v1267 = vsel %vm1019, %v1236, -inf
        %1268 = vmax.xlane.f32.xlu0 %v1267
        %v1269 = vpop.xlane.xlu0 %1268
        %v1270 = vsel %vm1019, %v1241, -inf
        %1271 = vmax.xlane.f32.xlu0 %v1270
        %v1272 = vpop.xlane.xlu0 %1271
        %v1273 = vsub.f32 %v1209, %v1248
        %v1274 = vsub.f32 %v1212, %v1251
        %v1275 = vsub.f32 %v1217, %v1254
        %v1276 = vsub.f32 %v1220, %v1257
        %v1277 = vsub.f32 %v1225, %v1260
        %v1278 = vsub.f32 %v1228, %v1263
        %v1279 = vsub.f32 %v1233, %v1266
        %v1280 = vsub.f32 %v1236, %v1269
        %v1281 = vsub.f32 %v1241, %v1272
        %v1282 = vmul.f32 %v1273, 1.442695
        %v1283 = vpow.pop %v1282
        %v1284 = vmul.f32 %v1274, 1.442695
        %v1285 = vpow.pop %v1284
        %v1286 = vmul.f32 %v1275, 1.442695
        %v1287 = vpow.pop %v1286
        %v1288 = vmul.f32 %v1276, 1.442695
        %v1289 = vpow.pop %v1288
        %v1290 = vmul.f32 %v1277, 1.442695
        %v1291 = vpow.pop %v1290
        %v1292 = vmul.f32 %v1278, 1.442695
        %v1293 = vpow.pop %v1292
        %v1294 = vmul.f32 %v1279, 1.442695
        %v1295 = vpow.pop %v1294
        %v1296 = vmul.f32 %v1280, 1.442695
        %v1297 = vpow.pop %v1296
        %v1298 = vmul.f32 %v1281, 1.442695
        %v1299 = vpow.pop %v1298
        %v1300 = vsel %vm1019, %v1283, 0.0
        %1301 = vadd.xlane.f32.xlu0 %v1300
        %v1302 = vpop.xlane.xlu0 %1301
        %v1303 = vsel %vm1019, %v1285, 0.0
        %1304 = vadd.xlane.f32.xlu0 %v1303
        %v1305 = vpop.xlane.xlu0 %1304
        %v1306 = vsel %vm1019, %v1287, 0.0
        %1307 = vadd.xlane.f32.xlu0 %v1306
        %v1308 = vpop.xlane.xlu0 %1307
        %v1309 = vsel %vm1019, %v1289, 0.0
        %1310 = vadd.xlane.f32.xlu0 %v1309
        %v1311 = vpop.xlane.xlu0 %1310
        %v1312 = vsel %vm1019, %v1291, 0.0
        %1313 = vadd.xlane.f32.xlu0 %v1312
        %v1314 = vpop.xlane.xlu0 %1313
        %v1315 = vsel %vm1019, %v1293, 0.0
        %1316 = vadd.xlane.f32.xlu0 %v1315
        %v1317 = vpop.xlane.xlu0 %1316
        %v1318 = vsel %vm1019, %v1295, 0.0
        %1319 = vadd.xlane.f32.xlu0 %v1318
        %v1320 = vpop.xlane.xlu0 %1319
        %v1321 = vsel %vm1019, %v1297, 0.0
        %1322 = vadd.xlane.f32.xlu0 %v1321
        %v1323 = vpop.xlane.xlu0 %1322
        %v1324 = vsel %vm1019, %v1299, 0.0
        %1325 = vadd.xlane.f32.xlu0 %v1324
        %v1326 = vpop.xlane.xlu0 %1325
        %v1327 = vrcp.pop %v1302
        %v1328 = vrcp.pop %v1305
        %v1329 = vrcp.pop %v1308
        %v1330 = vrcp.pop %v1311
        %v1331 = vrcp.pop %v1314
        %v1332 = vrcp.pop %v1317
        %v1333 = vrcp.pop %v1320
        %v1334 = vrcp.pop %v1323
        %v1335 = vrcp.pop %v1326
        %v1336 = vmul.f32 %v1283, %v1327
        %v1337 = vmul.f32 %v1285, %v1328
        %v1338 = vmul.f32 %v1287, %v1329
        %v1339 = vmul.f32 %v1289, %v1330
        %v1340 = vmul.f32 %v1291, %v1331
        %v1341 = vmul.f32 %v1293, %v1332
        %v1342 = vmul.f32 %v1295, %v1333
        %v1343 = vmul.f32 %v1297, %v1334
        %v1344 = vmul.f32 %v1299, %v1335
        %v1345 = vpack.c.bf16 %v1337, %v1336
        %v1346 = vpack.c.bf16 %v1339, %v1338
        %v1347 = vpack.c.bf16 %v1341, %v1340
        %v1348 = vpack.c.bf16 %v1343, %v1342
        %v1349 = vpack.c.bf16 %v1344, %v1344
        %1350 = vrot.lane.b32.xlu0 %v896, 80
        %v1351 = vpop.permute.xlu0 %1350
        %1352 = vrot.lane.b32.xlu0 %v897, 80
        %v1353 = vpop.permute.xlu0 %1352
        %1354 = vrot.lane.b32.xlu0 %v898, 80
        %v1355 = vpop.permute.xlu0 %1354
        %1356 = vrot.lane.b32.xlu0 %v899, 80
        %v1357 = vpop.permute.xlu0 %1356
        %1358 = vrot.lane.b32.xlu0 %v900, 80
        %v1359 = vpop.permute.xlu0 %1358
        %v1365 = vsel %vm1019, %v1345, 0
        %v1368 = vsel %vm1019, %v1346, 0
        %v1371 = vsel %vm1019, %v1347, 0
        %v1374 = vsel %vm1019, %v1348, 0
        %v1377 = vsel %vm1019, %v1349, 0
        %vm1379 = vcmask 1043456
        %v1381 = vsel %vm1379, %v1359, 0
        %1383 = vmatprep.subr.bf16.mxu0 0
        %1384 = vmatpush1.bf16.msra.mxu0 0
        %1385 = vmatprep.subr.bf16.mxu0 0
        %1386 = vmatpush1.bf16.msra.mxu0 0
        %1387 = vmatprep.subr.bf16.mxu0 0
        %1388 = vmatpush1.bf16.msra.mxu0 0
        %1389 = vmatprep.subr.bf16.mxu0 0
        %1390 = vmatpush1.bf16.msra.mxu0 %v1381
        %1391 = vmatprep.subr.bf16.mxu0 0
        %1392 = vmatpush1.bf16.msra.mxu0 %v1357
        %1393 = vmatprep.subr.bf16.mxu0 0
        %1394 = vmatpush1.bf16.msra.mxu0 %v1355
        %1395 = vmatprep.subr.bf16.mxu0 0
        %1396 = vmatpush1.bf16.msra.mxu0 %v1353
        %1397 = vmatprep.subr.bf16.mxu0 0
        %1398 = vmatpush1.bf16.msra.mxu0 %v1351
        %1399 = vmatprep.subr.bf16.mxu0 0
        %1400 = vmatpush2.bf16.msra.mxu0 0
        %1401 = vmatprep.subr.bf16.mxu0 0
        %1402 = vmatpush2.bf16.msra.mxu0 0
        %1403 = vmatprep.subr.bf16.mxu0 0
        %1404 = vmatpush2.bf16.msra.mxu0 0
        %1405 = vmatprep.subr.bf16.mxu0 0
        %1406 = vmatpush2.bf16.msra.mxu0 0
        %1407 = vmatprep.subr.bf16.mxu0 0
        %1408 = vmatpush2.bf16.msra.mxu0 0
        %1409 = vmatprep.subr.bf16.mxu0 0
        %1410 = vmatpush2.bf16.msra.mxu0 0
        %1411 = vmatprep.subr.bf16.mxu0 0
        %1412 = vmatpush2.bf16.msra.mxu0 0
        %1413 = vmatprep.subr.bf16.mxu0 0
        %1414 = vmatpush2.bf16.msra.mxu0 0
        %1415 = vmatprep.mubr.bf16.mxu0 0
        %1416 = vmatmul.mubr.bf16.gmra.mxu0 %v1365
        %v1417 = vpop.f32.mrf.mxu0
        %v1418 = vadd.f32 0.0, %v1417
        %v1419 = vpop.f32.mrf.mxu0
        %v1420 = vpop.f32.mrf.mxu0
        %v1421 = vadd.f32 0.0, %v1420
        %v1422 = vpop.f32.mrf.mxu0
        %1423 = vmatprep.mubr.bf16.mxu0 0
        %1424 = vmatmul.mubr.bf16.gmra.mxu0 %v1368
        %v1425 = vpop.f32.mrf.mxu0
        %v1426 = vadd.f32 0.0, %v1425
        %v1427 = vpop.f32.mrf.mxu0
        %v1428 = vpop.f32.mrf.mxu0
        %v1429 = vadd.f32 0.0, %v1428
        %v1430 = vpop.f32.mrf.mxu0
        %1431 = vmatprep.mubr.bf16.mxu0 0
        %1432 = vmatmul.mubr.bf16.gmra.mxu0 %v1371
        %v1433 = vpop.f32.mrf.mxu0
        %v1434 = vadd.f32 0.0, %v1433
        %v1435 = vpop.f32.mrf.mxu0
        %v1436 = vpop.f32.mrf.mxu0
        %v1437 = vadd.f32 0.0, %v1436
        %v1438 = vpop.f32.mrf.mxu0
        %1439 = vmatprep.mubr.bf16.mxu0 0
        %1440 = vmatmul.mubr.bf16.gmra.mxu0 %v1374
        %v1441 = vpop.f32.mrf.mxu0
        %v1442 = vadd.f32 0.0, %v1441
        %v1443 = vpop.f32.mrf.mxu0
        %v1444 = vpop.f32.mrf.mxu0
        %v1445 = vadd.f32 0.0, %v1444
        %v1446 = vpop.f32.mrf.mxu0
        %1447 = vmatprep.mubr.bf16.mxu0 0
        %1448 = vmatmul.mubr.bf16.gmra.mxu0 %v1377
        %v1449 = vpop.f32.mrf.mxu0
        %v1450 = vadd.f32 0.0, %v1449
        %v1451 = vpop.f32.mrf.mxu0
        %v1452 = vpop.f32.mrf.mxu0
        %v1453 = vpop.f32.mrf.mxu0
        %1454 = vdwg.mxu0
        %1455 = vrot.lane.b32.xlu0 %v896, 96
        %v1456 = vpop.permute.xlu0 %1455
        %1457 = vrot.lane.b32.xlu0 %v897, 96
        %v1458 = vpop.permute.xlu0 %1457
        %1459 = vrot.lane.b32.xlu0 %v898, 96
        %v1460 = vpop.permute.xlu0 %1459
        %1461 = vrot.lane.b32.xlu0 %v899, 96
        %v1462 = vpop.permute.xlu0 %1461
        %1463 = vrot.lane.b32.xlu0 %v900, 96
        %v1464 = vpop.permute.xlu0 %1463
        %v1470 = vsel %vm1019, %v1119, 0
        %v1473 = vsel %vm1019, %v1120, 0
        %v1476 = vsel %vm1019, %v1121, 0
        %v1479 = vsel %vm1019, %v1122, 0
        %v1482 = vsel %vm1019, %v1123, 0
        %v1485 = vsel %vm1379, %v1464, 0
        %1487 = vmatprep.subr.bf16.mxu0 0
        %1488 = vmatpush1.bf16.msra.mxu0 0
        %1489 = vmatprep.subr.bf16.mxu0 0
        %1490 = vmatpush1.bf16.msra.mxu0 0
        %1491 = vmatprep.subr.bf16.mxu0 0
        %1492 = vmatpush1.bf16.msra.mxu0 0
        %1493 = vmatprep.subr.bf16.mxu0 0
        %1494 = vmatpush1.bf16.msra.mxu0 %v1485
        %1495 = vmatprep.subr.bf16.mxu0 0
        %1496 = vmatpush1.bf16.msra.mxu0 %v1462
        %1497 = vmatprep.subr.bf16.mxu0 0
        %1498 = vmatpush1.bf16.msra.mxu0 %v1460
        %1499 = vmatprep.subr.bf16.mxu0 0
        %1500 = vmatpush1.bf16.msra.mxu0 %v1458
        %1501 = vmatprep.subr.bf16.mxu0 0
        %1502 = vmatpush1.bf16.msra.mxu0 %v1456
        %1503 = vmatprep.subr.bf16.mxu0 0
        %1504 = vmatpush2.bf16.msra.mxu0 0
        %1505 = vmatprep.subr.bf16.mxu0 0
        %1506 = vmatpush2.bf16.msra.mxu0 0
        %1507 = vmatprep.subr.bf16.mxu0 0
        %1508 = vmatpush2.bf16.msra.mxu0 0
        %1509 = vmatprep.subr.bf16.mxu0 0
        %1510 = vmatpush2.bf16.msra.mxu0 0
        %1511 = vmatprep.subr.bf16.mxu0 0
        %1512 = vmatpush2.bf16.msra.mxu0 0
        %1513 = vmatprep.subr.bf16.mxu0 0
        %1514 = vmatpush2.bf16.msra.mxu0 0
        %1515 = vmatprep.subr.bf16.mxu0 0
        %1516 = vmatpush2.bf16.msra.mxu0 0
        %1517 = vmatprep.subr.bf16.mxu0 0
        %1518 = vmatpush2.bf16.msra.mxu0 0
        %1519 = vmatprep.mubr.bf16.mxu0 0
        %1520 = vmatmul.mubr.bf16.gmra.mxu0 %v1470
        %v1521 = vpop.f32.mrf.mxu0
        %v1522 = vadd.f32 %v1418, %v1521
        %v1523 = vpop.f32.mrf.mxu0
        %v1524 = vpop.f32.mrf.mxu0
        %v1525 = vadd.f32 %v1421, %v1524
        %v1526 = vpop.f32.mrf.mxu0
        %1527 = vmatprep.mubr.bf16.mxu0 0
        %1528 = vmatmul.mubr.bf16.gmra.mxu0 %v1473
        %v1529 = vpop.f32.mrf.mxu0
        %v1530 = vadd.f32 %v1426, %v1529
        %v1531 = vpop.f32.mrf.mxu0
        %v1532 = vpop.f32.mrf.mxu0
        %v1533 = vadd.f32 %v1429, %v1532
        %v1534 = vpop.f32.mrf.mxu0
        %1535 = vmatprep.mubr.bf16.mxu0 0
        %1536 = vmatmul.mubr.bf16.gmra.mxu0 %v1476
        %v1537 = vpop.f32.mrf.mxu0
        %v1538 = vadd.f32 %v1434, %v1537
        %v1539 = vpop.f32.mrf.mxu0
        %v1540 = vpop.f32.mrf.mxu0
        %v1541 = vadd.f32 %v1437, %v1540
        %v1542 = vpop.f32.mrf.mxu0
        %1543 = vmatprep.mubr.bf16.mxu0 0
        %1544 = vmatmul.mubr.bf16.gmra.mxu0 %v1479
        %v1545 = vpop.f32.mrf.mxu0
        %v1546 = vadd.f32 %v1442, %v1545
        %v1547 = vpop.f32.mrf.mxu0
        %v1548 = vpop.f32.mrf.mxu0
        %v1549 = vadd.f32 %v1445, %v1548
        %v1550 = vpop.f32.mrf.mxu0
        %1551 = vmatprep.mubr.bf16.mxu0 0
        %1552 = vmatmul.mubr.bf16.gmra.mxu0 %v1482
        %v1553 = vpop.f32.mrf.mxu0
        %v1554 = vadd.f32 %v1450, %v1553
        %v1555 = vpop.f32.mrf.mxu0
        %v1556 = vpop.f32.mrf.mxu0
        %v1557 = vpop.f32.mrf.mxu0
        %1558 = vdwg.mxu0
        %v1559 = vadd.f32 %v619, %v1522
        %v1560 = vadd.f32 %v620, %v1525
        %v1561 = vadd.f32 %v621, %v1530
        %v1562 = vadd.f32 %v622, %v1533
        %v1563 = vadd.f32 %v623, %v1538
        %v1564 = vadd.f32 %v624, %v1541
        %v1565 = vadd.f32 %v625, %v1546
        %v1566 = vadd.f32 %v626, %v1549
        %v1567 = vadd.f32 %v627, %v1554
        %v1568 = vld [vmem:[%s7] sm:$0x1]
        %v1570 = vlaneseq
        %v1571 = vshrl.u32 %v1570, 7
        %v1572 = vsub.s32 0, %v1571
        %v1573 = vrot.slane %v1568, %v1572
        %v1575 = vadd.f32 %v1559, %v1573
        %v1576 = vadd.f32 %v1560, %v1573
        %v1577 = vadd.f32 %v1561, %v1573
        %v1578 = vadd.f32 %v1562, %v1573
        %v1579 = vadd.f32 %v1563, %v1573
        %v1580 = vadd.f32 %v1564, %v1573
        %v1581 = vadd.f32 %v1565, %v1573
        %v1582 = vadd.f32 %v1566, %v1573
        %v1583 = vadd.f32 %v1567, %v1573
        %v1584 = vsel %vm637, %v1575, 0.0
        %1585 = vadd.xlane.f32.xlu0 %v1584
        %v1586 = vpop.xlane.xlu0 %1585
        %v1587 = vsel %vm637, %v1576, 0.0
        %1588 = vadd.xlane.f32.xlu0 %v1587
        %v1589 = vpop.xlane.xlu0 %1588
        %v1590 = vsel %vm637, %v1577, 0.0
        %1591 = vadd.xlane.f32.xlu0 %v1590
        %v1592 = vpop.xlane.xlu0 %1591
        %v1593 = vsel %vm637, %v1578, 0.0
        %1594 = vadd.xlane.f32.xlu0 %v1593
        %v1595 = vpop.xlane.xlu0 %1594
        %v1596 = vsel %vm637, %v1579, 0.0
        %1597 = vadd.xlane.f32.xlu0 %v1596
        %v1598 = vpop.xlane.xlu0 %1597
        %v1599 = vsel %vm637, %v1580, 0.0
        %1600 = vadd.xlane.f32.xlu0 %v1599
        %v1601 = vpop.xlane.xlu0 %1600
        %v1602 = vsel %vm637, %v1581, 0.0
        %1603 = vadd.xlane.f32.xlu0 %v1602
        %v1604 = vpop.xlane.xlu0 %1603
        %v1605 = vsel %vm637, %v1582, 0.0
        %1606 = vadd.xlane.f32.xlu0 %v1605
        %v1607 = vpop.xlane.xlu0 %1606
        %v1608 = vsel %vm637, %v1583, 0.0
        %1609 = vadd.xlane.f32.xlu0 %v1608
        %v1610 = vpop.xlane.xlu0 %1609
        %v1611 = vmul.f32 %v1586, %v665
        %v1612 = vmul.f32 %v1589, %v665
        %v1613 = vmul.f32 %v1592, %v665
        %v1614 = vmul.f32 %v1595, %v665
        %v1615 = vmul.f32 %v1598, %v665
        %v1616 = vmul.f32 %v1601, %v665
        %v1617 = vmul.f32 %v1604, %v665
        %v1618 = vmul.f32 %v1607, %v665
        %v1619 = vmul.f32 %v1610, %v665
        %v1620 = vsub.f32 %v1575, %v1611
        %v1621 = vsub.f32 %v1576, %v1612
        %v1622 = vsub.f32 %v1577, %v1613
        %v1623 = vsub.f32 %v1578, %v1614
        %v1624 = vsub.f32 %v1579, %v1615
        %v1625 = vsub.f32 %v1580, %v1616
        %v1626 = vsub.f32 %v1581, %v1617
        %v1627 = vsub.f32 %v1582, %v1618
        %v1628 = vsub.f32 %v1583, %v1619
        %v1629 = vmul.f32 %v1620, %v1620
        %v1630 = vmul.f32 %v1621, %v1621
        %v1631 = vmul.f32 %v1622, %v1622
        %v1632 = vmul.f32 %v1623, %v1623
        %v1633 = vmul.f32 %v1624, %v1624
        %v1634 = vmul.f32 %v1625, %v1625
        %v1635 = vmul.f32 %v1626, %v1626
        %v1636 = vmul.f32 %v1627, %v1627
        %v1637 = vmul.f32 %v1628, %v1628
        %v1638 = vsel %vm637, %v1629, 0.0
        %1639 = vadd.xlane.f32.xlu0 %v1638
        %v1640 = vpop.xlane.xlu0 %1639
        %v1641 = vsel %vm637, %v1630, 0.0
        %1642 = vadd.xlane.f32.xlu0 %v1641
        %v1643 = vpop.xlane.xlu0 %1642
        %v1644 = vsel %vm637, %v1631, 0.0
        %1645 = vadd.xlane.f32.xlu0 %v1644
        %v1646 = vpop.xlane.xlu0 %1645
        %v1647 = vsel %vm637, %v1632, 0.0
        %1648 = vadd.xlane.f32.xlu0 %v1647
        %v1649 = vpop.xlane.xlu0 %1648
        %v1650 = vsel %vm637, %v1633, 0.0
        %1651 = vadd.xlane.f32.xlu0 %v1650
        %v1652 = vpop.xlane.xlu0 %1651
        %v1653 = vsel %vm637, %v1634, 0.0
        %1654 = vadd.xlane.f32.xlu0 %v1653
        %v1655 = vpop.xlane.xlu0 %1654
        %v1656 = vsel %vm637, %v1635, 0.0
        %1657 = vadd.xlane.f32.xlu0 %v1656
        %v1658 = vpop.xlane.xlu0 %1657
        %v1659 = vsel %vm637, %v1636, 0.0
        %1660 = vadd.xlane.f32.xlu0 %v1659
        %v1661 = vpop.xlane.xlu0 %1660
        %v1662 = vsel %vm637, %v1637, 0.0
        %1663 = vadd.xlane.f32.xlu0 %v1662
        %v1664 = vpop.xlane.xlu0 %1663
        %v1665 = vmul.f32 %v1640, %v665
        %v1666 = vmul.f32 %v1643, %v665
        %v1667 = vmul.f32 %v1646, %v665
        %v1668 = vmul.f32 %v1649, %v665
        %v1669 = vmul.f32 %v1652, %v665
        %v1670 = vmul.f32 %v1655, %v665
        %v1671 = vmul.f32 %v1658, %v665
        %v1672 = vmul.f32 %v1661, %v665
        %v1673 = vmul.f32 %v1664, %v665
        %v1674 = vadd.f32 %v1665, 1e-06
        %v1675 = vadd.f32 %v1666, 1e-06
        %v1676 = vadd.f32 %v1667, 1e-06
        %v1677 = vadd.f32 %v1668, 1e-06
        %v1678 = vadd.f32 %v1669, 1e-06
        %v1679 = vadd.f32 %v1670, 1e-06
        %v1680 = vadd.f32 %v1671, 1e-06
        %v1681 = vadd.f32 %v1672, 1e-06
        %v1682 = vadd.f32 %v1673, 1e-06
        %v1683 = vrsqrt.pop %v1674
        %v1684 = vrsqrt.pop %v1675
        %v1685 = vrsqrt.pop %v1676
        %v1686 = vrsqrt.pop %v1677
        %v1687 = vrsqrt.pop %v1678
        %v1688 = vrsqrt.pop %v1679
        %v1689 = vrsqrt.pop %v1680
        %v1690 = vrsqrt.pop %v1681
        %v1691 = vrsqrt.pop %v1682
        %v1692 = vmul.f32 %v1620, %v1683
        %v1693 = vmul.f32 %v1621, %v1684
        %v1694 = vmul.f32 %v1622, %v1685
        %v1695 = vmul.f32 %v1623, %v1686
        %v1696 = vmul.f32 %v1624, %v1687
        %v1697 = vmul.f32 %v1625, %v1688
        %v1698 = vmul.f32 %v1626, %v1689
        %v1699 = vmul.f32 %v1627, %v1690
        %v1700 = vmul.f32 %v1628, %v1691
        %s1701 = scalar_lea.vmem %s4, 1
        %v1702 = vld [vmem:[%s1701] sm:$0x1]
        %v1704 = vlaneseq
        %v1705 = vshrl.u32 %v1704, 7
        %v1706 = vsub.s32 0, %v1705
        %v1707 = vrot.slane %v1702, %v1706
        %v1709 = vmul.f32 %v1692, %v1707
        %v1710 = vmul.f32 %v1693, %v1707
        %v1711 = vmul.f32 %v1694, %v1707
        %v1712 = vmul.f32 %v1695, %v1707
        %v1713 = vmul.f32 %v1696, %v1707
        %v1714 = vmul.f32 %v1697, %v1707
        %v1715 = vmul.f32 %v1698, %v1707
        %v1716 = vmul.f32 %v1699, %v1707
        %v1717 = vmul.f32 %v1700, %v1707
        %s1718 = scalar_lea.vmem %s4, 6
        %v1719 = vld [vmem:[%s1718] sm:$0x1]
        %v1721 = vlaneseq
        %v1722 = vshrl.u32 %v1721, 7
        %v1723 = vsub.s32 0, %v1722
        %v1724 = vrot.slane %v1719, %v1723
        %v1726 = vadd.f32 %v1709, %v1724
        %v1727 = vadd.f32 %v1710, %v1724
        %v1728 = vadd.f32 %v1711, %v1724
        %v1729 = vadd.f32 %v1712, %v1724
        %v1730 = vadd.f32 %v1713, %v1724
        %v1731 = vadd.f32 %v1714, %v1724
        %v1732 = vadd.f32 %v1715, %v1724
        %v1733 = vadd.f32 %v1716, %v1724
        %v1734 = vadd.f32 %v1717, %v1724
        %v1735 = vpack.c.bf16 %v1727, %v1726
        %v1736 = vpack.c.bf16 %v1729, %v1728
        %v1737 = vpack.c.bf16 %v1731, %v1730
        %v1738 = vpack.c.bf16 %v1733, %v1732
        %v1739 = vpack.c.bf16 %v1734, %v1734
        %v1740 = vld [vmem:[%s8] sm:$0xf]
        %v1741 = vld [vmem:[%s8 + $0x4] sm:$0xf]
        %v1742 = vld [vmem:[%s9] sm:$0x1]
        %v1744 = vlaneseq
        %v1745 = vshrl.u32 %v1744, 7
        %v1746 = vsub.s32 0, %v1745
        %v1747 = vrot.slane %v1742, %v1746
        %v1751 = vunpack.c.l.b16 %v1740
        %v1752 = vunpack.c.l.b16 %v1741
        %v1753 = vpack.c.b16 %v1752, %v1751
        %v1756 = vsel %vm637, %v1735, 0
        %v1759 = vsel %vm637, %v1736, 0
        %v1762 = vsel %vm637, %v1737, 0
        %v1765 = vsel %vm637, %v1738, 0
        %v1768 = vsel %vm637, %v1739, 0
        %1770 = vmatprep.subr.bf16.mxu0 0
        %1771 = vmatpush1.bf16.msra.mxu0 0
        %1772 = vmatprep.subr.bf16.mxu0 0
        %1773 = vmatpush1.bf16.msra.mxu0 0
        %1774 = vmatprep.subr.bf16.mxu0 0
        %1775 = vmatpush1.bf16.msra.mxu0 0
        %1776 = vmatprep.subr.bf16.mxu0 0
        %1777 = vmatpush1.bf16.msra.mxu0 0
        %1778 = vmatprep.subr.bf16.mxu0 0
        %1779 = vmatpush1.bf16.msra.mxu0 0
        %1780 = vmatprep.subr.bf16.mxu0 0
        %1781 = vmatpush1.bf16.msra.mxu0 0
        %1782 = vmatprep.subr.bf16.mxu0 0
        %1783 = vmatpush1.bf16.msra.mxu0 0
        %1784 = vmatprep.subr.bf16.mxu0 0
        %1785 = vmatpush1.bf16.msra.mxu0 %v1753
        %1786 = vmatprep.subr.bf16.mxu0 0
        %1787 = vmatpush2.bf16.msra.mxu0 0
        %1788 = vmatprep.subr.bf16.mxu0 0
        %1789 = vmatpush2.bf16.msra.mxu0 0
        %1790 = vmatprep.subr.bf16.mxu0 0
        %1791 = vmatpush2.bf16.msra.mxu0 0
        %1792 = vmatprep.subr.bf16.mxu0 0
        %1793 = vmatpush2.bf16.msra.mxu0 0
        %1794 = vmatprep.subr.bf16.mxu0 0
        %1795 = vmatpush2.bf16.msra.mxu0 0
        %1796 = vmatprep.subr.bf16.mxu0 0
        %1797 = vmatpush2.bf16.msra.mxu0 0
        %1798 = vmatprep.subr.bf16.mxu0 0
        %1799 = vmatpush2.bf16.msra.mxu0 0
        %1800 = vmatprep.subr.bf16.mxu0 0
        %1801 = vmatpush2.bf16.msra.mxu0 0
        %1802 = vmatprep.mubr.bf16.mxu0 0
        %1803 = vmatmul.mubr.bf16.gmra.mxu0 %v1756
        %v1804 = vpop.f32.mrf.mxu0
        %v1805 = vadd.f32 %v1747, %v1804
        %v1806 = vpop.f32.mrf.mxu0
        %v1807 = vpop.f32.mrf.mxu0
        %v1808 = vadd.f32 %v1747, %v1807
        %v1809 = vpop.f32.mrf.mxu0
        %1810 = vmatprep.mubr.bf16.mxu0 0
        %1811 = vmatmul.mubr.bf16.gmra.mxu0 %v1759
        %v1812 = vpop.f32.mrf.mxu0
        %v1813 = vadd.f32 %v1747, %v1812
        %v1814 = vpop.f32.mrf.mxu0
        %v1815 = vpop.f32.mrf.mxu0
        %v1816 = vadd.f32 %v1747, %v1815
        %v1817 = vpop.f32.mrf.mxu0
        %1818 = vmatprep.mubr.bf16.mxu0 0
        %1819 = vmatmul.mubr.bf16.gmra.mxu0 %v1762
        %v1820 = vpop.f32.mrf.mxu0
        %v1821 = vadd.f32 %v1747, %v1820
        %v1822 = vpop.f32.mrf.mxu0
        %v1823 = vpop.f32.mrf.mxu0
        %v1824 = vadd.f32 %v1747, %v1823
        %v1825 = vpop.f32.mrf.mxu0
        %1826 = vmatprep.mubr.bf16.mxu0 0
        %1827 = vmatmul.mubr.bf16.gmra.mxu0 %v1765
        %v1828 = vpop.f32.mrf.mxu0
        %v1829 = vadd.f32 %v1747, %v1828
        %v1830 = vpop.f32.mrf.mxu0
        %v1831 = vpop.f32.mrf.mxu0
        %v1832 = vadd.f32 %v1747, %v1831
        %v1833 = vpop.f32.mrf.mxu0
        %1834 = vmatprep.mubr.bf16.mxu0 0
        %1835 = vmatmul.mubr.bf16.gmra.mxu0 %v1768
        %v1836 = vpop.f32.mrf.mxu0
        %v1837 = vadd.f32 %v1747, %v1836
        %v1838 = vpop.f32.mrf.mxu0
        %v1839 = vpop.f32.mrf.mxu0
        %v1840 = vpop.f32.mrf.mxu0
        %1841 = vdwg.mxu0
        %v1842 = vmul.f32 %v1805, 0.5
        %v1843 = vmul.f32 %v1808, 0.5
        %v1844 = vmul.f32 %v1813, 0.5
        %v1845 = vmul.f32 %v1816, 0.5
        %v1846 = vmul.f32 %v1821, 0.5
        %v1847 = vmul.f32 %v1824, 0.5
        %v1848 = vmul.f32 %v1829, 0.5
        %v1849 = vmul.f32 %v1832, 0.5
        %v1850 = vmul.f32 %v1837, 0.5
        %v1851 = vmul.f32 %v1805, 0.70710677
        %v1852 = vmul.f32 %v1808, 0.70710677
        %v1853 = vmul.f32 %v1813, 0.70710677
        %v1854 = vmul.f32 %v1816, 0.70710677
        %v1855 = vmul.f32 %v1821, 0.70710677
        %v1856 = vmul.f32 %v1824, 0.70710677
        %v1857 = vmul.f32 %v1829, 0.70710677
        %v1858 = vmul.f32 %v1832, 0.70710677
        %v1859 = vmul.f32 %v1837, 0.70710677
        %vm1860 = vcmp.ge.f32.partialorder %v1851, 0.0
        %vm1861 = vcmp.ge.f32.partialorder %v1852, 0.0
        %vm1862 = vcmp.ge.f32.partialorder %v1853, 0.0
        %vm1863 = vcmp.ge.f32.partialorder %v1854, 0.0
        %vm1864 = vcmp.ge.f32.partialorder %v1855, 0.0
        %vm1865 = vcmp.ge.f32.partialorder %v1856, 0.0
        %vm1866 = vcmp.ge.f32.partialorder %v1857, 0.0
        %vm1867 = vcmp.ge.f32.partialorder %v1858, 0.0
        %vm1868 = vcmp.ge.f32.partialorder %v1859, 0.0
        %v1869 = vsel %vm1860, 1.0, -1.0
        %v1870 = vsel %vm1861, 1.0, -1.0
        %v1871 = vsel %vm1862, 1.0, -1.0
        %v1872 = vsel %vm1863, 1.0, -1.0
        %v1873 = vsel %vm1864, 1.0, -1.0
        %v1874 = vsel %vm1865, 1.0, -1.0
        %v1875 = vsel %vm1866, 1.0, -1.0
        %v1876 = vsel %vm1867, 1.0, -1.0
        %v1877 = vsel %vm1868, 1.0, -1.0
        %v1878 = vand.u32 2147483647, %v1851
        %v1879 = vand.u32 2147483647, %v1852
        %v1880 = vand.u32 2147483647, %v1853
        %v1881 = vand.u32 2147483647, %v1854
        %v1882 = vand.u32 2147483647, %v1855
        %v1883 = vand.u32 2147483647, %v1856
        %v1884 = vand.u32 2147483647, %v1857
        %v1885 = vand.u32 2147483647, %v1858
        %v1886 = vand.u32 2147483647, %v1859
        %v1887 = vmul.f32 %v1878, 0.3275911
        %v1888 = vmul.f32 %v1879, 0.3275911
        %v1889 = vmul.f32 %v1880, 0.3275911
        %v1890 = vmul.f32 %v1881, 0.3275911
        %v1891 = vmul.f32 %v1882, 0.3275911
        %v1892 = vmul.f32 %v1883, 0.3275911
        %v1893 = vmul.f32 %v1884, 0.3275911
        %v1894 = vmul.f32 %v1885, 0.3275911
        %v1895 = vmul.f32 %v1886, 0.3275911
        %v1896 = vadd.f32 %v1887, 1.0
        %v1897 = vadd.f32 %v1888, 1.0
        %v1898 = vadd.f32 %v1889, 1.0
        %v1899 = vadd.f32 %v1890, 1.0
        %v1900 = vadd.f32 %v1891, 1.0
        %v1901 = vadd.f32 %v1892, 1.0
        %v1902 = vadd.f32 %v1893, 1.0
        %v1903 = vadd.f32 %v1894, 1.0
        %v1904 = vadd.f32 %v1895, 1.0
        %v1905 = vrcp.pop %v1896
        %v1906 = vmul.f32 1.0, %v1905
        %v1907 = vrcp.pop %v1897
        %v1908 = vmul.f32 1.0, %v1907
        %v1909 = vrcp.pop %v1898
        %v1910 = vmul.f32 1.0, %v1909
        %v1911 = vrcp.pop %v1899
        %v1912 = vmul.f32 1.0, %v1911
        %v1913 = vrcp.pop %v1900
        %v1914 = vmul.f32 1.0, %v1913
        %v1915 = vrcp.pop %v1901
        %v1916 = vmul.f32 1.0, %v1915
        %v1917 = vrcp.pop %v1902
        %v1918 = vmul.f32 1.0, %v1917
        %v1919 = vrcp.pop %v1903
        %v1920 = vmul.f32 1.0, %v1919
        %v1921 = vrcp.pop %v1904
        %v1922 = vmul.f32 1.0, %v1921
        %v1923 = vmul.f32 %v1906, 1.0614054
        %v1924 = vmul.f32 %v1908, 1.0614054
        %v1925 = vmul.f32 %v1910, 1.0614054
        %v1926 = vmul.f32 %v1912, 1.0614054
        %v1927 = vmul.f32 %v1914, 1.0614054
        %v1928 = vmul.f32 %v1916, 1.0614054
        %v1929 = vmul.f32 %v1918, 1.0614054
        %v1930 = vmul.f32 %v1920, 1.0614054
        %v1931 = vmul.f32 %v1922, 1.0614054
        %v1932 = vadd.f32 %v1923, -1.4531521
        %v1933 = vadd.f32 %v1924, -1.4531521
        %v1934 = vadd.f32 %v1925, -1.4531521
        %v1935 = vadd.f32 %v1926, -1.4531521
        %v1936 = vadd.f32 %v1927, -1.4531521
        %v1937 = vadd.f32 %v1928, -1.4531521
        %v1938 = vadd.f32 %v1929, -1.4531521
        %v1939 = vadd.f32 %v1930, -1.4531521
        %v1940 = vadd.f32 %v1931, -1.4531521
        %v1941 = vmul.f32 %v1906, %v1932
        %v1942 = vmul.f32 %v1908, %v1933
        %v1943 = vmul.f32 %v1910, %v1934
        %v1944 = vmul.f32 %v1912, %v1935
        %v1945 = vmul.f32 %v1914, %v1936
        %v1946 = vmul.f32 %v1916, %v1937
        %v1947 = vmul.f32 %v1918, %v1938
        %v1948 = vmul.f32 %v1920, %v1939
        %v1949 = vmul.f32 %v1922, %v1940
        %v1950 = vadd.f32 %v1941, 1.4214138
        %v1951 = vadd.f32 %v1942, 1.4214138
        %v1952 = vadd.f32 %v1943, 1.4214138
        %v1953 = vadd.f32 %v1944, 1.4214138
        %v1954 = vadd.f32 %v1945, 1.4214138
        %v1955 = vadd.f32 %v1946, 1.4214138
        %v1956 = vadd.f32 %v1947, 1.4214138
        %v1957 = vadd.f32 %v1948, 1.4214138
        %v1958 = vadd.f32 %v1949, 1.4214138
        %v1959 = vmul.f32 %v1906, %v1950
        %v1960 = vmul.f32 %v1908, %v1951
        %v1961 = vmul.f32 %v1910, %v1952
        %v1962 = vmul.f32 %v1912, %v1953
        %v1963 = vmul.f32 %v1914, %v1954
        %v1964 = vmul.f32 %v1916, %v1955
        %v1965 = vmul.f32 %v1918, %v1956
        %v1966 = vmul.f32 %v1920, %v1957
        %v1967 = vmul.f32 %v1922, %v1958
        %v1968 = vadd.f32 %v1959, -0.28449672
        %v1969 = vadd.f32 %v1960, -0.28449672
        %v1970 = vadd.f32 %v1961, -0.28449672
        %v1971 = vadd.f32 %v1962, -0.28449672
        %v1972 = vadd.f32 %v1963, -0.28449672
        %v1973 = vadd.f32 %v1964, -0.28449672
        %v1974 = vadd.f32 %v1965, -0.28449672
        %v1975 = vadd.f32 %v1966, -0.28449672
        %v1976 = vadd.f32 %v1967, -0.28449672
        %v1977 = vmul.f32 %v1906, %v1968
        %v1978 = vmul.f32 %v1908, %v1969
        %v1979 = vmul.f32 %v1910, %v1970
        %v1980 = vmul.f32 %v1912, %v1971
        %v1981 = vmul.f32 %v1914, %v1972
        %v1982 = vmul.f32 %v1916, %v1973
        %v1983 = vmul.f32 %v1918, %v1974
        %v1984 = vmul.f32 %v1920, %v1975
        %v1985 = vmul.f32 %v1922, %v1976
        %v1986 = vadd.f32 %v1977, 0.2548296
        %v1987 = vadd.f32 %v1978, 0.2548296
        %v1988 = vadd.f32 %v1979, 0.2548296
        %v1989 = vadd.f32 %v1980, 0.2548296
        %v1990 = vadd.f32 %v1981, 0.2548296
        %v1991 = vadd.f32 %v1982, 0.2548296
        %v1992 = vadd.f32 %v1983, 0.2548296
        %v1993 = vadd.f32 %v1984, 0.2548296
        %v1994 = vadd.f32 %v1985, 0.2548296
        %v1995 = vmul.f32 %v1906, %v1986
        %v1996 = vmul.f32 %v1908, %v1987
        %v1997 = vmul.f32 %v1910, %v1988
        %v1998 = vmul.f32 %v1912, %v1989
        %v1999 = vmul.f32 %v1914, %v1990
        %v2000 = vmul.f32 %v1916, %v1991
        %v2001 = vmul.f32 %v1918, %v1992
        %v2002 = vmul.f32 %v1920, %v1993
        %v2003 = vmul.f32 %v1922, %v1994
        %v2004 = vsub.f32 0.0, %v1878
        %v2005 = vsub.f32 0.0, %v1879
        %v2006 = vsub.f32 0.0, %v1880
        %v2007 = vsub.f32 0.0, %v1881
        %v2008 = vsub.f32 0.0, %v1882
        %v2009 = vsub.f32 0.0, %v1883
        %v2010 = vsub.f32 0.0, %v1884
        %v2011 = vsub.f32 0.0, %v1885
        %v2012 = vsub.f32 0.0, %v1886
        %v2013 = vmul.f32 %v2004, %v1878
        %v2014 = vmul.f32 %v2005, %v1879
        %v2015 = vmul.f32 %v2006, %v1880
        %v2016 = vmul.f32 %v2007, %v1881
        %v2017 = vmul.f32 %v2008, %v1882
        %v2018 = vmul.f32 %v2009, %v1883
        %v2019 = vmul.f32 %v2010, %v1884
        %v2020 = vmul.f32 %v2011, %v1885
        %v2021 = vmul.f32 %v2012, %v1886
        %v2022 = vmul.f32 %v2013, 1.442695
        %v2023 = vpow.pop %v2022
        %v2024 = vmul.f32 %v2014, 1.442695
        %v2025 = vpow.pop %v2024
        %v2026 = vmul.f32 %v2015, 1.442695
        %v2027 = vpow.pop %v2026
        %v2028 = vmul.f32 %v2016, 1.442695
        %v2029 = vpow.pop %v2028
        %v2030 = vmul.f32 %v2017, 1.442695
        %v2031 = vpow.pop %v2030
        %v2032 = vmul.f32 %v2018, 1.442695
        %v2033 = vpow.pop %v2032
        %v2034 = vmul.f32 %v2019, 1.442695
        %v2035 = vpow.pop %v2034
        %v2036 = vmul.f32 %v2020, 1.442695
        %v2037 = vpow.pop %v2036
        %v2038 = vmul.f32 %v2021, 1.442695
        %v2039 = vpow.pop %v2038
        %v2040 = vmul.f32 %v1995, %v2023
        %v2041 = vmul.f32 %v1996, %v2025
        %v2042 = vmul.f32 %v1997, %v2027
        %v2043 = vmul.f32 %v1998, %v2029
        %v2044 = vmul.f32 %v1999, %v2031
        %v2045 = vmul.f32 %v2000, %v2033
        %v2046 = vmul.f32 %v2001, %v2035
        %v2047 = vmul.f32 %v2002, %v2037
        %v2048 = vmul.f32 %v2003, %v2039
        %v2049 = vsub.f32 1.0, %v2040
        %v2050 = vsub.f32 1.0, %v2041
        %v2051 = vsub.f32 1.0, %v2042
        %v2052 = vsub.f32 1.0, %v2043
        %v2053 = vsub.f32 1.0, %v2044
        %v2054 = vsub.f32 1.0, %v2045
        %v2055 = vsub.f32 1.0, %v2046
        %v2056 = vsub.f32 1.0, %v2047
        %v2057 = vsub.f32 1.0, %v2048
        %v2058 = vmul.f32 %v1869, %v2049
        %v2059 = vmul.f32 %v1870, %v2050
        %v2060 = vmul.f32 %v1871, %v2051
        %v2061 = vmul.f32 %v1872, %v2052
        %v2062 = vmul.f32 %v1873, %v2053
        %v2063 = vmul.f32 %v1874, %v2054
        %v2064 = vmul.f32 %v1875, %v2055
        %v2065 = vmul.f32 %v1876, %v2056
        %v2066 = vmul.f32 %v1877, %v2057
        %v2067 = vadd.f32 %v2058, 1.0
        %v2068 = vadd.f32 %v2059, 1.0
        %v2069 = vadd.f32 %v2060, 1.0
        %v2070 = vadd.f32 %v2061, 1.0
        %v2071 = vadd.f32 %v2062, 1.0
        %v2072 = vadd.f32 %v2063, 1.0
        %v2073 = vadd.f32 %v2064, 1.0
        %v2074 = vadd.f32 %v2065, 1.0
        %v2075 = vadd.f32 %v2066, 1.0
        %v2076 = vmul.f32 %v1842, %v2067
        %v2077 = vmul.f32 %v1843, %v2068
        %v2078 = vmul.f32 %v1844, %v2069
        %v2079 = vmul.f32 %v1845, %v2070
        %v2080 = vmul.f32 %v1846, %v2071
        %v2081 = vmul.f32 %v1847, %v2072
        %v2082 = vmul.f32 %v1848, %v2073
        %v2083 = vmul.f32 %v1849, %v2074
        %v2084 = vmul.f32 %v1850, %v2075
        %v2085 = vpack.c.bf16 %v2077, %v2076
        %v2086 = vpack.c.bf16 %v2079, %v2078
        %v2087 = vpack.c.bf16 %v2081, %v2080
        %v2088 = vpack.c.bf16 %v2083, %v2082
        %v2089 = vpack.c.bf16 %v2084, %v2084
        %v2090 = vld [vmem:[%s10] sm:$0xf]
        %v2091 = vld [vmem:[%s10 + $0x4] sm:$0xf]
        %v2092 = vld [vmem:[%s10 + $0x8] sm:$0xf]
        %v2093 = vld [vmem:[%s10 + $0xc] sm:$0xf]
        %v2094 = vld [vmem:[%s10 + $0x10] sm:$0xf]
        %v2095 = vld [vmem:[%s10 + $0x14] sm:$0xf]
        %v2096 = vld [vmem:[%s10 + $0x18] sm:$0xf]
        %v2097 = vld [vmem:[%s10 + $0x1c] sm:$0xf]
        %v2106 = vunpack.c.l.b16 %v2090
        %v2107 = vunpack.c.l.b16 %v2091
        %v2108 = vunpack.c.l.b16 %v2092
        %v2109 = vunpack.c.l.b16 %v2093
        %v2110 = vunpack.c.l.b16 %v2094
        %v2111 = vunpack.c.l.b16 %v2095
        %v2112 = vunpack.c.l.b16 %v2096
        %v2113 = vunpack.c.l.b16 %v2097
        %v2114 = vpack.c.b16 %v2107, %v2106
        %v2115 = vpack.c.b16 %v2109, %v2108
        %v2116 = vpack.c.b16 %v2111, %v2110
        %v2117 = vpack.c.b16 %v2113, %v2112
        %vm2122 = vcmask 523264
        %v2124 = vsel %vm2122, %v2085, 0
        %v2127 = vsel %vm2122, %v2086, 0
        %v2130 = vsel %vm2122, %v2087, 0
        %v2133 = vsel %vm2122, %v2088, 0
        %v2136 = vsel %vm2122, %v2089, 0
        %2138 = vmatprep.subr.bf16.mxu0 0
        %2139 = vmatpush1.bf16.msra.mxu0 0
        %2140 = vmatprep.subr.bf16.mxu0 0
        %2141 = vmatpush1.bf16.msra.mxu0 0
        %2142 = vmatprep.subr.bf16.mxu0 0
        %2143 = vmatpush1.bf16.msra.mxu0 0
        %2144 = vmatprep.subr.bf16.mxu0 0
        %2145 = vmatpush1.bf16.msra.mxu0 0
        %2146 = vmatprep.subr.bf16.mxu0 0
        %2147 = vmatpush1.bf16.msra.mxu0 %v2117
        %2148 = vmatprep.subr.bf16.mxu0 0
        %2149 = vmatpush1.bf16.msra.mxu0 %v2116
        %2150 = vmatprep.subr.bf16.mxu0 0
        %2151 = vmatpush1.bf16.msra.mxu0 %v2115
        %2152 = vmatprep.subr.bf16.mxu0 0
        %2153 = vmatpush1.bf16.msra.mxu0 %v2114
        %2154 = vmatprep.subr.bf16.mxu0 0
        %2155 = vmatpush2.bf16.msra.mxu0 0
        %2156 = vmatprep.subr.bf16.mxu0 0
        %2157 = vmatpush2.bf16.msra.mxu0 0
        %2158 = vmatprep.subr.bf16.mxu0 0
        %2159 = vmatpush2.bf16.msra.mxu0 0
        %2160 = vmatprep.subr.bf16.mxu0 0
        %2161 = vmatpush2.bf16.msra.mxu0 0
        %2162 = vmatprep.subr.bf16.mxu0 0
        %2163 = vmatpush2.bf16.msra.mxu0 0
        %2164 = vmatprep.subr.bf16.mxu0 0
        %2165 = vmatpush2.bf16.msra.mxu0 0
        %2166 = vmatprep.subr.bf16.mxu0 0
        %2167 = vmatpush2.bf16.msra.mxu0 0
        %2168 = vmatprep.subr.bf16.mxu0 0
        %2169 = vmatpush2.bf16.msra.mxu0 0
        %2170 = vmatprep.mubr.bf16.mxu0 0
        %2171 = vmatmul.mubr.bf16.gmra.mxu0 %v2124
        %v2172 = vpop.f32.mrf.mxu0
        %v2173 = vadd.f32 0.0, %v2172
        %v2174 = vpop.f32.mrf.mxu0
        %v2175 = vpop.f32.mrf.mxu0
        %v2176 = vadd.f32 0.0, %v2175
        %v2177 = vpop.f32.mrf.mxu0
        %2178 = vmatprep.mubr.bf16.mxu0 0
        %2179 = vmatmul.mubr.bf16.gmra.mxu0 %v2127
        %v2180 = vpop.f32.mrf.mxu0
        %v2181 = vadd.f32 0.0, %v2180
        %v2182 = vpop.f32.mrf.mxu0
        %v2183 = vpop.f32.mrf.mxu0
        %v2184 = vadd.f32 0.0, %v2183
        %v2185 = vpop.f32.mrf.mxu0
        %2186 = vmatprep.mubr.bf16.mxu0 0
        %2187 = vmatmul.mubr.bf16.gmra.mxu0 %v2130
        %v2188 = vpop.f32.mrf.mxu0
        %v2189 = vadd.f32 0.0, %v2188
        %v2190 = vpop.f32.mrf.mxu0
        %v2191 = vpop.f32.mrf.mxu0
        %v2192 = vadd.f32 0.0, %v2191
        %v2193 = vpop.f32.mrf.mxu0
        %2194 = vmatprep.mubr.bf16.mxu0 0
        %2195 = vmatmul.mubr.bf16.gmra.mxu0 %v2133
        %v2196 = vpop.f32.mrf.mxu0
        %v2197 = vadd.f32 0.0, %v2196
        %v2198 = vpop.f32.mrf.mxu0
        %v2199 = vpop.f32.mrf.mxu0
        %v2200 = vadd.f32 0.0, %v2199
        %v2201 = vpop.f32.mrf.mxu0
        %2202 = vmatprep.mubr.bf16.mxu0 0
        %2203 = vmatmul.mubr.bf16.gmra.mxu0 %v2136
        %v2204 = vpop.f32.mrf.mxu0
        %v2205 = vadd.f32 0.0, %v2204
        %v2206 = vpop.f32.mrf.mxu0
        %v2207 = vpop.f32.mrf.mxu0
        %v2208 = vpop.f32.mrf.mxu0
        %2209 = vdwg.mxu0
        %v2210 = vadd.f32 %v1575, %v2173
        %v2211 = vadd.f32 %v1576, %v2176
        %v2212 = vadd.f32 %v1577, %v2181
        %v2213 = vadd.f32 %v1578, %v2184
        %v2214 = vadd.f32 %v1579, %v2189
        %v2215 = vadd.f32 %v1580, %v2192
        %v2216 = vadd.f32 %v1581, %v2197
        %v2217 = vadd.f32 %v1582, %v2200
        %v2218 = vadd.f32 %v1583, %v2205
        %v2219 = vld [vmem:[%s11] sm:$0x1]
        %v2221 = vlaneseq
        %v2222 = vshrl.u32 %v2221, 7
        %v2223 = vsub.s32 0, %v2222
        %v2224 = vrot.slane %v2219, %v2223
        %v2226 = vadd.f32 %v2210, %v2224
        %v2227 = vadd.f32 %v2211, %v2224
        %v2228 = vadd.f32 %v2212, %v2224
        %v2229 = vadd.f32 %v2213, %v2224
        %v2230 = vadd.f32 %v2214, %v2224
        %v2231 = vadd.f32 %v2215, %v2224
        %v2232 = vadd.f32 %v2216, %v2224
        %v2233 = vadd.f32 %v2217, %v2224
        %v2234 = vadd.f32 %v2218, %v2224
        %v2235 = vsel %vm637, %v2226, 0.0
        %2236 = vadd.xlane.f32.xlu0 %v2235
        %v2237 = vpop.xlane.xlu0 %2236
        %v2238 = vsel %vm637, %v2227, 0.0
        %2239 = vadd.xlane.f32.xlu0 %v2238
        %v2240 = vpop.xlane.xlu0 %2239
        %v2241 = vsel %vm637, %v2228, 0.0
        %2242 = vadd.xlane.f32.xlu0 %v2241
        %v2243 = vpop.xlane.xlu0 %2242
        %v2244 = vsel %vm637, %v2229, 0.0
        %2245 = vadd.xlane.f32.xlu0 %v2244
        %v2246 = vpop.xlane.xlu0 %2245
        %v2247 = vsel %vm637, %v2230, 0.0
        %2248 = vadd.xlane.f32.xlu0 %v2247
        %v2249 = vpop.xlane.xlu0 %2248
        %v2250 = vsel %vm637, %v2231, 0.0
        %2251 = vadd.xlane.f32.xlu0 %v2250
        %v2252 = vpop.xlane.xlu0 %2251
        %v2253 = vsel %vm637, %v2232, 0.0
        %2254 = vadd.xlane.f32.xlu0 %v2253
        %v2255 = vpop.xlane.xlu0 %2254
        %v2256 = vsel %vm637, %v2233, 0.0
        %2257 = vadd.xlane.f32.xlu0 %v2256
        %v2258 = vpop.xlane.xlu0 %2257
        %v2259 = vsel %vm637, %v2234, 0.0
        %2260 = vadd.xlane.f32.xlu0 %v2259
        %v2261 = vpop.xlane.xlu0 %2260
        %v2262 = vmul.f32 %v2237, %v665
        %v2263 = vmul.f32 %v2240, %v665
        %v2264 = vmul.f32 %v2243, %v665
        %v2265 = vmul.f32 %v2246, %v665
        %v2266 = vmul.f32 %v2249, %v665
        %v2267 = vmul.f32 %v2252, %v665
        %v2268 = vmul.f32 %v2255, %v665
        %v2269 = vmul.f32 %v2258, %v665
        %v2270 = vmul.f32 %v2261, %v665
        %v2271 = vsub.f32 %v2226, %v2262
        %v2272 = vsub.f32 %v2227, %v2263
        %v2273 = vsub.f32 %v2228, %v2264
        %v2274 = vsub.f32 %v2229, %v2265
        %v2275 = vsub.f32 %v2230, %v2266
        %v2276 = vsub.f32 %v2231, %v2267
        %v2277 = vsub.f32 %v2232, %v2268
        %v2278 = vsub.f32 %v2233, %v2269
        %v2279 = vsub.f32 %v2234, %v2270
        %v2280 = vmul.f32 %v2271, %v2271
        %v2281 = vmul.f32 %v2272, %v2272
        %v2282 = vmul.f32 %v2273, %v2273
        %v2283 = vmul.f32 %v2274, %v2274
        %v2284 = vmul.f32 %v2275, %v2275
        %v2285 = vmul.f32 %v2276, %v2276
        %v2286 = vmul.f32 %v2277, %v2277
        %v2287 = vmul.f32 %v2278, %v2278
        %v2288 = vmul.f32 %v2279, %v2279
        %v2289 = vsel %vm637, %v2280, 0.0
        %2290 = vadd.xlane.f32.xlu0 %v2289
        %v2291 = vpop.xlane.xlu0 %2290
        %v2292 = vsel %vm637, %v2281, 0.0
        %2293 = vadd.xlane.f32.xlu0 %v2292
        %v2294 = vpop.xlane.xlu0 %2293
        %v2295 = vsel %vm637, %v2282, 0.0
        %2296 = vadd.xlane.f32.xlu0 %v2295
        %v2297 = vpop.xlane.xlu0 %2296
        %v2298 = vsel %vm637, %v2283, 0.0
        %2299 = vadd.xlane.f32.xlu0 %v2298
        %v2300 = vpop.xlane.xlu0 %2299
        %v2301 = vsel %vm637, %v2284, 0.0
        %2302 = vadd.xlane.f32.xlu0 %v2301
        %v2303 = vpop.xlane.xlu0 %2302
        %v2304 = vsel %vm637, %v2285, 0.0
        %2305 = vadd.xlane.f32.xlu0 %v2304
        %v2306 = vpop.xlane.xlu0 %2305
        %v2307 = vsel %vm637, %v2286, 0.0
        %2308 = vadd.xlane.f32.xlu0 %v2307
        %v2309 = vpop.xlane.xlu0 %2308
        %v2310 = vsel %vm637, %v2287, 0.0
        %2311 = vadd.xlane.f32.xlu0 %v2310
        %v2312 = vpop.xlane.xlu0 %2311
        %v2313 = vsel %vm637, %v2288, 0.0
        %2314 = vadd.xlane.f32.xlu0 %v2313
        %v2315 = vpop.xlane.xlu0 %2314
        %v2316 = vmul.f32 %v2291, %v665
        %v2317 = vmul.f32 %v2294, %v665
        %v2318 = vmul.f32 %v2297, %v665
        %v2319 = vmul.f32 %v2300, %v665
        %v2320 = vmul.f32 %v2303, %v665
        %v2321 = vmul.f32 %v2306, %v665
        %v2322 = vmul.f32 %v2309, %v665
        %v2323 = vmul.f32 %v2312, %v665
        %v2324 = vmul.f32 %v2315, %v665
        %v2325 = vadd.f32 %v2316, 1e-06
        %v2326 = vadd.f32 %v2317, 1e-06
        %v2327 = vadd.f32 %v2318, 1e-06
        %v2328 = vadd.f32 %v2319, 1e-06
        %v2329 = vadd.f32 %v2320, 1e-06
        %v2330 = vadd.f32 %v2321, 1e-06
        %v2331 = vadd.f32 %v2322, 1e-06
        %v2332 = vadd.f32 %v2323, 1e-06
        %v2333 = vadd.f32 %v2324, 1e-06
        %v2334 = vrsqrt.pop %v2325
        %v2335 = vrsqrt.pop %v2326
        %v2336 = vrsqrt.pop %v2327
        %v2337 = vrsqrt.pop %v2328
        %v2338 = vrsqrt.pop %v2329
        %v2339 = vrsqrt.pop %v2330
        %v2340 = vrsqrt.pop %v2331
        %v2341 = vrsqrt.pop %v2332
        %v2342 = vrsqrt.pop %v2333
        %v2343 = vmul.f32 %v2271, %v2334
        %v2344 = vmul.f32 %v2272, %v2335
        %v2345 = vmul.f32 %v2273, %v2336
        %v2346 = vmul.f32 %v2274, %v2337
        %v2347 = vmul.f32 %v2275, %v2338
        %v2348 = vmul.f32 %v2276, %v2339
        %v2349 = vmul.f32 %v2277, %v2340
        %v2350 = vmul.f32 %v2278, %v2341
        %v2351 = vmul.f32 %v2279, %v2342
        %s2352 = scalar_lea.vmem %s4, 2
        %v2353 = vld [vmem:[%s2352] sm:$0x1]
        %v2355 = vlaneseq
        %v2356 = vshrl.u32 %v2355, 7
        %v2357 = vsub.s32 0, %v2356
        %v2358 = vrot.slane %v2353, %v2357
        %v2360 = vmul.f32 %v2343, %v2358
        %v2361 = vmul.f32 %v2344, %v2358
        %v2362 = vmul.f32 %v2345, %v2358
        %v2363 = vmul.f32 %v2346, %v2358
        %v2364 = vmul.f32 %v2347, %v2358
        %v2365 = vmul.f32 %v2348, %v2358
        %v2366 = vmul.f32 %v2349, %v2358
        %v2367 = vmul.f32 %v2350, %v2358
        %v2368 = vmul.f32 %v2351, %v2358
        %s2369 = scalar_lea.vmem %s4, 7
        %v2370 = vld [vmem:[%s2369] sm:$0x1]
        %v2372 = vlaneseq
        %v2373 = vshrl.u32 %v2372, 7
        %v2374 = vsub.s32 0, %v2373
        %v2375 = vrot.slane %v2370, %v2374
        %v2377 = vadd.f32 %v2360, %v2375
        %v2378 = vadd.f32 %v2361, %v2375
        %v2379 = vadd.f32 %v2362, %v2375
        %v2380 = vadd.f32 %v2363, %v2375
        %v2381 = vadd.f32 %v2364, %v2375
        %v2382 = vadd.f32 %v2365, %v2375
        %v2383 = vadd.f32 %v2366, %v2375
        %v2384 = vadd.f32 %v2367, %v2375
        %v2385 = vadd.f32 %v2368, %v2375
        %v2386 = vpack.c.bf16 %v2378, %v2377
        %v2387 = vpack.c.bf16 %v2380, %v2379
        %v2388 = vpack.c.bf16 %v2382, %v2381
        %v2389 = vpack.c.bf16 %v2384, %v2383
        %v2390 = vpack.c.bf16 %v2385, %v2385
        %s2391 = scalar_lea.vmem %s5, 8
        %v2392 = vld [vmem:[%s2391] sm:$0xf]
        %v2393 = vld [vmem:[%s2391 + $0x4] sm:$0xf]
        %s2394 = scalar_lea.vmem %s6, 1
        %v2395 = vld [vmem:[%s2394] sm:$0x1]
        %v2397 = vlaneseq
        %v2398 = vshrl.u32 %v2397, 7
        %v2399 = vsub.s32 0, %v2398
        %v2400 = vrot.slane %v2395, %v2399
        %v2404 = vunpack.c.l.b16 %v2392
        %v2405 = vunpack.c.l.b16 %v2393
        %v2406 = vpack.c.b16 %v2405, %v2404
        %v2409 = vsel %vm637, %v2386, 0
        %v2412 = vsel %vm637, %v2387, 0
        %v2415 = vsel %vm637, %v2388, 0
        %v2418 = vsel %vm637, %v2389, 0
        %v2421 = vsel %vm637, %v2390, 0
        %2423 = vmatprep.subr.bf16.mxu0 0
        %2424 = vmatpush1.bf16.msra.mxu0 0
        %2425 = vmatprep.subr.bf16.mxu0 0
        %2426 = vmatpush1.bf16.msra.mxu0 0
        %2427 = vmatprep.subr.bf16.mxu0 0
        %2428 = vmatpush1.bf16.msra.mxu0 0
        %2429 = vmatprep.subr.bf16.mxu0 0
        %2430 = vmatpush1.bf16.msra.mxu0 0
        %2431 = vmatprep.subr.bf16.mxu0 0
        %2432 = vmatpush1.bf16.msra.mxu0 0
        %2433 = vmatprep.subr.bf16.mxu0 0
        %2434 = vmatpush1.bf16.msra.mxu0 0
        %2435 = vmatprep.subr.bf16.mxu0 0
        %2436 = vmatpush1.bf16.msra.mxu0 0
        %2437 = vmatprep.subr.bf16.mxu0 0
        %2438 = vmatpush1.bf16.msra.mxu0 %v2406
        %2439 = vmatprep.subr.bf16.mxu0 0
        %2440 = vmatpush2.bf16.msra.mxu0 0
        %2441 = vmatprep.subr.bf16.mxu0 0
        %2442 = vmatpush2.bf16.msra.mxu0 0
        %2443 = vmatprep.subr.bf16.mxu0 0
        %2444 = vmatpush2.bf16.msra.mxu0 0
        %2445 = vmatprep.subr.bf16.mxu0 0
        %2446 = vmatpush2.bf16.msra.mxu0 0
        %2447 = vmatprep.subr.bf16.mxu0 0
        %2448 = vmatpush2.bf16.msra.mxu0 0
        %2449 = vmatprep.subr.bf16.mxu0 0
        %2450 = vmatpush2.bf16.msra.mxu0 0
        %2451 = vmatprep.subr.bf16.mxu0 0
        %2452 = vmatpush2.bf16.msra.mxu0 0
        %2453 = vmatprep.subr.bf16.mxu0 0
        %2454 = vmatpush2.bf16.msra.mxu0 0
        %2455 = vmatprep.mubr.bf16.mxu0 0
        %2456 = vmatmul.mubr.bf16.gmra.mxu0 %v2409
        %v2457 = vpop.f32.mrf.mxu0
        %v2458 = vadd.f32 %v2400, %v2457
        %v2459 = vpop.f32.mrf.mxu0
        %v2460 = vpop.f32.mrf.mxu0
        %v2461 = vadd.f32 %v2400, %v2460
        %v2462 = vpop.f32.mrf.mxu0
        %2463 = vmatprep.mubr.bf16.mxu0 0
        %2464 = vmatmul.mubr.bf16.gmra.mxu0 %v2412
        %v2465 = vpop.f32.mrf.mxu0
        %v2466 = vadd.f32 %v2400, %v2465
        %v2467 = vpop.f32.mrf.mxu0
        %v2468 = vpop.f32.mrf.mxu0
        %v2469 = vadd.f32 %v2400, %v2468
        %v2470 = vpop.f32.mrf.mxu0
        %2471 = vmatprep.mubr.bf16.mxu0 0
        %2472 = vmatmul.mubr.bf16.gmra.mxu0 %v2415
        %v2473 = vpop.f32.mrf.mxu0
        %v2474 = vadd.f32 %v2400, %v2473
        %v2475 = vpop.f32.mrf.mxu0
        %v2476 = vpop.f32.mrf.mxu0
        %v2477 = vadd.f32 %v2400, %v2476
        %v2478 = vpop.f32.mrf.mxu0
        %2479 = vmatprep.mubr.bf16.mxu0 0
        %2480 = vmatmul.mubr.bf16.gmra.mxu0 %v2418
        %v2481 = vpop.f32.mrf.mxu0
        %v2482 = vadd.f32 %v2400, %v2481
        %v2483 = vpop.f32.mrf.mxu0
        %v2484 = vpop.f32.mrf.mxu0
        %v2485 = vadd.f32 %v2400, %v2484
        %v2486 = vpop.f32.mrf.mxu0
        %2487 = vmatprep.mubr.bf16.mxu0 0
        %2488 = vmatmul.mubr.bf16.gmra.mxu0 %v2421
        %v2489 = vpop.f32.mrf.mxu0
        %v2490 = vadd.f32 %v2400, %v2489
        %v2491 = vpop.f32.mrf.mxu0
        %v2492 = vpop.f32.mrf.mxu0
        %v2493 = vpop.f32.mrf.mxu0
        %2494 = vdwg.mxu0
        %v2495 = vpack.c.bf16 %v2461, %v2458
        %v2496 = vpack.c.bf16 %v2469, %v2466
        %v2497 = vpack.c.bf16 %v2477, %v2474
        %v2498 = vpack.c.bf16 %v2485, %v2482
        %v2499 = vpack.c.bf16 %v2490, %v2490
        %2505 = vrot.lane.b32.xlu0 %v2495, 112
        %v2506 = vpop.permute.xlu0 %2505
        %2507 = vrot.lane.b32.xlu0 %v2496, 112
        %v2508 = vpop.permute.xlu0 %2507
        %2509 = vrot.lane.b32.xlu0 %v2497, 112
        %v2510 = vpop.permute.xlu0 %2509
        %2511 = vrot.lane.b32.xlu0 %v2498, 112
        %v2512 = vpop.permute.xlu0 %2511
        %2513 = vrot.lane.b32.xlu0 %v2499, 112
        %v2514 = vpop.permute.xlu0 %2513
        %v2516 = vsel %vm916, %v2495, 0
        %v2519 = vsel %vm916, %v2496, 0
        %v2522 = vsel %vm916, %v2497, 0
        %v2525 = vsel %vm916, %v2498, 0
        %v2528 = vsel %vm916, %v2499, 0
        %v2531 = vsel %vm916, %v2506, 0
        %v2534 = vsel %vm916, %v2508, 0
        %v2537 = vsel %vm916, %v2510, 0
        %v2540 = vsel %vm916, %v2512, 0
        %v2543 = vsel %vm916, %v2514, 0
        %2545 = vmatprep.subr.bf16.mxu0 0
        %2546 = vmatpush1.bf16.xpose.msra.mxu0 0
        %2547 = vmatprep.subr.bf16.mxu0 0
        %2548 = vmatpush1.bf16.xpose.msra.mxu0 0
        %2549 = vmatprep.subr.bf16.mxu0 0
        %2550 = vmatpush1.bf16.xpose.msra.mxu0 0
        %2551 = vmatprep.subr.bf16.mxu0 0
        %2552 = vmatpush1.bf16.xpose.msra.mxu0 %v2543
        %2553 = vmatprep.subr.bf16.mxu0 0
        %2554 = vmatpush1.bf16.xpose.msra.mxu0 %v2540
        %2555 = vmatprep.subr.bf16.mxu0 0
        %2556 = vmatpush1.bf16.xpose.msra.mxu0 %v2537
        %2557 = vmatprep.subr.bf16.mxu0 0
        %2558 = vmatpush1.bf16.xpose.msra.mxu0 %v2534
        %2559 = vmatprep.subr.bf16.mxu0 0
        %2560 = vmatpush1.bf16.xpose.msra.mxu0 %v2531
        %2561 = vmatprep.subr.bf16.mxu0 0
        %2562 = vmatpush2.bf16.xpose.msra.mxu0 0
        %2563 = vmatprep.subr.bf16.mxu0 0
        %2564 = vmatpush2.bf16.xpose.msra.mxu0 0
        %2565 = vmatprep.subr.bf16.mxu0 0
        %2566 = vmatpush2.bf16.xpose.msra.mxu0 0
        %2567 = vmatprep.subr.bf16.mxu0 0
        %2568 = vmatpush2.bf16.xpose.msra.mxu0 0
        %2569 = vmatprep.subr.bf16.mxu0 0
        %2570 = vmatpush2.bf16.xpose.msra.mxu0 0
        %2571 = vmatprep.subr.bf16.mxu0 0
        %2572 = vmatpush2.bf16.xpose.msra.mxu0 0
        %2573 = vmatprep.subr.bf16.mxu0 0
        %2574 = vmatpush2.bf16.xpose.msra.mxu0 0
        %2575 = vmatprep.subr.bf16.mxu0 0
        %2576 = vmatpush2.bf16.xpose.msra.mxu0 0
        %2577 = vmatprep.mubr.bf16.mxu0 0
        %2578 = vmatmul.mubr.bf16.gmra.mxu0 %v2516
        %v2579 = vpop.f32.mrf.mxu0
        %v2580 = vadd.f32 %v628, %v2579
        %v2581 = vpop.f32.mrf.mxu0
        %v2582 = vpop.f32.mrf.mxu0
        %v2583 = vadd.f32 %v629, %v2582
        %v2584 = vpop.f32.mrf.mxu0
        %2585 = vmatprep.mubr.bf16.mxu0 0
        %2586 = vmatmul.mubr.bf16.gmra.mxu0 %v2519
        %v2587 = vpop.f32.mrf.mxu0
        %v2588 = vadd.f32 %v630, %v2587
        %v2589 = vpop.f32.mrf.mxu0
        %v2590 = vpop.f32.mrf.mxu0
        %v2591 = vadd.f32 %v631, %v2590
        %v2592 = vpop.f32.mrf.mxu0
        %2593 = vmatprep.mubr.bf16.mxu0 0
        %2594 = vmatmul.mubr.bf16.gmra.mxu0 %v2522
        %v2595 = vpop.f32.mrf.mxu0
        %v2596 = vadd.f32 %v632, %v2595
        %v2597 = vpop.f32.mrf.mxu0
        %v2598 = vpop.f32.mrf.mxu0
        %v2599 = vadd.f32 %v633, %v2598
        %v2600 = vpop.f32.mrf.mxu0
        %2601 = vmatprep.mubr.bf16.mxu0 0
        %2602 = vmatmul.mubr.bf16.gmra.mxu0 %v2525
        %v2603 = vpop.f32.mrf.mxu0
        %v2604 = vadd.f32 %v634, %v2603
        %v2605 = vpop.f32.mrf.mxu0
        %v2606 = vpop.f32.mrf.mxu0
        %v2607 = vadd.f32 %v635, %v2606
        %v2608 = vpop.f32.mrf.mxu0
        %2609 = vmatprep.mubr.bf16.mxu0 0
        %2610 = vmatmul.mubr.bf16.gmra.mxu0 %v2528
        %v2611 = vpop.f32.mrf.mxu0
        %v2612 = vadd.f32 %v636, %v2611
        %v2613 = vpop.f32.mrf.mxu0
        %v2614 = vpop.f32.mrf.mxu0
        %v2615 = vpop.f32.mrf.mxu0
        %2616 = vdwg.mxu0
        %v2617 = vsel %vm1019, %v2580, -inf
        %2618 = vmax.xlane.f32.xlu0 %v2617
        %v2619 = vpop.xlane.xlu0 %2618
        %v2620 = vsel %vm1019, %v2583, -inf
        %2621 = vmax.xlane.f32.xlu0 %v2620
        %v2622 = vpop.xlane.xlu0 %2621
        %v2623 = vsel %vm1019, %v2588, -inf
        %2624 = vmax.xlane.f32.xlu0 %v2623
        %v2625 = vpop.xlane.xlu0 %2624
        %v2626 = vsel %vm1019, %v2591, -inf
        %2627 = vmax.xlane.f32.xlu0 %v2626
        %v2628 = vpop.xlane.xlu0 %2627
        %v2629 = vsel %vm1019, %v2596, -inf
        %2630 = vmax.xlane.f32.xlu0 %v2629
        %v2631 = vpop.xlane.xlu0 %2630
        %v2632 = vsel %vm1019, %v2599, -inf
        %2633 = vmax.xlane.f32.xlu0 %v2632
        %v2634 = vpop.xlane.xlu0 %2633
        %v2635 = vsel %vm1019, %v2604, -inf
        %2636 = vmax.xlane.f32.xlu0 %v2635
        %v2637 = vpop.xlane.xlu0 %2636
        %v2638 = vsel %vm1019, %v2607, -inf
        %2639 = vmax.xlane.f32.xlu0 %v2638
        %v2640 = vpop.xlane.xlu0 %2639
        %v2641 = vsel %vm1019, %v2612, -inf
        %2642 = vmax.xlane.f32.xlu0 %v2641
        %v2643 = vpop.xlane.xlu0 %2642
        %v2644 = vsub.f32 %v2580, %v2619
        %v2645 = vsub.f32 %v2583, %v2622
        %v2646 = vsub.f32 %v2588, %v2625
        %v2647 = vsub.f32 %v2591, %v2628
        %v2648 = vsub.f32 %v2596, %v2631
        %v2649 = vsub.f32 %v2599, %v2634
        %v2650 = vsub.f32 %v2604, %v2637
        %v2651 = vsub.f32 %v2607, %v2640
        %v2652 = vsub.f32 %v2612, %v2643
        %v2653 = vmul.f32 %v2644, 1.442695
        %v2654 = vpow.pop %v2653
        %v2655 = vmul.f32 %v2645, 1.442695
        %v2656 = vpow.pop %v2655
        %v2657 = vmul.f32 %v2646, 1.442695
        %v2658 = vpow.pop %v2657
        %v2659 = vmul.f32 %v2647, 1.442695
        %v2660 = vpow.pop %v2659
        %v2661 = vmul.f32 %v2648, 1.442695
        %v2662 = vpow.pop %v2661
        %v2663 = vmul.f32 %v2649, 1.442695
        %v2664 = vpow.pop %v2663
        %v2665 = vmul.f32 %v2650, 1.442695
        %v2666 = vpow.pop %v2665
        %v2667 = vmul.f32 %v2651, 1.442695
        %v2668 = vpow.pop %v2667
        %v2669 = vmul.f32 %v2652, 1.442695
        %v2670 = vpow.pop %v2669
        %v2671 = vsel %vm1019, %v2654, 0.0
        %2672 = vadd.xlane.f32.xlu0 %v2671
        %v2673 = vpop.xlane.xlu0 %2672
        %v2674 = vsel %vm1019, %v2656, 0.0
        %2675 = vadd.xlane.f32.xlu0 %v2674
        %v2676 = vpop.xlane.xlu0 %2675
        %v2677 = vsel %vm1019, %v2658, 0.0
        %2678 = vadd.xlane.f32.xlu0 %v2677
        %v2679 = vpop.xlane.xlu0 %2678
        %v2680 = vsel %vm1019, %v2660, 0.0
        %2681 = vadd.xlane.f32.xlu0 %v2680
        %v2682 = vpop.xlane.xlu0 %2681
        %v2683 = vsel %vm1019, %v2662, 0.0
        %2684 = vadd.xlane.f32.xlu0 %v2683
        %v2685 = vpop.xlane.xlu0 %2684
        %v2686 = vsel %vm1019, %v2664, 0.0
        %2687 = vadd.xlane.f32.xlu0 %v2686
        %v2688 = vpop.xlane.xlu0 %2687
        %v2689 = vsel %vm1019, %v2666, 0.0
        %2690 = vadd.xlane.f32.xlu0 %v2689
        %v2691 = vpop.xlane.xlu0 %2690
        %v2692 = vsel %vm1019, %v2668, 0.0
        %2693 = vadd.xlane.f32.xlu0 %v2692
        %v2694 = vpop.xlane.xlu0 %2693
        %v2695 = vsel %vm1019, %v2670, 0.0
        %2696 = vadd.xlane.f32.xlu0 %v2695
        %v2697 = vpop.xlane.xlu0 %2696
        %v2698 = vrcp.pop %v2673
        %v2699 = vrcp.pop %v2676
        %v2700 = vrcp.pop %v2679
        %v2701 = vrcp.pop %v2682
        %v2702 = vrcp.pop %v2685
        %v2703 = vrcp.pop %v2688
        %v2704 = vrcp.pop %v2691
        %v2705 = vrcp.pop %v2694
        %v2706 = vrcp.pop %v2697
        %v2707 = vmul.f32 %v2654, %v2698
        %v2708 = vmul.f32 %v2656, %v2699
        %v2709 = vmul.f32 %v2658, %v2700
        %v2710 = vmul.f32 %v2660, %v2701
        %v2711 = vmul.f32 %v2662, %v2702
        %v2712 = vmul.f32 %v2664, %v2703
        %v2713 = vmul.f32 %v2666, %v2704
        %v2714 = vmul.f32 %v2668, %v2705
        %v2715 = vmul.f32 %v2670, %v2706
        %v2716 = vpack.c.bf16 %v2708, %v2707
        %v2717 = vpack.c.bf16 %v2710, %v2709
        %v2718 = vpack.c.bf16 %v2712, %v2711
        %v2719 = vpack.c.bf16 %v2714, %v2713
        %v2720 = vpack.c.bf16 %v2715, %v2715
        %2721 = vrot.lane.b32.xlu0 %v2495, 120
        %v2722 = vpop.permute.xlu0 %2721
        %2723 = vrot.lane.b32.xlu0 %v2496, 120
        %v2724 = vpop.permute.xlu0 %2723
        %2725 = vrot.lane.b32.xlu0 %v2497, 120
        %v2726 = vpop.permute.xlu0 %2725
        %2727 = vrot.lane.b32.xlu0 %v2498, 120
        %v2728 = vpop.permute.xlu0 %2727
        %2729 = vrot.lane.b32.xlu0 %v2499, 120
        %v2730 = vpop.permute.xlu0 %2729
        %2731 = vrot.lane.b32.xlu0 %v2495, 104
        %v2732 = vpop.permute.xlu0 %2731
        %2733 = vrot.lane.b32.xlu0 %v2496, 104
        %v2734 = vpop.permute.xlu0 %2733
        %2735 = vrot.lane.b32.xlu0 %v2497, 104
        %v2736 = vpop.permute.xlu0 %2735
        %2737 = vrot.lane.b32.xlu0 %v2498, 104
        %v2738 = vpop.permute.xlu0 %2737
        %2739 = vrot.lane.b32.xlu0 %v2499, 104
        %v2740 = vpop.permute.xlu0 %2739
        %v2742 = vsel %vm916, %v2722, 0
        %v2745 = vsel %vm916, %v2724, 0
        %v2748 = vsel %vm916, %v2726, 0
        %v2751 = vsel %vm916, %v2728, 0
        %v2754 = vsel %vm916, %v2730, 0
        %v2757 = vsel %vm916, %v2732, 0
        %v2760 = vsel %vm916, %v2734, 0
        %v2763 = vsel %vm916, %v2736, 0
        %v2766 = vsel %vm916, %v2738, 0
        %v2769 = vsel %vm916, %v2740, 0
        %2771 = vmatprep.subr.bf16.mxu0 0
        %2772 = vmatpush1.bf16.xpose.msra.mxu0 0
        %2773 = vmatprep.subr.bf16.mxu0 0
        %2774 = vmatpush1.bf16.xpose.msra.mxu0 0
        %2775 = vmatprep.subr.bf16.mxu0 0
        %2776 = vmatpush1.bf16.xpose.msra.mxu0 0
        %2777 = vmatprep.subr.bf16.mxu0 0
        %2778 = vmatpush1.bf16.xpose.msra.mxu0 %v2769
        %2779 = vmatprep.subr.bf16.mxu0 0
        %2780 = vmatpush1.bf16.xpose.msra.mxu0 %v2766
        %2781 = vmatprep.subr.bf16.mxu0 0
        %2782 = vmatpush1.bf16.xpose.msra.mxu0 %v2763
        %2783 = vmatprep.subr.bf16.mxu0 0
        %2784 = vmatpush1.bf16.xpose.msra.mxu0 %v2760
        %2785 = vmatprep.subr.bf16.mxu0 0
        %2786 = vmatpush1.bf16.xpose.msra.mxu0 %v2757
        %2787 = vmatprep.subr.bf16.mxu0 0
        %2788 = vmatpush2.bf16.xpose.msra.mxu0 0
        %2789 = vmatprep.subr.bf16.mxu0 0
        %2790 = vmatpush2.bf16.xpose.msra.mxu0 0
        %2791 = vmatprep.subr.bf16.mxu0 0
        %2792 = vmatpush2.bf16.xpose.msra.mxu0 0
        %2793 = vmatprep.subr.bf16.mxu0 0
        %2794 = vmatpush2.bf16.xpose.msra.mxu0 0
        %2795 = vmatprep.subr.bf16.mxu0 0
        %2796 = vmatpush2.bf16.xpose.msra.mxu0 0
        %2797 = vmatprep.subr.bf16.mxu0 0
        %2798 = vmatpush2.bf16.xpose.msra.mxu0 0
        %2799 = vmatprep.subr.bf16.mxu0 0
        %2800 = vmatpush2.bf16.xpose.msra.mxu0 0
        %2801 = vmatprep.subr.bf16.mxu0 0
        %2802 = vmatpush2.bf16.xpose.msra.mxu0 0
        %2803 = vmatprep.mubr.bf16.mxu0 0
        %2804 = vmatmul.mubr.bf16.gmra.mxu0 %v2742
        %v2805 = vpop.f32.mrf.mxu0
        %v2806 = vadd.f32 %v628, %v2805
        %v2807 = vpop.f32.mrf.mxu0
        %v2808 = vpop.f32.mrf.mxu0
        %v2809 = vadd.f32 %v629, %v2808
        %v2810 = vpop.f32.mrf.mxu0
        %2811 = vmatprep.mubr.bf16.mxu0 0
        %2812 = vmatmul.mubr.bf16.gmra.mxu0 %v2745
        %v2813 = vpop.f32.mrf.mxu0
        %v2814 = vadd.f32 %v630, %v2813
        %v2815 = vpop.f32.mrf.mxu0
        %v2816 = vpop.f32.mrf.mxu0
        %v2817 = vadd.f32 %v631, %v2816
        %v2818 = vpop.f32.mrf.mxu0
        %2819 = vmatprep.mubr.bf16.mxu0 0
        %2820 = vmatmul.mubr.bf16.gmra.mxu0 %v2748
        %v2821 = vpop.f32.mrf.mxu0
        %v2822 = vadd.f32 %v632, %v2821
        %v2823 = vpop.f32.mrf.mxu0
        %v2824 = vpop.f32.mrf.mxu0
        %v2825 = vadd.f32 %v633, %v2824
        %v2826 = vpop.f32.mrf.mxu0
        %2827 = vmatprep.mubr.bf16.mxu0 0
        %2828 = vmatmul.mubr.bf16.gmra.mxu0 %v2751
        %v2829 = vpop.f32.mrf.mxu0
        %v2830 = vadd.f32 %v634, %v2829
        %v2831 = vpop.f32.mrf.mxu0
        %v2832 = vpop.f32.mrf.mxu0
        %v2833 = vadd.f32 %v635, %v2832
        %v2834 = vpop.f32.mrf.mxu0
        %2835 = vmatprep.mubr.bf16.mxu0 0
        %2836 = vmatmul.mubr.bf16.gmra.mxu0 %v2754
        %v2837 = vpop.f32.mrf.mxu0
        %v2838 = vadd.f32 %v636, %v2837
        %v2839 = vpop.f32.mrf.mxu0
        %v2840 = vpop.f32.mrf.mxu0
        %v2841 = vpop.f32.mrf.mxu0
        %2842 = vdwg.mxu0
        %v2843 = vsel %vm1019, %v2806, -inf
        %2844 = vmax.xlane.f32.xlu0 %v2843
        %v2845 = vpop.xlane.xlu0 %2844
        %v2846 = vsel %vm1019, %v2809, -inf
        %2847 = vmax.xlane.f32.xlu0 %v2846
        %v2848 = vpop.xlane.xlu0 %2847
        %v2849 = vsel %vm1019, %v2814, -inf
        %2850 = vmax.xlane.f32.xlu0 %v2849
        %v2851 = vpop.xlane.xlu0 %2850
        %v2852 = vsel %vm1019, %v2817, -inf
        %2853 = vmax.xlane.f32.xlu0 %v2852
        %v2854 = vpop.xlane.xlu0 %2853
        %v2855 = vsel %vm1019, %v2822, -inf
        %2856 = vmax.xlane.f32.xlu0 %v2855
        %v2857 = vpop.xlane.xlu0 %2856
        %v2858 = vsel %vm1019, %v2825, -inf
        %2859 = vmax.xlane.f32.xlu0 %v2858
        %v2860 = vpop.xlane.xlu0 %2859
        %v2861 = vsel %vm1019, %v2830, -inf
        %2862 = vmax.xlane.f32.xlu0 %v2861
        %v2863 = vpop.xlane.xlu0 %2862
        %v2864 = vsel %vm1019, %v2833, -inf
        %2865 = vmax.xlane.f32.xlu0 %v2864
        %v2866 = vpop.xlane.xlu0 %2865
        %v2867 = vsel %vm1019, %v2838, -inf
        %2868 = vmax.xlane.f32.xlu0 %v2867
        %v2869 = vpop.xlane.xlu0 %2868
        %v2870 = vsub.f32 %v2806, %v2845
        %v2871 = vsub.f32 %v2809, %v2848
        %v2872 = vsub.f32 %v2814, %v2851
        %v2873 = vsub.f32 %v2817, %v2854
        %v2874 = vsub.f32 %v2822, %v2857
        %v2875 = vsub.f32 %v2825, %v2860
        %v2876 = vsub.f32 %v2830, %v2863
        %v2877 = vsub.f32 %v2833, %v2866
        %v2878 = vsub.f32 %v2838, %v2869
        %v2879 = vmul.f32 %v2870, 1.442695
        %v2880 = vpow.pop %v2879
        %v2881 = vmul.f32 %v2871, 1.442695
        %v2882 = vpow.pop %v2881
        %v2883 = vmul.f32 %v2872, 1.442695
        %v2884 = vpow.pop %v2883
        %v2885 = vmul.f32 %v2873, 1.442695
        %v2886 = vpow.pop %v2885
        %v2887 = vmul.f32 %v2874, 1.442695
        %v2888 = vpow.pop %v2887
        %v2889 = vmul.f32 %v2875, 1.442695
        %v2890 = vpow.pop %v2889
        %v2891 = vmul.f32 %v2876, 1.442695
        %v2892 = vpow.pop %v2891
        %v2893 = vmul.f32 %v2877, 1.442695
        %v2894 = vpow.pop %v2893
        %v2895 = vmul.f32 %v2878, 1.442695
        %v2896 = vpow.pop %v2895
        %v2897 = vsel %vm1019, %v2880, 0.0
        %2898 = vadd.xlane.f32.xlu0 %v2897
        %v2899 = vpop.xlane.xlu0 %2898
        %v2900 = vsel %vm1019, %v2882, 0.0
        %2901 = vadd.xlane.f32.xlu0 %v2900
        %v2902 = vpop.xlane.xlu0 %2901
        %v2903 = vsel %vm1019, %v2884, 0.0
        %2904 = vadd.xlane.f32.xlu0 %v2903
        %v2905 = vpop.xlane.xlu0 %2904
        %v2906 = vsel %vm1019, %v2886, 0.0
        %2907 = vadd.xlane.f32.xlu0 %v2906
        %v2908 = vpop.xlane.xlu0 %2907
        %v2909 = vsel %vm1019, %v2888, 0.0
        %2910 = vadd.xlane.f32.xlu0 %v2909
        %v2911 = vpop.xlane.xlu0 %2910
        %v2912 = vsel %vm1019, %v2890, 0.0
        %2913 = vadd.xlane.f32.xlu0 %v2912
        %v2914 = vpop.xlane.xlu0 %2913
        %v2915 = vsel %vm1019, %v2892, 0.0
        %2916 = vadd.xlane.f32.xlu0 %v2915
        %v2917 = vpop.xlane.xlu0 %2916
        %v2918 = vsel %vm1019, %v2894, 0.0
        %2919 = vadd.xlane.f32.xlu0 %v2918
        %v2920 = vpop.xlane.xlu0 %2919
        %v2921 = vsel %vm1019, %v2896, 0.0
        %2922 = vadd.xlane.f32.xlu0 %v2921
        %v2923 = vpop.xlane.xlu0 %2922
        %v2924 = vrcp.pop %v2899
        %v2925 = vrcp.pop %v2902
        %v2926 = vrcp.pop %v2905
        %v2927 = vrcp.pop %v2908
        %v2928 = vrcp.pop %v2911
        %v2929 = vrcp.pop %v2914
        %v2930 = vrcp.pop %v2917
        %v2931 = vrcp.pop %v2920
        %v2932 = vrcp.pop %v2923
        %v2933 = vmul.f32 %v2880, %v2924
        %v2934 = vmul.f32 %v2882, %v2925
        %v2935 = vmul.f32 %v2884, %v2926
        %v2936 = vmul.f32 %v2886, %v2927
        %v2937 = vmul.f32 %v2888, %v2928
        %v2938 = vmul.f32 %v2890, %v2929
        %v2939 = vmul.f32 %v2892, %v2930
        %v2940 = vmul.f32 %v2894, %v2931
        %v2941 = vmul.f32 %v2896, %v2932
        %v2942 = vpack.c.bf16 %v2934, %v2933
        %v2943 = vpack.c.bf16 %v2936, %v2935
        %v2944 = vpack.c.bf16 %v2938, %v2937
        %v2945 = vpack.c.bf16 %v2940, %v2939
        %v2946 = vpack.c.bf16 %v2941, %v2941
        %2947 = vrot.lane.b32.xlu0 %v2495, 80
        %v2948 = vpop.permute.xlu0 %2947
        %2949 = vrot.lane.b32.xlu0 %v2496, 80
        %v2950 = vpop.permute.xlu0 %2949
        %2951 = vrot.lane.b32.xlu0 %v2497, 80
        %v2952 = vpop.permute.xlu0 %2951
        %2953 = vrot.lane.b32.xlu0 %v2498, 80
        %v2954 = vpop.permute.xlu0 %2953
        %2955 = vrot.lane.b32.xlu0 %v2499, 80
        %v2956 = vpop.permute.xlu0 %2955
        %v2962 = vsel %vm1019, %v2942, 0
        %v2965 = vsel %vm1019, %v2943, 0
        %v2968 = vsel %vm1019, %v2944, 0
        %v2971 = vsel %vm1019, %v2945, 0
        %v2974 = vsel %vm1019, %v2946, 0
        %v2977 = vsel %vm1379, %v2956, 0
        %2979 = vmatprep.subr.bf16.mxu0 0
        %2980 = vmatpush1.bf16.msra.mxu0 0
        %2981 = vmatprep.subr.bf16.mxu0 0
        %2982 = vmatpush1.bf16.msra.mxu0 0
        %2983 = vmatprep.subr.bf16.mxu0 0
        %2984 = vmatpush1.bf16.msra.mxu0 0
        %2985 = vmatprep.subr.bf16.mxu0 0
        %2986 = vmatpush1.bf16.msra.mxu0 %v2977
        %2987 = vmatprep.subr.bf16.mxu0 0
        %2988 = vmatpush1.bf16.msra.mxu0 %v2954
        %2989 = vmatprep.subr.bf16.mxu0 0
        %2990 = vmatpush1.bf16.msra.mxu0 %v2952
        %2991 = vmatprep.subr.bf16.mxu0 0
        %2992 = vmatpush1.bf16.msra.mxu0 %v2950
        %2993 = vmatprep.subr.bf16.mxu0 0
        %2994 = vmatpush1.bf16.msra.mxu0 %v2948
        %2995 = vmatprep.subr.bf16.mxu0 0
        %2996 = vmatpush2.bf16.msra.mxu0 0
        %2997 = vmatprep.subr.bf16.mxu0 0
        %2998 = vmatpush2.bf16.msra.mxu0 0
        %2999 = vmatprep.subr.bf16.mxu0 0
        %3000 = vmatpush2.bf16.msra.mxu0 0
        %3001 = vmatprep.subr.bf16.mxu0 0
        %3002 = vmatpush2.bf16.msra.mxu0 0
        %3003 = vmatprep.subr.bf16.mxu0 0
        %3004 = vmatpush2.bf16.msra.mxu0 0
        %3005 = vmatprep.subr.bf16.mxu0 0
        %3006 = vmatpush2.bf16.msra.mxu0 0
        %3007 = vmatprep.subr.bf16.mxu0 0
        %3008 = vmatpush2.bf16.msra.mxu0 0
        %3009 = vmatprep.subr.bf16.mxu0 0
        %3010 = vmatpush2.bf16.msra.mxu0 0
        %3011 = vmatprep.mubr.bf16.mxu0 0
        %3012 = vmatmul.mubr.bf16.gmra.mxu0 %v2962
        %v3013 = vpop.f32.mrf.mxu0
        %v3014 = vadd.f32 0.0, %v3013
        %v3015 = vpop.f32.mrf.mxu0
        %v3016 = vpop.f32.mrf.mxu0
        %v3017 = vadd.f32 0.0, %v3016
        %v3018 = vpop.f32.mrf.mxu0
        %3019 = vmatprep.mubr.bf16.mxu0 0
        %3020 = vmatmul.mubr.bf16.gmra.mxu0 %v2965
        %v3021 = vpop.f32.mrf.mxu0
        %v3022 = vadd.f32 0.0, %v3021
        %v3023 = vpop.f32.mrf.mxu0
        %v3024 = vpop.f32.mrf.mxu0
        %v3025 = vadd.f32 0.0, %v3024
        %v3026 = vpop.f32.mrf.mxu0
        %3027 = vmatprep.mubr.bf16.mxu0 0
        %3028 = vmatmul.mubr.bf16.gmra.mxu0 %v2968
        %v3029 = vpop.f32.mrf.mxu0
        %v3030 = vadd.f32 0.0, %v3029
        %v3031 = vpop.f32.mrf.mxu0
        %v3032 = vpop.f32.mrf.mxu0
        %v3033 = vadd.f32 0.0, %v3032
        %v3034 = vpop.f32.mrf.mxu0
        %3035 = vmatprep.mubr.bf16.mxu0 0
        %3036 = vmatmul.mubr.bf16.gmra.mxu0 %v2971
        %v3037 = vpop.f32.mrf.mxu0
        %v3038 = vadd.f32 0.0, %v3037
        %v3039 = vpop.f32.mrf.mxu0
        %v3040 = vpop.f32.mrf.mxu0
        %v3041 = vadd.f32 0.0, %v3040
        %v3042 = vpop.f32.mrf.mxu0
        %3043 = vmatprep.mubr.bf16.mxu0 0
        %3044 = vmatmul.mubr.bf16.gmra.mxu0 %v2974
        %v3045 = vpop.f32.mrf.mxu0
        %v3046 = vadd.f32 0.0, %v3045
        %v3047 = vpop.f32.mrf.mxu0
        %v3048 = vpop.f32.mrf.mxu0
        %v3049 = vpop.f32.mrf.mxu0
        %3050 = vdwg.mxu0
        %3051 = vrot.lane.b32.xlu0 %v2495, 96
        %v3052 = vpop.permute.xlu0 %3051
        %3053 = vrot.lane.b32.xlu0 %v2496, 96
        %v3054 = vpop.permute.xlu0 %3053
        %3055 = vrot.lane.b32.xlu0 %v2497, 96
        %v3056 = vpop.permute.xlu0 %3055
        %3057 = vrot.lane.b32.xlu0 %v2498, 96
        %v3058 = vpop.permute.xlu0 %3057
        %3059 = vrot.lane.b32.xlu0 %v2499, 96
        %v3060 = vpop.permute.xlu0 %3059
        %v3066 = vsel %vm1019, %v2716, 0
        %v3069 = vsel %vm1019, %v2717, 0
        %v3072 = vsel %vm1019, %v2718, 0
        %v3075 = vsel %vm1019, %v2719, 0
        %v3078 = vsel %vm1019, %v2720, 0
        %v3081 = vsel %vm1379, %v3060, 0
        %3083 = vmatprep.subr.bf16.mxu0 0
        %3084 = vmatpush1.bf16.msra.mxu0 0
        %3085 = vmatprep.subr.bf16.mxu0 0
        %3086 = vmatpush1.bf16.msra.mxu0 0
        %3087 = vmatprep.subr.bf16.mxu0 0
        %3088 = vmatpush1.bf16.msra.mxu0 0
        %3089 = vmatprep.subr.bf16.mxu0 0
        %3090 = vmatpush1.bf16.msra.mxu0 %v3081
        %3091 = vmatprep.subr.bf16.mxu0 0
        %3092 = vmatpush1.bf16.msra.mxu0 %v3058
        %3093 = vmatprep.subr.bf16.mxu0 0
        %3094 = vmatpush1.bf16.msra.mxu0 %v3056
        %3095 = vmatprep.subr.bf16.mxu0 0
        %3096 = vmatpush1.bf16.msra.mxu0 %v3054
        %3097 = vmatprep.subr.bf16.mxu0 0
        %3098 = vmatpush1.bf16.msra.mxu0 %v3052
        %3099 = vmatprep.subr.bf16.mxu0 0
        %3100 = vmatpush2.bf16.msra.mxu0 0
        %3101 = vmatprep.subr.bf16.mxu0 0
        %3102 = vmatpush2.bf16.msra.mxu0 0
        %3103 = vmatprep.subr.bf16.mxu0 0
        %3104 = vmatpush2.bf16.msra.mxu0 0
        %3105 = vmatprep.subr.bf16.mxu0 0
        %3106 = vmatpush2.bf16.msra.mxu0 0
        %3107 = vmatprep.subr.bf16.mxu0 0
        %3108 = vmatpush2.bf16.msra.mxu0 0
        %3109 = vmatprep.subr.bf16.mxu0 0
        %3110 = vmatpush2.bf16.msra.mxu0 0
        %3111 = vmatprep.subr.bf16.mxu0 0
        %3112 = vmatpush2.bf16.msra.mxu0 0
        %3113 = vmatprep.subr.bf16.mxu0 0
        %3114 = vmatpush2.bf16.msra.mxu0 0
        %3115 = vmatprep.mubr.bf16.mxu0 0
        %3116 = vmatmul.mubr.bf16.gmra.mxu0 %v3066
        %v3117 = vpop.f32.mrf.mxu0
        %v3118 = vadd.f32 %v3014, %v3117
        %v3119 = vpop.f32.mrf.mxu0
        %v3120 = vpop.f32.mrf.mxu0
        %v3121 = vadd.f32 %v3017, %v3120
        %v3122 = vpop.f32.mrf.mxu0
        %3123 = vmatprep.mubr.bf16.mxu0 0
        %3124 = vmatmul.mubr.bf16.gmra.mxu0 %v3069
        %v3125 = vpop.f32.mrf.mxu0
        %v3126 = vadd.f32 %v3022, %v3125
        %v3127 = vpop.f32.mrf.mxu0
        %v3128 = vpop.f32.mrf.mxu0
        %v3129 = vadd.f32 %v3025, %v3128
        %v3130 = vpop.f32.mrf.mxu0
        %3131 = vmatprep.mubr.bf16.mxu0 0
        %3132 = vmatmul.mubr.bf16.gmra.mxu0 %v3072
        %v3133 = vpop.f32.mrf.mxu0
        %v3134 = vadd.f32 %v3030, %v3133
        %v3135 = vpop.f32.mrf.mxu0
        %v3136 = vpop.f32.mrf.mxu0
        %v3137 = vadd.f32 %v3033, %v3136
        %v3138 = vpop.f32.mrf.mxu0
        %3139 = vmatprep.mubr.bf16.mxu0 0
        %3140 = vmatmul.mubr.bf16.gmra.mxu0 %v3075
        %v3141 = vpop.f32.mrf.mxu0
        %v3142 = vadd.f32 %v3038, %v3141
        %v3143 = vpop.f32.mrf.mxu0
        %v3144 = vpop.f32.mrf.mxu0
        %v3145 = vadd.f32 %v3041, %v3144
        %v3146 = vpop.f32.mrf.mxu0
        %3147 = vmatprep.mubr.bf16.mxu0 0
        %3148 = vmatmul.mubr.bf16.gmra.mxu0 %v3078
        %v3149 = vpop.f32.mrf.mxu0
        %v3150 = vadd.f32 %v3046, %v3149
        %v3151 = vpop.f32.mrf.mxu0
        %v3152 = vpop.f32.mrf.mxu0
        %v3153 = vpop.f32.mrf.mxu0
        %3154 = vdwg.mxu0
        %v3155 = vadd.f32 %v2226, %v3118
        %v3156 = vadd.f32 %v2227, %v3121
        %v3157 = vadd.f32 %v2228, %v3126
        %v3158 = vadd.f32 %v2229, %v3129
        %v3159 = vadd.f32 %v2230, %v3134
        %v3160 = vadd.f32 %v2231, %v3137
        %v3161 = vadd.f32 %v2232, %v3142
        %v3162 = vadd.f32 %v2233, %v3145
        %v3163 = vadd.f32 %v2234, %v3150
        %s3164 = scalar_lea.vmem %s7, 1
        %v3165 = vld [vmem:[%s3164] sm:$0x1]
        %v3167 = vlaneseq
        %v3168 = vshrl.u32 %v3167, 7
        %v3169 = vsub.s32 0, %v3168
        %v3170 = vrot.slane %v3165, %v3169
        %v3172 = vadd.f32 %v3155, %v3170
        %v3173 = vadd.f32 %v3156, %v3170
        %v3174 = vadd.f32 %v3157, %v3170
        %v3175 = vadd.f32 %v3158, %v3170
        %v3176 = vadd.f32 %v3159, %v3170
        %v3177 = vadd.f32 %v3160, %v3170
        %v3178 = vadd.f32 %v3161, %v3170
        %v3179 = vadd.f32 %v3162, %v3170
        %v3180 = vadd.f32 %v3163, %v3170
        %v3181 = vsel %vm637, %v3172, 0.0
        %3182 = vadd.xlane.f32.xlu0 %v3181
        %v3183 = vpop.xlane.xlu0 %3182
        %v3184 = vsel %vm637, %v3173, 0.0
        %3185 = vadd.xlane.f32.xlu0 %v3184
        %v3186 = vpop.xlane.xlu0 %3185
        %v3187 = vsel %vm637, %v3174, 0.0
        %3188 = vadd.xlane.f32.xlu0 %v3187
        %v3189 = vpop.xlane.xlu0 %3188
        %v3190 = vsel %vm637, %v3175, 0.0
        %3191 = vadd.xlane.f32.xlu0 %v3190
        %v3192 = vpop.xlane.xlu0 %3191
        %v3193 = vsel %vm637, %v3176, 0.0
        %3194 = vadd.xlane.f32.xlu0 %v3193
        %v3195 = vpop.xlane.xlu0 %3194
        %v3196 = vsel %vm637, %v3177, 0.0
        %3197 = vadd.xlane.f32.xlu0 %v3196
        %v3198 = vpop.xlane.xlu0 %3197
        %v3199 = vsel %vm637, %v3178, 0.0
        %3200 = vadd.xlane.f32.xlu0 %v3199
        %v3201 = vpop.xlane.xlu0 %3200
        %v3202 = vsel %vm637, %v3179, 0.0
        %3203 = vadd.xlane.f32.xlu0 %v3202
        %v3204 = vpop.xlane.xlu0 %3203
        %v3205 = vsel %vm637, %v3180, 0.0
        %3206 = vadd.xlane.f32.xlu0 %v3205
        %v3207 = vpop.xlane.xlu0 %3206
        %v3208 = vmul.f32 %v3183, %v665
        %v3209 = vmul.f32 %v3186, %v665
        %v3210 = vmul.f32 %v3189, %v665
        %v3211 = vmul.f32 %v3192, %v665
        %v3212 = vmul.f32 %v3195, %v665
        %v3213 = vmul.f32 %v3198, %v665
        %v3214 = vmul.f32 %v3201, %v665
        %v3215 = vmul.f32 %v3204, %v665
        %v3216 = vmul.f32 %v3207, %v665
        %v3217 = vsub.f32 %v3172, %v3208
        %v3218 = vsub.f32 %v3173, %v3209
        %v3219 = vsub.f32 %v3174, %v3210
        %v3220 = vsub.f32 %v3175, %v3211
        %v3221 = vsub.f32 %v3176, %v3212
        %v3222 = vsub.f32 %v3177, %v3213
        %v3223 = vsub.f32 %v3178, %v3214
        %v3224 = vsub.f32 %v3179, %v3215
        %v3225 = vsub.f32 %v3180, %v3216
        %v3226 = vmul.f32 %v3217, %v3217
        %v3227 = vmul.f32 %v3218, %v3218
        %v3228 = vmul.f32 %v3219, %v3219
        %v3229 = vmul.f32 %v3220, %v3220
        %v3230 = vmul.f32 %v3221, %v3221
        %v3231 = vmul.f32 %v3222, %v3222
        %v3232 = vmul.f32 %v3223, %v3223
        %v3233 = vmul.f32 %v3224, %v3224
        %v3234 = vmul.f32 %v3225, %v3225
        %v3235 = vsel %vm637, %v3226, 0.0
        %3236 = vadd.xlane.f32.xlu0 %v3235
        %v3237 = vpop.xlane.xlu0 %3236
        %v3238 = vsel %vm637, %v3227, 0.0
        %3239 = vadd.xlane.f32.xlu0 %v3238
        %v3240 = vpop.xlane.xlu0 %3239
        %v3241 = vsel %vm637, %v3228, 0.0
        %3242 = vadd.xlane.f32.xlu0 %v3241
        %v3243 = vpop.xlane.xlu0 %3242
        %v3244 = vsel %vm637, %v3229, 0.0
        %3245 = vadd.xlane.f32.xlu0 %v3244
        %v3246 = vpop.xlane.xlu0 %3245
        %v3247 = vsel %vm637, %v3230, 0.0
        %3248 = vadd.xlane.f32.xlu0 %v3247
        %v3249 = vpop.xlane.xlu0 %3248
        %v3250 = vsel %vm637, %v3231, 0.0
        %3251 = vadd.xlane.f32.xlu0 %v3250
        %v3252 = vpop.xlane.xlu0 %3251
        %v3253 = vsel %vm637, %v3232, 0.0
        %3254 = vadd.xlane.f32.xlu0 %v3253
        %v3255 = vpop.xlane.xlu0 %3254
        %v3256 = vsel %vm637, %v3233, 0.0
        %3257 = vadd.xlane.f32.xlu0 %v3256
        %v3258 = vpop.xlane.xlu0 %3257
        %v3259 = vsel %vm637, %v3234, 0.0
        %3260 = vadd.xlane.f32.xlu0 %v3259
        %v3261 = vpop.xlane.xlu0 %3260
        %v3262 = vmul.f32 %v3237, %v665
        %v3263 = vmul.f32 %v3240, %v665
        %v3264 = vmul.f32 %v3243, %v665
        %v3265 = vmul.f32 %v3246, %v665
        %v3266 = vmul.f32 %v3249, %v665
        %v3267 = vmul.f32 %v3252, %v665
        %v3268 = vmul.f32 %v3255, %v665
        %v3269 = vmul.f32 %v3258, %v665
        %v3270 = vmul.f32 %v3261, %v665
        %v3271 = vadd.f32 %v3262, 1e-06
        %v3272 = vadd.f32 %v3263, 1e-06
        %v3273 = vadd.f32 %v3264, 1e-06
        %v3274 = vadd.f32 %v3265, 1e-06
        %v3275 = vadd.f32 %v3266, 1e-06
        %v3276 = vadd.f32 %v3267, 1e-06
        %v3277 = vadd.f32 %v3268, 1e-06
        %v3278 = vadd.f32 %v3269, 1e-06
        %v3279 = vadd.f32 %v3270, 1e-06
        %v3280 = vrsqrt.pop %v3271
        %v3281 = vrsqrt.pop %v3272
        %v3282 = vrsqrt.pop %v3273
        %v3283 = vrsqrt.pop %v3274
        %v3284 = vrsqrt.pop %v3275
        %v3285 = vrsqrt.pop %v3276
        %v3286 = vrsqrt.pop %v3277
        %v3287 = vrsqrt.pop %v3278
        %v3288 = vrsqrt.pop %v3279
        %v3289 = vmul.f32 %v3217, %v3280
        %v3290 = vmul.f32 %v3218, %v3281
        %v3291 = vmul.f32 %v3219, %v3282
        %v3292 = vmul.f32 %v3220, %v3283
        %v3293 = vmul.f32 %v3221, %v3284
        %v3294 = vmul.f32 %v3222, %v3285
        %v3295 = vmul.f32 %v3223, %v3286
        %v3296 = vmul.f32 %v3224, %v3287
        %v3297 = vmul.f32 %v3225, %v3288
        %s3298 = scalar_lea.vmem %s4, 3
        %v3299 = vld [vmem:[%s3298] sm:$0x1]
        %v3301 = vlaneseq
        %v3302 = vshrl.u32 %v3301, 7
        %v3303 = vsub.s32 0, %v3302
        %v3304 = vrot.slane %v3299, %v3303
        %v3306 = vmul.f32 %v3289, %v3304
        %v3307 = vmul.f32 %v3290, %v3304
        %v3308 = vmul.f32 %v3291, %v3304
        %v3309 = vmul.f32 %v3292, %v3304
        %v3310 = vmul.f32 %v3293, %v3304
        %v3311 = vmul.f32 %v3294, %v3304
        %v3312 = vmul.f32 %v3295, %v3304
        %v3313 = vmul.f32 %v3296, %v3304
        %v3314 = vmul.f32 %v3297, %v3304
        %s3315 = scalar_lea.vmem %s4, 8
        %v3316 = vld [vmem:[%s3315] sm:$0x1]
        %v3318 = vlaneseq
        %v3319 = vshrl.u32 %v3318, 7
        %v3320 = vsub.s32 0, %v3319
        %v3321 = vrot.slane %v3316, %v3320
        %v3323 = vadd.f32 %v3306, %v3321
        %v3324 = vadd.f32 %v3307, %v3321
        %v3325 = vadd.f32 %v3308, %v3321
        %v3326 = vadd.f32 %v3309, %v3321
        %v3327 = vadd.f32 %v3310, %v3321
        %v3328 = vadd.f32 %v3311, %v3321
        %v3329 = vadd.f32 %v3312, %v3321
        %v3330 = vadd.f32 %v3313, %v3321
        %v3331 = vadd.f32 %v3314, %v3321
        %v3332 = vpack.c.bf16 %v3324, %v3323
        %v3333 = vpack.c.bf16 %v3326, %v3325
        %v3334 = vpack.c.bf16 %v3328, %v3327
        %v3335 = vpack.c.bf16 %v3330, %v3329
        %v3336 = vpack.c.bf16 %v3331, %v3331
        %s3337 = scalar_lea.vmem %s8, 8
        %v3338 = vld [vmem:[%s3337] sm:$0xf]
        %v3339 = vld [vmem:[%s3337 + $0x4] sm:$0xf]
        %s3340 = scalar_lea.vmem %s9, 1
        %v3341 = vld [vmem:[%s3340] sm:$0x1]
        %v3343 = vlaneseq
        %v3344 = vshrl.u32 %v3343, 7
        %v3345 = vsub.s32 0, %v3344
        %v3346 = vrot.slane %v3341, %v3345
        %v3350 = vunpack.c.l.b16 %v3338
        %v3351 = vunpack.c.l.b16 %v3339
        %v3352 = vpack.c.b16 %v3351, %v3350
        %v3355 = vsel %vm637, %v3332, 0
        %v3358 = vsel %vm637, %v3333, 0
        %v3361 = vsel %vm637, %v3334, 0
        %v3364 = vsel %vm637, %v3335, 0
        %v3367 = vsel %vm637, %v3336, 0
        %3369 = vmatprep.subr.bf16.mxu0 0
        %3370 = vmatpush1.bf16.msra.mxu0 0
        %3371 = vmatprep.subr.bf16.mxu0 0
        %3372 = vmatpush1.bf16.msra.mxu0 0
        %3373 = vmatprep.subr.bf16.mxu0 0
        %3374 = vmatpush1.bf16.msra.mxu0 0
        %3375 = vmatprep.subr.bf16.mxu0 0
        %3376 = vmatpush1.bf16.msra.mxu0 0
        %3377 = vmatprep.subr.bf16.mxu0 0
        %3378 = vmatpush1.bf16.msra.mxu0 0
        %3379 = vmatprep.subr.bf16.mxu0 0
        %3380 = vmatpush1.bf16.msra.mxu0 0
        %3381 = vmatprep.subr.bf16.mxu0 0
        %3382 = vmatpush1.bf16.msra.mxu0 0
        %3383 = vmatprep.subr.bf16.mxu0 0
        %3384 = vmatpush1.bf16.msra.mxu0 %v3352
        %3385 = vmatprep.subr.bf16.mxu0 0
        %3386 = vmatpush2.bf16.msra.mxu0 0
        %3387 = vmatprep.subr.bf16.mxu0 0
        %3388 = vmatpush2.bf16.msra.mxu0 0
        %3389 = vmatprep.subr.bf16.mxu0 0
        %3390 = vmatpush2.bf16.msra.mxu0 0
        %3391 = vmatprep.subr.bf16.mxu0 0
        %3392 = vmatpush2.bf16.msra.mxu0 0
        %3393 = vmatprep.subr.bf16.mxu0 0
        %3394 = vmatpush2.bf16.msra.mxu0 0
        %3395 = vmatprep.subr.bf16.mxu0 0
        %3396 = vmatpush2.bf16.msra.mxu0 0
        %3397 = vmatprep.subr.bf16.mxu0 0
        %3398 = vmatpush2.bf16.msra.mxu0 0
        %3399 = vmatprep.subr.bf16.mxu0 0
        %3400 = vmatpush2.bf16.msra.mxu0 0
        %3401 = vmatprep.mubr.bf16.mxu0 0
        %3402 = vmatmul.mubr.bf16.gmra.mxu0 %v3355
        %v3403 = vpop.f32.mrf.mxu0
        %v3404 = vadd.f32 %v3346, %v3403
        %v3405 = vpop.f32.mrf.mxu0
        %v3406 = vpop.f32.mrf.mxu0
        %v3407 = vadd.f32 %v3346, %v3406
        %v3408 = vpop.f32.mrf.mxu0
        %3409 = vmatprep.mubr.bf16.mxu0 0
        %3410 = vmatmul.mubr.bf16.gmra.mxu0 %v3358
        %v3411 = vpop.f32.mrf.mxu0
        %v3412 = vadd.f32 %v3346, %v3411
        %v3413 = vpop.f32.mrf.mxu0
        %v3414 = vpop.f32.mrf.mxu0
        %v3415 = vadd.f32 %v3346, %v3414
        %v3416 = vpop.f32.mrf.mxu0
        %3417 = vmatprep.mubr.bf16.mxu0 0
        %3418 = vmatmul.mubr.bf16.gmra.mxu0 %v3361
        %v3419 = vpop.f32.mrf.mxu0
        %v3420 = vadd.f32 %v3346, %v3419
        %v3421 = vpop.f32.mrf.mxu0
        %v3422 = vpop.f32.mrf.mxu0
        %v3423 = vadd.f32 %v3346, %v3422
        %v3424 = vpop.f32.mrf.mxu0
        %3425 = vmatprep.mubr.bf16.mxu0 0
        %3426 = vmatmul.mubr.bf16.gmra.mxu0 %v3364
        %v3427 = vpop.f32.mrf.mxu0
        %v3428 = vadd.f32 %v3346, %v3427
        %v3429 = vpop.f32.mrf.mxu0
        %v3430 = vpop.f32.mrf.mxu0
        %v3431 = vadd.f32 %v3346, %v3430
        %v3432 = vpop.f32.mrf.mxu0
        %3433 = vmatprep.mubr.bf16.mxu0 0
        %3434 = vmatmul.mubr.bf16.gmra.mxu0 %v3367
        %v3435 = vpop.f32.mrf.mxu0
        %v3436 = vadd.f32 %v3346, %v3435
        %v3437 = vpop.f32.mrf.mxu0
        %v3438 = vpop.f32.mrf.mxu0
        %v3439 = vpop.f32.mrf.mxu0
        %3440 = vdwg.mxu0
        %v3441 = vmul.f32 %v3404, 0.5
        %v3442 = vmul.f32 %v3407, 0.5
        %v3443 = vmul.f32 %v3412, 0.5
        %v3444 = vmul.f32 %v3415, 0.5
        %v3445 = vmul.f32 %v3420, 0.5
        %v3446 = vmul.f32 %v3423, 0.5
        %v3447 = vmul.f32 %v3428, 0.5
        %v3448 = vmul.f32 %v3431, 0.5
        %v3449 = vmul.f32 %v3436, 0.5
        %v3450 = vmul.f32 %v3404, 0.70710677
        %v3451 = vmul.f32 %v3407, 0.70710677
        %v3452 = vmul.f32 %v3412, 0.70710677
        %v3453 = vmul.f32 %v3415, 0.70710677
        %v3454 = vmul.f32 %v3420, 0.70710677
        %v3455 = vmul.f32 %v3423, 0.70710677
        %v3456 = vmul.f32 %v3428, 0.70710677
        %v3457 = vmul.f32 %v3431, 0.70710677
        %v3458 = vmul.f32 %v3436, 0.70710677
        %vm3459 = vcmp.ge.f32.partialorder %v3450, 0.0
        %vm3460 = vcmp.ge.f32.partialorder %v3451, 0.0
        %vm3461 = vcmp.ge.f32.partialorder %v3452, 0.0
        %vm3462 = vcmp.ge.f32.partialorder %v3453, 0.0
        %vm3463 = vcmp.ge.f32.partialorder %v3454, 0.0
        %vm3464 = vcmp.ge.f32.partialorder %v3455, 0.0
        %vm3465 = vcmp.ge.f32.partialorder %v3456, 0.0
        %vm3466 = vcmp.ge.f32.partialorder %v3457, 0.0
        %vm3467 = vcmp.ge.f32.partialorder %v3458, 0.0
        %v3468 = vsel %vm3459, 1.0, -1.0
        %v3469 = vsel %vm3460, 1.0, -1.0
        %v3470 = vsel %vm3461, 1.0, -1.0
        %v3471 = vsel %vm3462, 1.0, -1.0
        %v3472 = vsel %vm3463, 1.0, -1.0
        %v3473 = vsel %vm3464, 1.0, -1.0
        %v3474 = vsel %vm3465, 1.0, -1.0
        %v3475 = vsel %vm3466, 1.0, -1.0
        %v3476 = vsel %vm3467, 1.0, -1.0
        %v3477 = vand.u32 2147483647, %v3450
        %v3478 = vand.u32 2147483647, %v3451
        %v3479 = vand.u32 2147483647, %v3452
        %v3480 = vand.u32 2147483647, %v3453
        %v3481 = vand.u32 2147483647, %v3454
        %v3482 = vand.u32 2147483647, %v3455
        %v3483 = vand.u32 2147483647, %v3456
        %v3484 = vand.u32 2147483647, %v3457
        %v3485 = vand.u32 2147483647, %v3458
        %v3486 = vmul.f32 %v3477, 0.3275911
        %v3487 = vmul.f32 %v3478, 0.3275911
        %v3488 = vmul.f32 %v3479, 0.3275911
        %v3489 = vmul.f32 %v3480, 0.3275911
        %v3490 = vmul.f32 %v3481, 0.3275911
        %v3491 = vmul.f32 %v3482, 0.3275911
        %v3492 = vmul.f32 %v3483, 0.3275911
        %v3493 = vmul.f32 %v3484, 0.3275911
        %v3494 = vmul.f32 %v3485, 0.3275911
        %v3495 = vadd.f32 %v3486, 1.0
        %v3496 = vadd.f32 %v3487, 1.0
        %v3497 = vadd.f32 %v3488, 1.0
        %v3498 = vadd.f32 %v3489, 1.0
        %v3499 = vadd.f32 %v3490, 1.0
        %v3500 = vadd.f32 %v3491, 1.0
        %v3501 = vadd.f32 %v3492, 1.0
        %v3502 = vadd.f32 %v3493, 1.0
        %v3503 = vadd.f32 %v3494, 1.0
        %v3504 = vrcp.pop %v3495
        %v3505 = vmul.f32 1.0, %v3504
        %v3506 = vrcp.pop %v3496
        %v3507 = vmul.f32 1.0, %v3506
        %v3508 = vrcp.pop %v3497
        %v3509 = vmul.f32 1.0, %v3508
        %v3510 = vrcp.pop %v3498
        %v3511 = vmul.f32 1.0, %v3510
        %v3512 = vrcp.pop %v3499
        %v3513 = vmul.f32 1.0, %v3512
        %v3514 = vrcp.pop %v3500
        %v3515 = vmul.f32 1.0, %v3514
        %v3516 = vrcp.pop %v3501
        %v3517 = vmul.f32 1.0, %v3516
        %v3518 = vrcp.pop %v3502
        %v3519 = vmul.f32 1.0, %v3518
        %v3520 = vrcp.pop %v3503
        %v3521 = vmul.f32 1.0, %v3520
        %v3522 = vmul.f32 %v3505, 1.0614054
        %v3523 = vmul.f32 %v3507, 1.0614054
        %v3524 = vmul.f32 %v3509, 1.0614054
        %v3525 = vmul.f32 %v3511, 1.0614054
        %v3526 = vmul.f32 %v3513, 1.0614054
        %v3527 = vmul.f32 %v3515, 1.0614054
        %v3528 = vmul.f32 %v3517, 1.0614054
        %v3529 = vmul.f32 %v3519, 1.0614054
        %v3530 = vmul.f32 %v3521, 1.0614054
        %v3531 = vadd.f32 %v3522, -1.4531521
        %v3532 = vadd.f32 %v3523, -1.4531521
        %v3533 = vadd.f32 %v3524, -1.4531521
        %v3534 = vadd.f32 %v3525, -1.4531521
        %v3535 = vadd.f32 %v3526, -1.4531521
        %v3536 = vadd.f32 %v3527, -1.4531521
        %v3537 = vadd.f32 %v3528, -1.4531521
        %v3538 = vadd.f32 %v3529, -1.4531521
        %v3539 = vadd.f32 %v3530, -1.4531521
        %v3540 = vmul.f32 %v3505, %v3531
        %v3541 = vmul.f32 %v3507, %v3532
        %v3542 = vmul.f32 %v3509, %v3533
        %v3543 = vmul.f32 %v3511, %v3534
        %v3544 = vmul.f32 %v3513, %v3535
        %v3545 = vmul.f32 %v3515, %v3536
        %v3546 = vmul.f32 %v3517, %v3537
        %v3547 = vmul.f32 %v3519, %v3538
        %v3548 = vmul.f32 %v3521, %v3539
        %v3549 = vadd.f32 %v3540, 1.4214138
        %v3550 = vadd.f32 %v3541, 1.4214138
        %v3551 = vadd.f32 %v3542, 1.4214138
        %v3552 = vadd.f32 %v3543, 1.4214138
        %v3553 = vadd.f32 %v3544, 1.4214138
        %v3554 = vadd.f32 %v3545, 1.4214138
        %v3555 = vadd.f32 %v3546, 1.4214138
        %v3556 = vadd.f32 %v3547, 1.4214138
        %v3557 = vadd.f32 %v3548, 1.4214138
        %v3558 = vmul.f32 %v3505, %v3549
        %v3559 = vmul.f32 %v3507, %v3550
        %v3560 = vmul.f32 %v3509, %v3551
        %v3561 = vmul.f32 %v3511, %v3552
        %v3562 = vmul.f32 %v3513, %v3553
        %v3563 = vmul.f32 %v3515, %v3554
        %v3564 = vmul.f32 %v3517, %v3555
        %v3565 = vmul.f32 %v3519, %v3556
        %v3566 = vmul.f32 %v3521, %v3557
        %v3567 = vadd.f32 %v3558, -0.28449672
        %v3568 = vadd.f32 %v3559, -0.28449672
        %v3569 = vadd.f32 %v3560, -0.28449672
        %v3570 = vadd.f32 %v3561, -0.28449672
        %v3571 = vadd.f32 %v3562, -0.28449672
        %v3572 = vadd.f32 %v3563, -0.28449672
        %v3573 = vadd.f32 %v3564, -0.28449672
        %v3574 = vadd.f32 %v3565, -0.28449672
        %v3575 = vadd.f32 %v3566, -0.28449672
        %v3576 = vmul.f32 %v3505, %v3567
        %v3577 = vmul.f32 %v3507, %v3568
        %v3578 = vmul.f32 %v3509, %v3569
        %v3579 = vmul.f32 %v3511, %v3570
        %v3580 = vmul.f32 %v3513, %v3571
        %v3581 = vmul.f32 %v3515, %v3572
        %v3582 = vmul.f32 %v3517, %v3573
        %v3583 = vmul.f32 %v3519, %v3574
        %v3584 = vmul.f32 %v3521, %v3575
        %v3585 = vadd.f32 %v3576, 0.2548296
        %v3586 = vadd.f32 %v3577, 0.2548296
        %v3587 = vadd.f32 %v3578, 0.2548296
        %v3588 = vadd.f32 %v3579, 0.2548296
        %v3589 = vadd.f32 %v3580, 0.2548296
        %v3590 = vadd.f32 %v3581, 0.2548296
        %v3591 = vadd.f32 %v3582, 0.2548296
        %v3592 = vadd.f32 %v3583, 0.2548296
        %v3593 = vadd.f32 %v3584, 0.2548296
        %v3594 = vmul.f32 %v3505, %v3585
        %v3595 = vmul.f32 %v3507, %v3586
        %v3596 = vmul.f32 %v3509, %v3587
        %v3597 = vmul.f32 %v3511, %v3588
        %v3598 = vmul.f32 %v3513, %v3589
        %v3599 = vmul.f32 %v3515, %v3590
        %v3600 = vmul.f32 %v3517, %v3591
        %v3601 = vmul.f32 %v3519, %v3592
        %v3602 = vmul.f32 %v3521, %v3593
        %v3603 = vsub.f32 0.0, %v3477
        %v3604 = vsub.f32 0.0, %v3478
        %v3605 = vsub.f32 0.0, %v3479
        %v3606 = vsub.f32 0.0, %v3480
        %v3607 = vsub.f32 0.0, %v3481
        %v3608 = vsub.f32 0.0, %v3482
        %v3609 = vsub.f32 0.0, %v3483
        %v3610 = vsub.f32 0.0, %v3484
        %v3611 = vsub.f32 0.0, %v3485
        %v3612 = vmul.f32 %v3603, %v3477
        %v3613 = vmul.f32 %v3604, %v3478
        %v3614 = vmul.f32 %v3605, %v3479
        %v3615 = vmul.f32 %v3606, %v3480
        %v3616 = vmul.f32 %v3607, %v3481
        %v3617 = vmul.f32 %v3608, %v3482
        %v3618 = vmul.f32 %v3609, %v3483
        %v3619 = vmul.f32 %v3610, %v3484
        %v3620 = vmul.f32 %v3611, %v3485
        %v3621 = vmul.f32 %v3612, 1.442695
        %v3622 = vpow.pop %v3621
        %v3623 = vmul.f32 %v3613, 1.442695
        %v3624 = vpow.pop %v3623
        %v3625 = vmul.f32 %v3614, 1.442695
        %v3626 = vpow.pop %v3625
        %v3627 = vmul.f32 %v3615, 1.442695
        %v3628 = vpow.pop %v3627
        %v3629 = vmul.f32 %v3616, 1.442695
        %v3630 = vpow.pop %v3629
        %v3631 = vmul.f32 %v3617, 1.442695
        %v3632 = vpow.pop %v3631
        %v3633 = vmul.f32 %v3618, 1.442695
        %v3634 = vpow.pop %v3633
        %v3635 = vmul.f32 %v3619, 1.442695
        %v3636 = vpow.pop %v3635
        %v3637 = vmul.f32 %v3620, 1.442695
        %v3638 = vpow.pop %v3637
        %v3639 = vmul.f32 %v3594, %v3622
        %v3640 = vmul.f32 %v3595, %v3624
        %v3641 = vmul.f32 %v3596, %v3626
        %v3642 = vmul.f32 %v3597, %v3628
        %v3643 = vmul.f32 %v3598, %v3630
        %v3644 = vmul.f32 %v3599, %v3632
        %v3645 = vmul.f32 %v3600, %v3634
        %v3646 = vmul.f32 %v3601, %v3636
        %v3647 = vmul.f32 %v3602, %v3638
        %v3648 = vsub.f32 1.0, %v3639
        %v3649 = vsub.f32 1.0, %v3640
        %v3650 = vsub.f32 1.0, %v3641
        %v3651 = vsub.f32 1.0, %v3642
        %v3652 = vsub.f32 1.0, %v3643
        %v3653 = vsub.f32 1.0, %v3644
        %v3654 = vsub.f32 1.0, %v3645
        %v3655 = vsub.f32 1.0, %v3646
        %v3656 = vsub.f32 1.0, %v3647
        %v3657 = vmul.f32 %v3468, %v3648
        %v3658 = vmul.f32 %v3469, %v3649
        %v3659 = vmul.f32 %v3470, %v3650
        %v3660 = vmul.f32 %v3471, %v3651
        %v3661 = vmul.f32 %v3472, %v3652
        %v3662 = vmul.f32 %v3473, %v3653
        %v3663 = vmul.f32 %v3474, %v3654
        %v3664 = vmul.f32 %v3475, %v3655
        %v3665 = vmul.f32 %v3476, %v3656
        %v3666 = vadd.f32 %v3657, 1.0
        %v3667 = vadd.f32 %v3658, 1.0
        %v3668 = vadd.f32 %v3659, 1.0
        %v3669 = vadd.f32 %v3660, 1.0
        %v3670 = vadd.f32 %v3661, 1.0
        %v3671 = vadd.f32 %v3662, 1.0
        %v3672 = vadd.f32 %v3663, 1.0
        %v3673 = vadd.f32 %v3664, 1.0
        %v3674 = vadd.f32 %v3665, 1.0
        %v3675 = vmul.f32 %v3441, %v3666
        %v3676 = vmul.f32 %v3442, %v3667
        %v3677 = vmul.f32 %v3443, %v3668
        %v3678 = vmul.f32 %v3444, %v3669
        %v3679 = vmul.f32 %v3445, %v3670
        %v3680 = vmul.f32 %v3446, %v3671
        %v3681 = vmul.f32 %v3447, %v3672
        %v3682 = vmul.f32 %v3448, %v3673
        %v3683 = vmul.f32 %v3449, %v3674
        %v3684 = vpack.c.bf16 %v3676, %v3675
        %v3685 = vpack.c.bf16 %v3678, %v3677
        %v3686 = vpack.c.bf16 %v3680, %v3679
        %v3687 = vpack.c.bf16 %v3682, %v3681
        %v3688 = vpack.c.bf16 %v3683, %v3683
        %s3689 = scalar_lea.vmem %s10, 32
        %v3690 = vld [vmem:[%s3689] sm:$0xf]
        %v3691 = vld [vmem:[%s3689 + $0x4] sm:$0xf]
        %v3692 = vld [vmem:[%s3689 + $0x8] sm:$0xf]
        %v3693 = vld [vmem:[%s3689 + $0xc] sm:$0xf]
        %v3694 = vld [vmem:[%s3689 + $0x10] sm:$0xf]
        %v3695 = vld [vmem:[%s3689 + $0x14] sm:$0xf]
        %v3696 = vld [vmem:[%s3689 + $0x18] sm:$0xf]
        %v3697 = vld [vmem:[%s3689 + $0x1c] sm:$0xf]
        %v3706 = vunpack.c.l.b16 %v3690
        %v3707 = vunpack.c.l.b16 %v3691
        %v3708 = vunpack.c.l.b16 %v3692
        %v3709 = vunpack.c.l.b16 %v3693
        %v3710 = vunpack.c.l.b16 %v3694
        %v3711 = vunpack.c.l.b16 %v3695
        %v3712 = vunpack.c.l.b16 %v3696
        %v3713 = vunpack.c.l.b16 %v3697
        %v3714 = vpack.c.b16 %v3707, %v3706
        %v3715 = vpack.c.b16 %v3709, %v3708
        %v3716 = vpack.c.b16 %v3711, %v3710
        %v3717 = vpack.c.b16 %v3713, %v3712
        %v3723 = vsel %vm2122, %v3684, 0
        %v3726 = vsel %vm2122, %v3685, 0
        %v3729 = vsel %vm2122, %v3686, 0
        %v3732 = vsel %vm2122, %v3687, 0
        %v3735 = vsel %vm2122, %v3688, 0
        %3737 = vmatprep.subr.bf16.mxu0 0
        %3738 = vmatpush1.bf16.msra.mxu0 0
        %3739 = vmatprep.subr.bf16.mxu0 0
        %3740 = vmatpush1.bf16.msra.mxu0 0
        %3741 = vmatprep.subr.bf16.mxu0 0
        %3742 = vmatpush1.bf16.msra.mxu0 0
        %3743 = vmatprep.subr.bf16.mxu0 0
        %3744 = vmatpush1.bf16.msra.mxu0 0
        %3745 = vmatprep.subr.bf16.mxu0 0
        %3746 = vmatpush1.bf16.msra.mxu0 %v3717
        %3747 = vmatprep.subr.bf16.mxu0 0
        %3748 = vmatpush1.bf16.msra.mxu0 %v3716
        %3749 = vmatprep.subr.bf16.mxu0 0
        %3750 = vmatpush1.bf16.msra.mxu0 %v3715
        %3751 = vmatprep.subr.bf16.mxu0 0
        %3752 = vmatpush1.bf16.msra.mxu0 %v3714
        %3753 = vmatprep.subr.bf16.mxu0 0
        %3754 = vmatpush2.bf16.msra.mxu0 0
        %3755 = vmatprep.subr.bf16.mxu0 0
        %3756 = vmatpush2.bf16.msra.mxu0 0
        %3757 = vmatprep.subr.bf16.mxu0 0
        %3758 = vmatpush2.bf16.msra.mxu0 0
        %3759 = vmatprep.subr.bf16.mxu0 0
        %3760 = vmatpush2.bf16.msra.mxu0 0
        %3761 = vmatprep.subr.bf16.mxu0 0
        %3762 = vmatpush2.bf16.msra.mxu0 0
        %3763 = vmatprep.subr.bf16.mxu0 0
        %3764 = vmatpush2.bf16.msra.mxu0 0
        %3765 = vmatprep.subr.bf16.mxu0 0
        %3766 = vmatpush2.bf16.msra.mxu0 0
        %3767 = vmatprep.subr.bf16.mxu0 0
        %3768 = vmatpush2.bf16.msra.mxu0 0
        %3769 = vmatprep.mubr.bf16.mxu0 0
        %3770 = vmatmul.mubr.bf16.gmra.mxu0 %v3723
        %v3771 = vpop.f32.mrf.mxu0
        %v3772 = vadd.f32 0.0, %v3771
        %v3773 = vpop.f32.mrf.mxu0
        %v3774 = vpop.f32.mrf.mxu0
        %v3775 = vpop.f32.mrf.mxu0
        %3776 = vmatprep.mubr.bf16.mxu0 0
        %3777 = vmatmul.mubr.bf16.gmra.mxu0 %v3726
        %v3778 = vpop.f32.mrf.mxu0
        %v3779 = vpop.f32.mrf.mxu0
        %v3780 = vpop.f32.mrf.mxu0
        %v3781 = vpop.f32.mrf.mxu0
        %3782 = vmatprep.mubr.bf16.mxu0 0
        %3783 = vmatmul.mubr.bf16.gmra.mxu0 %v3729
        %v3784 = vpop.f32.mrf.mxu0
        %v3785 = vpop.f32.mrf.mxu0
        %v3786 = vpop.f32.mrf.mxu0
        %v3787 = vpop.f32.mrf.mxu0
        %3788 = vmatprep.mubr.bf16.mxu0 0
        %3789 = vmatmul.mubr.bf16.gmra.mxu0 %v3732
        %v3790 = vpop.f32.mrf.mxu0
        %v3791 = vpop.f32.mrf.mxu0
        %v3792 = vpop.f32.mrf.mxu0
        %v3793 = vpop.f32.mrf.mxu0
        %3794 = vmatprep.mubr.bf16.mxu0 0
        %3795 = vmatmul.mubr.bf16.gmra.mxu0 %v3735
        %v3796 = vpop.f32.mrf.mxu0
        %v3797 = vpop.f32.mrf.mxu0
        %v3798 = vpop.f32.mrf.mxu0
        %v3799 = vpop.f32.mrf.mxu0
        %3800 = vdwg.mxu0
        %v3801 = vadd.f32 %v3172, %v3772
        %s3802 = scalar_lea.vmem %s11, 1
        %v3803 = vld [vmem:[%s3802] sm:$0x1]
        %v3805 = vlaneseq
        %v3806 = vshrl.u32 %v3805, 7
        %v3807 = vsub.s32 0, %v3806
        %v3808 = vrot.slane %v3803, %v3807
        %v3810 = vadd.f32 %v3801, %v3808
        %vm3811 = vcmask 122880
        %v3812 = vsel %vm3811, %v3810, 0.0
        %3813 = vadd.xlane.f32.xlu0 %v3812
        %v3814 = vpop.xlane.xlu0 %3813
        %v3815 = vmul.f32 %v3814, %v665
        %v3816 = vsub.f32 %v3810, %v3815
        %v3817 = vmul.f32 %v3816, %v3816
        %v3818 = vsel %vm3811, %v3817, 0.0
        %3819 = vadd.xlane.f32.xlu0 %v3818
        %v3820 = vpop.xlane.xlu0 %3819
        %v3821 = vmul.f32 %v3820, %v665
        %v3822 = vadd.f32 %v3821, 1e-06
        %v3823 = vrsqrt.pop %v3822
        %v3824 = vmul.f32 %v3816, %v3823
        %s3825 = scalar_lea.vmem %s4, 4
        %v3826 = vld [vmem:[%s3825] sm:$0x1]
        %v3827 = vmul.f32 %v3824, %v3826
        %s3828 = scalar_lea.vmem %s4, 9
        %v3829 = vld [vmem:[%s3828] sm:$0x1]
        %v3830 = vadd.f32 %v3827, %v3829
        %v3831 = vld [vmem:[%s12] sm:$0xff]
        %v3832 = vld [vmem:[%s12 + $0x8] sm:$0xff]
        %v3833 = vld [vmem:[%s13] sm:$0x1]
        %v3835 = vsel %vm637, %v3830, 0
        %3837 = vmatprep.subr.mxu0 0.0
        %3838 = vmatpush1.msra.mxu0 0.0
        %3839 = vmatprep.subr.mxu0 0.0
        %3840 = vmatpush1.msra.mxu0 0.0
        %3841 = vmatprep.subr.mxu0 0.0
        %3842 = vmatpush1.msra.mxu0 0.0
        %3843 = vmatprep.subr.mxu0 0.0
        %3844 = vmatpush1.msra.mxu0 0.0
        %3845 = vmatprep.subr.mxu0 0.0
        %3846 = vmatpush1.msra.mxu0 0.0
        %3847 = vmatprep.subr.mxu0 0.0
        %3848 = vmatpush1.msra.mxu0 0.0
        %3849 = vmatprep.subr.mxu0 0.0
        %3850 = vmatpush1.msra.mxu0 0.0
        %3851 = vmatprep.subr.mxu0 0.0
        %3852 = vmatpush1.msra.mxu0 0.0
        %3853 = vmatprep.subr.mxu0 0.0
        %3854 = vmatpush1.msra.mxu0 0.0
        %3855 = vmatprep.subr.mxu0 0.0
        %3856 = vmatpush1.msra.mxu0 0.0
        %3857 = vmatprep.subr.mxu0 0.0
        %3858 = vmatpush1.msra.mxu0 0.0
        %3859 = vmatprep.subr.mxu0 0.0
        %3860 = vmatpush1.msra.mxu0 0.0
        %3861 = vmatprep.subr.mxu0 0.0
        %3862 = vmatpush1.msra.mxu0 0.0
        %3863 = vmatprep.subr.mxu0 0.0
        %3864 = vmatpush1.msra.mxu0 0.0
        %3865 = vmatprep.subr.mxu0 0.0
        %3866 = vmatpush1.msra.mxu0 %v3832
        %3867 = vmatprep.subr.mxu0 0.0
        %3868 = vmatpush1.msra.mxu0 %v3831
        %3869 = vmatprep.subr.mxu0 0.0
        %3870 = vmatpush2.msra.mxu0 0.0
        %3871 = vmatprep.subr.mxu0 0.0
        %3872 = vmatpush2.msra.mxu0 0.0
        %3873 = vmatprep.subr.mxu0 0.0
        %3874 = vmatpush2.msra.mxu0 0.0
        %3875 = vmatprep.subr.mxu0 0.0
        %3876 = vmatpush2.msra.mxu0 0.0
        %3877 = vmatprep.subr.mxu0 0.0
        %3878 = vmatpush2.msra.mxu0 0.0
        %3879 = vmatprep.subr.mxu0 0.0
        %3880 = vmatpush2.msra.mxu0 0.0
        %3881 = vmatprep.subr.mxu0 0.0
        %3882 = vmatpush2.msra.mxu0 0.0
        %3883 = vmatprep.subr.mxu0 0.0
        %3884 = vmatpush2.msra.mxu0 0.0
        %3885 = vmatprep.subr.mxu0 0.0
        %3886 = vmatpush2.msra.mxu0 0.0
        %3887 = vmatprep.subr.mxu0 0.0
        %3888 = vmatpush2.msra.mxu0 0.0
        %3889 = vmatprep.subr.mxu0 0.0
        %3890 = vmatpush2.msra.mxu0 0.0
        %3891 = vmatprep.subr.mxu0 0.0
        %3892 = vmatpush2.msra.mxu0 0.0
        %3893 = vmatprep.subr.mxu0 0.0
        %3894 = vmatpush2.msra.mxu0 0.0
        %3895 = vmatprep.subr.mxu0 0.0
        %3896 = vmatpush2.msra.mxu0 0.0
        %3897 = vmatprep.subr.mxu0 0.0
        %3898 = vmatpush2.msra.mxu0 0.0
        %3899 = vmatprep.subr.mxu0 0.0
        %3900 = vmatpush2.msra.mxu0 0.0
        %3901 = vmatprep.mubr.f32.mxu0 0.0
        %3902 = vmatmul.mubr.f32.gmra.mxu0 %v3835
        %v3903 = vpop.f32.mrf.mxu0
        %v3904 = vadd.f32 %v3833, %v3903
        %v3905 = vpop.f32.mrf.mxu0
        %3906 = vdwg.mxu0
        %vm3907 = vcmask 73728
        %3908 = vst.msk [vmem:[%s459] sm:$0x1] %vm3907, %v3904
        %s3909 = sand.u32 %s335, 1
        %s3910 = scalar_lea.sflag [#allocation3], %s3909
        %s3911 = sand.u32 %s335, 1
        %s3912 = scalar_lea.vmem [#allocation2], %s3911
        // Predicated region
        $region77: #{_vit_forward.1} parent=75 // pred_check
          %p3913 = pneg %p345
        $region78: #{_vit_forward.1} parent=75 // pred_check_branch
          %3915 = sbr.rel (%p3913) target = $region80
        $region79: #{_vit_forward.1} parent=75 // pred_region
          %s3917 = ssub.s32 16, 16
          %3918 = vsyncadd %s3910, %s3917
          %s3919 = smul.addr %s28, 16
          %s3920 = scalar_lea.hbm %s14, %s3919
          %s3922 = sshll.u32 %s3912, 4
          %s3923 = int_to_ptr.vmem [resolvable:$true] %s3922
          %3925 = dma.vmem_to_hbm [thread:$0]  %s3923, 16, %s3920, %s3910
        $region80: #{_vit_forward.1} parent=75 // pred_fallthru
          _
      $region76: #{_vit_forward.1} parent=5 // pred_fallthru
        _
      %p3926 = scmp.le.s32.totalorder 2, %s23
      // Predicated region
      $region81: #{_vit_forward.1} parent=5 // pred_check
        %p3927 = pneg %p3926
      $region82: #{_vit_forward.1} parent=5 // pred_check_branch
        %3929 = sbr.rel (%p3927) target = $region84
      $region83: #{_vit_forward.1} parent=5 // pred_region
        %s3930 = ssub.s32 %s23, 2
        // Predicated region
        $region85: #{_vit_forward.1} parent=83 // pred_check
          %p3931 = pneg %p351
        $region86: #{_vit_forward.1} parent=83 // pred_check_branch
          %3933 = sbr.rel (%p3931) target = $region88
        $region87: #{_vit_forward.1} parent=83 // pred_region
          %s3934 = sand.u32 %s336, 1
          %s3935 = scalar_lea.sflag [#allocation3], %s3934
          %s3936 = sand.u32 %s336, 1
          %s3937 = scalar_lea.vmem [#allocation2], %s3936
          %3938 = dma.done %s3935, 16
        $region88: #{_vit_forward.1} parent=83 // pred_fallthru
          _
      $region84: #{_vit_forward.1} parent=5 // pred_fallthru
        _
    $region6: #{_vit_forward.1} parent=1 // loop_footer
      %s27 = sadd.s32 1, %s23
    $region7: #{_vit_forward.1} parent=1 // loop_footer_branch
      %22 = sbr.rel target = $region3
    $region8: #{_vit_forward.1} parent=1 // loop_exit
      _
    %3939 = vsyncpa [#allocation3], 1
    %s3940 = scalar_lea.sflag [#allocation3], 1
    %3941 = vsyncpa %s3940, 1

</llo_original>
